<compile_context>
chip_gen: v5e
topology: v5e:2x2
jax: 0.10.0
libtpu: 0.0.40
codegen_flags: <defaults>
</compile_context>

<pallas_src>
import functools

import jax
import jax.numpy as jnp
from jax.experimental import pallas as pl
from jax.experimental.pallas import tpu as pltpu


def _leaky_relu(x):
    # max(x, 0.2*x): identical to where(x>=0, x, 0.2*x) for finite x, 2 VPU ops.
    return jnp.maximum(x, 0.2 * x)


def _elu(x):
    return jnp.where(x > 0, x, jnp.exp(x) - 1.0)


# ----------------------------------------------------------------------------
# Shared per-tile GAT attention (values in, value out).
# ----------------------------------------------------------------------------
def _gat_attention(adj_i8, h_src, h_dst, w, a_l, a_r, bias, res_w, *,
                   heads, dout, residual, res_ident, apply_elu, mean_heads,
                   compute_dtype):
    n = h_src.shape[0]
    cdt = compute_dtype
    f32 = jnp.float32

    # Projections on the MXU; operands optionally bf16, accumulation f32.
    feat_src = jnp.dot(h_src.astype(cdt), w.astype(cdt),
                       preferred_element_type=f32)                  # (N, H*D)
    feat_dst = jnp.dot(h_dst.astype(cdt), w.astype(cdt),
                       preferred_element_type=f32)                  # (TM, H*D)
    # All heads' attention terms via block-diagonal matrices; one transpose
    # total (not one per head).
    el_t = jnp.dot(feat_src, a_l, preferred_element_type=f32).T     # (H, N) src
    er = jnp.dot(feat_dst, a_r, preferred_element_type=f32)         # (TM, H) dst

    # Additive edge mask, rebuilt per row tile from the int8 adjacency
    # (storage / DMA stay int8; this f32 slab is transient within the step).
    adj_f = adj_i8.astype(f32)
    mask_bias = jnp.where(adj_f > 0.5, 0.0, -1e30).astype(cdt)      # (TM, N)

    resval = None
    if residual:
        resval = h_dst if res_ident else jnp.dot(
            h_dst.astype(cdt), res_w.astype(cdt), preferred_element_type=f32)

    ones = jnp.ones((n, 1), f32)
    outs = []
    for hd in range(heads):
        lo = hd * dout
        # [denominator | aggregate] in ONE MXU matmul: p @ [1 | feat_h].
        feat_aug = jnp.concatenate([ones, feat_src[:, lo:lo + dout]], axis=1)
        x = (er[:, hd:hd + 1] + el_t[hd:hd + 1, :]).astype(cdt)     # (TM, N)
        e = _leaky_relu(x) + mask_bias
        m = jnp.max(e, axis=1, keepdims=True)
        p = jnp.exp(e - m)                                          # non-edges -> 0
        agg = jnp.dot(p, feat_aug.astype(cdt),
                      preferred_element_type=f32)                   # (TM, D+1)
        out_h = agg[:, 1:] * (1.0 / agg[:, :1])
        if residual:
            out_h = out_h + resval[:, lo:lo + dout]
        out_h = out_h + bias[:, lo:lo + dout]
        if apply_elu:
            out_h = _elu(out_h)
        outs.append(out_h)

    if mean_heads:
        acc = outs[0]
        for o in outs[1:]:
            acc = acc + o
        return acc * jnp.float32(1.0 / heads)
    # Flatten heads in registers; caller does a single lane-dense store.
    return jnp.concatenate(outs, axis=1)


# ----------------------------------------------------------------------------
# Layer kernels (grid over dst-row tiles)
# ----------------------------------------------------------------------------
def _gat0_kernel(adj_ref, hsrc_ref, hdst_ref, w_ref, al_ref, ar_ref, b_ref,
                 *rest, heads, dout, residual, res_ident, compute_dtype):
    if residual and not res_ident:
        resw_ref, out_ref = rest
        res_w = resw_ref[...]
    else:
        (out_ref,) = rest
        res_w = None
    out_ref[...] = _gat_attention(
        adj_ref[...], hsrc_ref[...], hdst_ref[...], w_ref[...], al_ref[...],
        ar_ref[...], b_ref[...], res_w, heads=heads, dout=dout,
        residual=residual, res_ident=res_ident, apply_elu=True,
        mean_heads=False, compute_dtype=compute_dtype)


def _gat1_head_kernel(adj_ref, hsrc_ref, hdst_ref, w_ref, al_ref, ar_ref,
                      b_ref, *rest, heads, dout, residual, res_ident,
                      compute_dtype):
    i = 0
    res_w = None
    if residual and not res_ident:
        res_w = rest[i][...]
        i += 1
    if residual:
        xdst_ref, topw_ref, topb_ref = rest[i], rest[i + 1], rest[i + 2]
        i += 3
    mlpw_ref, mlpb_ref, out_ref = rest[i], rest[i + 1], rest[i + 2]

    h = _gat_attention(
        adj_ref[...], hsrc_ref[...], hdst_ref[...], w_ref[...], al_ref[...],
        ar_ref[...], b_ref[...], res_w, heads=heads, dout=dout,
        residual=residual, res_ident=res_ident, apply_elu=False,
        mean_heads=True, compute_dtype=compute_dtype)               # (TM, Dout)
    if residual:
        h = h + jnp.dot(xdst_ref[...], topw_ref[...],
                        preferred_element_type=jnp.float32) + topb_ref[...]
    out_ref[...] = jnp.dot(h, mlpw_ref[...],
                           preferred_element_type=jnp.float32) + mlpb_ref[...]


# ----------------------------------------------------------------------------
# Wrapper glue: specs, VMEM budget, cost estimate, parameter packing
# ----------------------------------------------------------------------------
def _full_spec(shape):
    return pl.BlockSpec(tuple(shape), lambda i: (0, 0))


def _row_spec(tm, cols):
    return pl.BlockSpec((tm, cols), lambda i: (i, 0))


def _attn_mat(attn):
    """(H, D) per-head attention vectors -> block-diagonal (H*D, H) so that
    feat @ mat yields every head's score in one MXU matmul."""
    H, D = attn.shape
    m = jnp.zeros((H * D, H), jnp.float32)
    for h in range(H):
        m = m.at[h * D:(h + 1) * D, h].set(attn[h])
    return m


def _vmem_limit_bytes(n, tm, din, hd, out_cols):
    f = 4
    b = 2 * tm * n                       # int8 adjacency tile (double buffered)
    b += 2 * n * din * f                 # h_src (full)
    b += 4 * tm * din * f                # h_dst (+ x_dst) tiles
    b += 2 * tm * out_cols * f           # output tile
    b += n * (hd + 2) * f                # feat_src (+ ones column)
    b += 4 * tm * n * f                  # mask / e / p working slabs
    b += 8 * tm * (hd + 8) * f           # per-head temporaries, residual, proj
    b += 4 << 20                         # params + slack
    return int(min(max(b * 3 // 2, 32 << 20), 64 << 20))


def _gat_cost(n, tm, din, heads, dout, out_cols):
    steps = max(n // tm, 1)
    hd = heads * dout
    per = 2 * n * din * hd + 2 * tm * din * hd            # src / dst projections
    per += 2 * n * hd * heads + 2 * tm * hd * heads       # el / er
    per += heads * (2 * tm * n * (dout + 1) + 7 * tm * n)  # agg matmul + VPU
    trans = heads * tm * n + 2 * tm * hd
    bytes_per = tm * n + 4 * (n * din + 2 * tm * din + tm * out_cols
                              + 2 * din * hd + 2 * hd * heads)
    return pl.CostEstimate(flops=int(steps * per),
                           transcendentals=int(steps * trans),
                           bytes_accessed=int(steps * bytes_per))


def line_gat_forward(nfeats, adj, params, *, residual=True, block_rows=128,
                     use_bf16=False):
    """Eval-mode forward.  adj[i, j] != 0 iff edge j -> i.

    NOTE: every node must have in-degree >= 1 (e.g. self-loops).  A zero
    in-degree row silently averages over all nodes instead of producing the
    reference's NaN.
    """
    n, din0 = nfeats.shape
    nfeats = nfeats.astype(jnp.float32)
    adj_i8 = (adj != 0).astype(jnp.int8)
    cdt = jnp.bfloat16 if use_bf16 else jnp.float32

    g0, g1 = params["gat0"], params["gat1"]
    H0, D0 = g0["num_heads"], g0["out_feats"]
    H1, D1 = g1["num_heads"], g1["out_feats"]
    HD0, HD1 = H0 * D0, H1 * D1
    # DGL uses Identity for the in-layer residual when din == heads*out_feats.
    res0_ident = residual and (din0 == HD0)
    res1_ident = residual and (HD0 == HD1)
    n_classes = params["mlp_w"].shape[1]

    a_l0, a_r0 = _attn_mat(g0["attn_l"]), _attn_mat(g0["attn_r"])
    a_l1, a_r1 = _attn_mat(g1["attn_l"]), _attn_mat(g1["attn_r"])

    # dst-row tile: multiple of 32 (int8 sublane packing) that divides N,
    # otherwise fall back to the whole graph in one step.
    tm = block_rows if (block_rows < n and n % block_rows == 0
                        and block_rows % 32 == 0) else n
    grid = (n // tm,)

    def cparams(vmem_bytes):
        return pltpu.CompilerParams(dimension_semantics=("parallel",),
                                    vmem_limit_bytes=vmem_bytes)

    # ---- layer 0: GATConv(din0 -> D0, H0 heads), ELU, flatten heads --------
    args0 = [adj_i8, nfeats, nfeats, g0["w"], a_l0, a_r0, g0["bias"]]
    specs0 = [_row_spec(tm, n),
              _full_spec((n, din0)),
              _row_spec(tm, din0),
              _full_spec(g0["w"].shape), _full_spec(a_l0.shape),
              _full_spec(a_r0.shape), _full_spec(g0["bias"].shape)]
    if residual and not res0_ident:
        args0.append(g0["res_w"])
        specs0.append(_full_spec(g0["res_w"].shape))

    kernel0 = functools.partial(_gat0_kernel, heads=H0, dout=D0,
                                residual=residual, res_ident=res0_ident,
                                compute_dtype=cdt)
    h = pl.pallas_call(
        kernel0,
        grid=grid,
        out_shape=jax.ShapeDtypeStruct((n, HD0), jnp.float32),
        in_specs=specs0,
        out_specs=_row_spec(tm, HD0),
        compiler_params=cparams(_vmem_limit_bytes(n, tm, din0, HD0, HD0)),
        cost_estimate=_gat_cost(n, tm, din0, H0, D0, HD0),
    )(*args0)

    # dropout(0.3) between layers -> identity in eval mode.

    # ---- layer 1: GATConv(HD0 -> D1, H1 heads), mean heads, + residual + MLP
    args1 = [adj_i8, h, h, g1["w"], a_l1, a_r1, g1["bias"]]
    specs1 = [_row_spec(tm, n),
              _full_spec((n, HD0)),
              _row_spec(tm, HD0),
              _full_spec(g1["w"].shape), _full_spec(a_l1.shape),
              _full_spec(a_r1.shape), _full_spec(g1["bias"].shape)]
    if residual and not res1_ident:
        args1.append(g1["res_w"])
        specs1.append(_full_spec(g1["res_w"].shape))
    if residual:
        args1 += [nfeats, params["res_w"], params["res_b"]]
        specs1 += [_row_spec(tm, din0), _full_spec(params["res_w"].shape),
                   _full_spec(params["res_b"].shape)]
    args1 += [params["mlp_w"], params["mlp_b"]]
    specs1 += [_full_spec(params["mlp_w"].shape),
               _full_spec(params["mlp_b"].shape)]

    kernel1 = functools.partial(_gat1_head_kernel, heads=H1, dout=D1,
                                residual=residual, res_ident=res1_ident,
                                compute_dtype=cdt)
    logits = pl.pallas_call(
        kernel1,
        grid=grid,
        out_shape=jax.ShapeDtypeStruct((n, n_classes), jnp.float32),
        in_specs=specs1,
        out_specs=_row_spec(tm, n_classes),
        compiler_params=cparams(_vmem_limit_bytes(n, tm, HD0, HD1,
                                                  max(HD1, n_classes))),
        cost_estimate=_gat_cost(n, tm, HD0, H1, D1, n_classes),
    )(*args1)
    return None, logits


# ----------------------------------------------------------------------------
# Pure-JAX reference (mirrors DGL GATConv math, used for verification)
# ----------------------------------------------------------------------------
def ref_gat_layer(h, adj, p, *, apply_elu, mean_heads, use_residual):
    n = h.shape[0]
    H, Dout = p["num_heads"], p["out_feats"]
    feat = (h @ p["w"]).reshape(n, H, Dout)
    el = jnp.sum(feat * p["attn_l"][None], -1)                   # (N, H)
    er = jnp.sum(feat * p["attn_r"][None], -1)
    e = jnp.where(jnp.stack([er[:, None, :] + el[None, :, :]], 0)[0] >= 0,
                  er[:, None, :] + el[None, :, :],
                  0.2 * (er[:, None, :] + el[None, :, :]))       # leaky_relu
    mask = (adj > 0)[:, :, None]
    e = jnp.where(mask, e, -1e30)
    m = e.max(1, keepdims=True)
    pe = jnp.where(mask, jnp.exp(e - m), 0.0)
    alpha = pe / pe.sum(1, keepdims=True)
    out = jnp.einsum("ijh,jhd->ihd", alpha, feat)
    if use_residual:
        out = out + (h @ p["res_w"]).reshape(n, H, Dout)
    out = out + p["bias"].reshape(1, H, Dout)
    if apply_elu:
        out = _elu(out)
    return out.mean(1) if mean_heads else out.reshape(n, H * Dout)


def ref_forward(nfeats, adj, params, *, residual=True):
    h = ref_gat_layer(nfeats, adj, params["gat0"],
                      apply_elu=True, mean_heads=False, use_residual=residual)
    h = ref_gat_layer(h, adj, params["gat1"],
                      apply_elu=False, mean_heads=True, use_residual=residual)
    if residual:
        h = h + (nfeats @ params["res_w"] + params["res_b"])
    return h @ params["mlp_w"] + params["mlp_b"]


# ----------------------------------------------------------------------------
# Deterministic parameter init
# ----------------------------------------------------------------------------
def _init_gat(key, din, dout, heads):
    k = jax.random.split(key, 5)
    hd = heads * dout
    res_w = (jnp.eye(din, dtype=jnp.float32) if din == hd
             else 0.1 * jax.random.normal(k[3], (din, hd), jnp.float32))
    return {
        "w": 0.1 * jax.random.normal(k[0], (din, hd), jnp.float32),
        "attn_l": 0.1 * jax.random.normal(k[1], (heads, dout), jnp.float32),
        "attn_r": 0.1 * jax.random.normal(k[2], (heads, dout), jnp.float32),
        "res_w": res_w,
        "bias": 0.1 * jax.random.normal(k[4], (1, hd), jnp.float32),
        "num_heads": heads,
        "out_feats": dout,
    }


def init_params(key, ndim_in, hid_size, ndim_out, heads):
    k = jax.random.split(key, 6)
    return {
        "gat0": _init_gat(k[0], ndim_in, hid_size, heads[0]),
        "gat1": _init_gat(k[1], hid_size * heads[0], ndim_out, heads[1]),
        "res_w": 0.1 * jax.random.normal(k[2], (ndim_in, ndim_out), jnp.float32),
        "res_b": 0.1 * jax.random.normal(k[3], (1, ndim_out), jnp.float32),
        "mlp_w": 0.1 * jax.random.normal(k[4], (ndim_out, 2), jnp.float32),
        "mlp_b": 0.1 * jax.random.normal(k[5], (1, 2), jnp.float32),
    }


if __name__ == "__main__":
    # Small but grid-exercising shapes: N=256 with 128-row dst tiles -> grid 2.
    N, ndim_in, hid_size, ndim_out, heads = 256, 16, 12, 8, [2, 2]
    residual = True

    key = jax.random.PRNGKey(0)
    k_feat, k_adj, k_par = jax.random.split(key, 3)

    nfeats = jax.random.normal(k_feat, (N, ndim_in), jnp.float32)
    # Deterministic random graph with self-loops (guarantees in-degree >= 1).
    adj = (jax.random.uniform(k_adj, (N, N)) < 0.05).astype(jnp.float32)
    adj = jnp.maximum(adj, jnp.eye(N, dtype=jnp.float32))

    params = init_params(k_par, ndim_in, hid_size, ndim_out, heads)

    _, logits = line_gat_forward(nfeats, adj, params, residual=residual,
                                 block_rows=128)
    logits = jax.block_until_ready(logits)

    ref = ref_forward(nfeats, adj, params, residual=residual)
    assert logits.shape == (N, 2)
    err = jnp.max(jnp.abs(logits - ref))
    assert jnp.allclose(logits, ref, rtol=5e-4, atol=5e-4), (
        f"max abs err {err}")

    print("KERNEL_OK")
</pallas_src>

<mosaic_0001>
module attributes {stable_mosaic.version = 11 : i64} {
  func.func @_gat0_kernel(%arg0: i32, %arg1: memref<128x256xi8, #tpu.memory_space<vmem>>, %arg2: memref<256x16xf32, #tpu.memory_space<vmem>>, %arg3: memref<128x16xf32, #tpu.memory_space<vmem>>, %arg4: memref<16x24xf32, #tpu.memory_space<vmem>>, %arg5: memref<24x2xf32, #tpu.memory_space<vmem>>, %arg6: memref<24x2xf32, #tpu.memory_space<vmem>>, %arg7: memref<1x24xf32, #tpu.memory_space<vmem>>, %arg8: memref<16x24xf32, #tpu.memory_space<vmem>>, %arg9: memref<128x24xf32, #tpu.memory_space<vmem>>) attributes {dimension_semantics = [#tpu.dimension_semantics<parallel>], iteration_bounds = array<i64: 2>, scalar_prefetch = 0 : i64, scratch_operands = 0 : i64, tpu.core_type = #tpu.core_type<tc>, window_params = [{transform_indices = @transform_0, window_bounds = array<i64: 128, 256>}, {pipeline_mode = #tpu.pipeline_mode<synchronous>, transform_indices = @transform_1, window_bounds = array<i64: 256, 16>}, {transform_indices = @transform_2, window_bounds = array<i64: 128, 16>}, {pipeline_mode = #tpu.pipeline_mode<synchronous>, transform_indices = @transform_3, window_bounds = array<i64: 16, 24>}, {pipeline_mode = #tpu.pipeline_mode<synchronous>, transform_indices = @transform_4, window_bounds = array<i64: 24, 2>}, {pipeline_mode = #tpu.pipeline_mode<synchronous>, transform_indices = @transform_5, window_bounds = array<i64: 24, 2>}, {pipeline_mode = #tpu.pipeline_mode<synchronous>, transform_indices = @transform_6, window_bounds = array<i64: 1, 24>}, {pipeline_mode = #tpu.pipeline_mode<synchronous>, transform_indices = @transform_7, window_bounds = array<i64: 16, 24>}, {transform_indices = @transform_8, window_bounds = array<i64: 128, 24>}]} {
    %c0 = arith.constant 0 : index
    %c0_0 = arith.constant 0 : index
    %0 = vector.load %arg8[%c0, %c0_0] : memref<16x24xf32, #tpu.memory_space<vmem>>, vector<16x24xf32>
    %c0_1 = arith.constant 0 : index
    %c0_2 = arith.constant 0 : index
    %1 = vector.load %arg1[%c0_1, %c0_2] : memref<128x256xi8, #tpu.memory_space<vmem>>, vector<128x256xi8>
    %c0_3 = arith.constant 0 : index
    %c0_4 = arith.constant 0 : index
    %2 = vector.load %arg2[%c0_3, %c0_4] : memref<256x16xf32, #tpu.memory_space<vmem>>, vector<256x16xf32>
    %c0_5 = arith.constant 0 : index
    %c0_6 = arith.constant 0 : index
    %3 = vector.load %arg3[%c0_5, %c0_6] : memref<128x16xf32, #tpu.memory_space<vmem>>, vector<128x16xf32>
    %c0_7 = arith.constant 0 : index
    %c0_8 = arith.constant 0 : index
    %4 = vector.load %arg4[%c0_7, %c0_8] : memref<16x24xf32, #tpu.memory_space<vmem>>, vector<16x24xf32>
    %c0_9 = arith.constant 0 : index
    %c0_10 = arith.constant 0 : index
    %5 = vector.load %arg5[%c0_9, %c0_10] : memref<24x2xf32, #tpu.memory_space<vmem>>, vector<24x2xf32>
    %c0_11 = arith.constant 0 : index
    %c0_12 = arith.constant 0 : index
    %6 = vector.load %arg6[%c0_11, %c0_12] : memref<24x2xf32, #tpu.memory_space<vmem>>, vector<24x2xf32>
    %c0_13 = arith.constant 0 : index
    %c0_14 = arith.constant 0 : index
    %7 = vector.load %arg7[%c0_13, %c0_14] : memref<1x24xf32, #tpu.memory_space<vmem>>, vector<1x24xf32>
    %cst = arith.constant dense<0.000000e+00> : vector<256x24xf32>
    %8 = tpu.matmul %2, %4, %cst {dimension_numbers = #tpu.dot_dimension_numbers<[1], [0], [0], [1], [0, 0, 1, 1], [], []>} : vector<256x16xf32>, vector<16x24xf32>, vector<256x24xf32> -> vector<256x24xf32>
    %cst_15 = arith.constant dense<0.000000e+00> : vector<128x24xf32>
    %9 = tpu.matmul %3, %4, %cst_15 {dimension_numbers = #tpu.dot_dimension_numbers<[1], [0], [0], [1], [0, 0, 1, 1], [], []>} : vector<128x16xf32>, vector<16x24xf32>, vector<128x24xf32> -> vector<128x24xf32>
    %cst_16 = arith.constant dense<0.000000e+00> : vector<256x2xf32>
    %10 = tpu.matmul %8, %5, %cst_16 {dimension_numbers = #tpu.dot_dimension_numbers<[1], [0], [0], [1], [0, 0, 1, 1], [], []>} : vector<256x24xf32>, vector<24x2xf32>, vector<256x2xf32> -> vector<256x2xf32>
    %11 = tpu.transpose %10, [1, 0] : vector<256x2xf32> -> vector<2x256xf32>
    %cst_17 = arith.constant dense<0.000000e+00> : vector<128x2xf32>
    %12 = tpu.matmul %9, %6, %cst_17 {dimension_numbers = #tpu.dot_dimension_numbers<[1], [0], [0], [1], [0, 0, 1, 1], [], []>} : vector<128x24xf32>, vector<24x2xf32>, vector<128x2xf32> -> vector<128x2xf32>
    %13 = arith.sitofp %1 : vector<128x256xi8> to vector<128x256xf32>
    %cst_18 = arith.constant 5.000000e-01 : f32
    %14 = vector.broadcast %cst_18 : f32 to vector<128x256xf32>
    %15 = arith.cmpf ogt, %13, %14 : vector<128x256xf32>
    %cst_19 = arith.constant 0.000000e+00 : f32
    %cst_20 = arith.constant -1.000000e+30 : f32
    %16 = vector.broadcast %cst_19 : f32 to vector<128x256xf32>
    %17 = vector.broadcast %cst_20 : f32 to vector<128x256xf32>
    %18 = arith.select %15, %16, %17 : vector<128x256xi1>, vector<128x256xf32>
    %cst_21 = arith.constant dense<0.000000e+00> : vector<128x24xf32>
    %19 = tpu.matmul %3, %0, %cst_21 {dimension_numbers = #tpu.dot_dimension_numbers<[1], [0], [0], [1], [0, 0, 1, 1], [], []>} : vector<128x16xf32>, vector<16x24xf32>, vector<128x24xf32> -> vector<128x24xf32>
    %cst_22 = arith.constant 1.000000e+00 : f32
    %20 = vector.broadcast %cst_22 : f32 to vector<256x1xf32>
    %21 = vector.extract_strided_slice %8 {offsets = [0, 0], sizes = [256, 12], strides = [1, 1]} : vector<256x24xf32> to vector<256x12xf32>
    %22 = tpu.concatenate %20, %21 in 1 : vector<256x1xf32>, vector<256x12xf32> -> vector<256x13xf32>
    %23 = vector.extract_strided_slice %12 {offsets = [0, 0], sizes = [128, 1], strides = [1, 1]} : vector<128x2xf32> to vector<128x1xf32>
    %24 = vector.extract_strided_slice %11 {offsets = [0, 0], sizes = [1, 256], strides = [1, 1]} : vector<2x256xf32> to vector<1x256xf32>
    %25 = vector.broadcast %23 : vector<128x1xf32> to vector<128x256xf32>
    %26 = vector.broadcast %24 : vector<1x256xf32> to vector<128x256xf32>
    %27 = arith.addf %25, %26 : vector<128x256xf32>
    %cst_23 = arith.constant 2.000000e-01 : f32
    %28 = vector.broadcast %cst_23 : f32 to vector<128x256xf32>
    %29 = arith.mulf %28, %27 : vector<128x256xf32>
    %30 = arith.maximumf %27, %29 : vector<128x256xf32>
    %31 = arith.addf %30, %18 : vector<128x256xf32>
    %cst_24 = arith.constant dense<0xFF800000> : vector<128xf32>
    %32 = vector.multi_reduction <maximumf>, %31, %cst_24 [1] : vector<128x256xf32> to vector<128xf32>
    %33 = vector.shape_cast %32 : vector<128xf32> to vector<128x1xf32>
    %34 = vector.broadcast %33 : vector<128x1xf32> to vector<128x256xf32>
    %35 = arith.subf %31, %34 : vector<128x256xf32>
    %36 = math.exp %35 : vector<128x256xf32>
    %cst_25 = arith.constant dense<0.000000e+00> : vector<128x13xf32>
    %37 = tpu.matmul %36, %22, %cst_25 {dimension_numbers = #tpu.dot_dimension_numbers<[1], [0], [0], [1], [0, 0, 1, 1], [], []>} : vector<128x256xf32>, vector<256x13xf32>, vector<128x13xf32> -> vector<128x13xf32>
    %38 = vector.extract_strided_slice %37 {offsets = [0, 1], sizes = [128, 12], strides = [1, 1]} : vector<128x13xf32> to vector<128x12xf32>
    %39 = vector.extract_strided_slice %37 {offsets = [0, 0], sizes = [128, 1], strides = [1, 1]} : vector<128x13xf32> to vector<128x1xf32>
    %cst_26 = arith.constant 1.000000e+00 : f32
    %40 = vector.broadcast %cst_26 : f32 to vector<128x1xf32>
    %41 = arith.divf %40, %39 : vector<128x1xf32>
    %42 = vector.broadcast %41 : vector<128x1xf32> to vector<128x12xf32>
    %43 = arith.mulf %38, %42 : vector<128x12xf32>
    %44 = vector.extract_strided_slice %19 {offsets = [0, 0], sizes = [128, 12], strides = [1, 1]} : vector<128x24xf32> to vector<128x12xf32>
    %45 = arith.addf %43, %44 : vector<128x12xf32>
    %46 = vector.extract_strided_slice %7 {offsets = [0, 0], sizes = [1, 12], strides = [1, 1]} : vector<1x24xf32> to vector<1x12xf32>
    %47 = vector.broadcast %46 : vector<1x12xf32> to vector<128x12xf32>
    %48 = arith.addf %45, %47 : vector<128x12xf32>
    %cst_27 = arith.constant 0.000000e+00 : f32
    %49 = vector.broadcast %cst_27 : f32 to vector<128x12xf32>
    %50 = arith.cmpf ogt, %48, %49 : vector<128x12xf32>
    %51 = math.exp %48 : vector<128x12xf32>
    %cst_28 = arith.constant 1.000000e+00 : f32
    %52 = vector.broadcast %cst_28 : f32 to vector<128x12xf32>
    %53 = arith.subf %51, %52 : vector<128x12xf32>
    %54 = arith.select %50, %48, %53 : vector<128x12xi1>, vector<128x12xf32>
    %55 = vector.extract_strided_slice %8 {offsets = [0, 12], sizes = [256, 12], strides = [1, 1]} : vector<256x24xf32> to vector<256x12xf32>
    %56 = tpu.concatenate %20, %55 in 1 : vector<256x1xf32>, vector<256x12xf32> -> vector<256x13xf32>
    %57 = vector.extract_strided_slice %12 {offsets = [0, 1], sizes = [128, 1], strides = [1, 1]} : vector<128x2xf32> to vector<128x1xf32>
    %58 = vector.extract_strided_slice %11 {offsets = [1, 0], sizes = [1, 256], strides = [1, 1]} : vector<2x256xf32> to vector<1x256xf32>
    %59 = vector.broadcast %57 : vector<128x1xf32> to vector<128x256xf32>
    %60 = vector.broadcast %58 : vector<1x256xf32> to vector<128x256xf32>
    %61 = arith.addf %59, %60 : vector<128x256xf32>
    %cst_29 = arith.constant 2.000000e-01 : f32
    %62 = vector.broadcast %cst_29 : f32 to vector<128x256xf32>
    %63 = arith.mulf %62, %61 : vector<128x256xf32>
    %64 = arith.maximumf %61, %63 : vector<128x256xf32>
    %65 = arith.addf %64, %18 : vector<128x256xf32>
    %cst_30 = arith.constant dense<0xFF800000> : vector<128xf32>
    %66 = vector.multi_reduction <maximumf>, %65, %cst_30 [1] : vector<128x256xf32> to vector<128xf32>
    %67 = vector.shape_cast %66 : vector<128xf32> to vector<128x1xf32>
    %68 = vector.broadcast %67 : vector<128x1xf32> to vector<128x256xf32>
    %69 = arith.subf %65, %68 : vector<128x256xf32>
    %70 = math.exp %69 : vector<128x256xf32>
    %cst_31 = arith.constant dense<0.000000e+00> : vector<128x13xf32>
    %71 = tpu.matmul %70, %56, %cst_31 {dimension_numbers = #tpu.dot_dimension_numbers<[1], [0], [0], [1], [0, 0, 1, 1], [], []>} : vector<128x256xf32>, vector<256x13xf32>, vector<128x13xf32> -> vector<128x13xf32>
    %72 = vector.extract_strided_slice %71 {offsets = [0, 1], sizes = [128, 12], strides = [1, 1]} : vector<128x13xf32> to vector<128x12xf32>
    %73 = vector.extract_strided_slice %71 {offsets = [0, 0], sizes = [128, 1], strides = [1, 1]} : vector<128x13xf32> to vector<128x1xf32>
    %cst_32 = arith.constant 1.000000e+00 : f32
    %74 = vector.broadcast %cst_32 : f32 to vector<128x1xf32>
    %75 = arith.divf %74, %73 : vector<128x1xf32>
    %76 = vector.broadcast %75 : vector<128x1xf32> to vector<128x12xf32>
    %77 = arith.mulf %72, %76 : vector<128x12xf32>
    %78 = vector.extract_strided_slice %19 {offsets = [0, 12], sizes = [128, 12], strides = [1, 1]} : vector<128x24xf32> to vector<128x12xf32>
    %79 = arith.addf %77, %78 : vector<128x12xf32>
    %80 = vector.extract_strided_slice %7 {offsets = [0, 12], sizes = [1, 12], strides = [1, 1]} : vector<1x24xf32> to vector<1x12xf32>
    %81 = vector.broadcast %80 : vector<1x12xf32> to vector<128x12xf32>
    %82 = arith.addf %79, %81 : vector<128x12xf32>
    %cst_33 = arith.constant 0.000000e+00 : f32
    %83 = vector.broadcast %cst_33 : f32 to vector<128x12xf32>
    %84 = arith.cmpf ogt, %82, %83 : vector<128x12xf32>
    %85 = math.exp %82 : vector<128x12xf32>
    %cst_34 = arith.constant 1.000000e+00 : f32
    %86 = vector.broadcast %cst_34 : f32 to vector<128x12xf32>
    %87 = arith.subf %85, %86 : vector<128x12xf32>
    %88 = arith.select %84, %82, %87 : vector<128x12xi1>, vector<128x12xf32>
    %89 = tpu.concatenate %54, %88 in 1 : vector<128x12xf32>, vector<128x12xf32> -> vector<128x24xf32>
    %c0_35 = arith.constant 0 : index
    %c0_36 = arith.constant 0 : index
    %90 = vector.load %arg9[%c0_35, %c0_36] : memref<128x24xf32, #tpu.memory_space<vmem>>, vector<128x24xf32>
    tpu.vector_store %arg9[%c0_35, %c0_36], %89 {strides = array<i32>} : memref<128x24xf32, #tpu.memory_space<vmem>>, vector<128x24xf32>,
    return
  }
  func.func @transform_0(%arg0: i32) -> (i32, i32) {
    %c0_i32 = arith.constant 0 : i32
    %c0_i32_0 = arith.constant 0 : i32
    return %arg0, %c0_i32 : i32, i32
  }
  func.func @transform_1(%arg0: i32) -> (i32, i32) {
    %c0_i32 = arith.constant 0 : i32
    %c0_i32_0 = arith.constant 0 : i32
    %c0_i32_1 = arith.constant 0 : i32
    return %c0_i32, %c0_i32_0 : i32, i32
  }
  func.func @transform_2(%arg0: i32) -> (i32, i32) {
    %c0_i32 = arith.constant 0 : i32
    %c0_i32_0 = arith.constant 0 : i32
    return %arg0, %c0_i32 : i32, i32
  }
  func.func @transform_3(%arg0: i32) -> (i32, i32) {
    %c0_i32 = arith.constant 0 : i32
    %c0_i32_0 = arith.constant 0 : i32
    %c0_i32_1 = arith.constant 0 : i32
    return %c0_i32, %c0_i32_0 : i32, i32
  }
  func.func @transform_4(%arg0: i32) -> (i32, i32) {
    %c0_i32 = arith.constant 0 : i32
    %c0_i32_0 = arith.constant 0 : i32
    %c0_i32_1 = arith.constant 0 : i32
    return %c0_i32, %c0_i32_0 : i32, i32
  }
  func.func @transform_5(%arg0: i32) -> (i32, i32) {
    %c0_i32 = arith.constant 0 : i32
    %c0_i32_0 = arith.constant 0 : i32
    %c0_i32_1 = arith.constant 0 : i32
    return %c0_i32, %c0_i32_0 : i32, i32
  }
  func.func @transform_6(%arg0: i32) -> (i32, i32) {
    %c0_i32 = arith.constant 0 : i32
    %c0_i32_0 = arith.constant 0 : i32
    %c0_i32_1 = arith.constant 0 : i32
    return %c0_i32, %c0_i32_0 : i32, i32
  }
  func.func @transform_7(%arg0: i32) -> (i32, i32) {
    %c0_i32 = arith.constant 0 : i32
    %c0_i32_0 = arith.constant 0 : i32
    %c0_i32_1 = arith.constant 0 : i32
    return %c0_i32, %c0_i32_0 : i32, i32
  }
  func.func @transform_8(%arg0: i32) -> (i32, i32) {
    %c0_i32 = arith.constant 0 : i32
    %c0_i32_0 = arith.constant 0 : i32
    return %arg0, %c0_i32 : i32, i32
  }
}

</mosaic_0001>

<llo_original>
// kernel: tpu_custom_call.1
$region0: #{tpu_custom_call.1}
  #allocation0 [shape = 'u32[]', space=smem, size = 0x4, offset = 0x4, fixed_abs, tag = 'smem constant byte address 0x4 - core index']
  #allocation1 [shape = 'u32[72,128]{1,0:T(1,128)}', space=vmem, size = 0x9000, scoped, tag = 'internal scratch']
  %s0 = inlined_call_operand.vmem [shape: s8[256,256], index: 0, kind: input, shape index: {}]
  %s1 = inlined_call_operand.vmem [shape: f32[256,16], index: 1, kind: input, shape index: {}]
  %s2 = inlined_call_operand.vmem [shape: f32[256,16], index: 2, kind: input, shape index: {}]
  %s3 = inlined_call_operand.vmem [shape: f32[16,24], index: 3, kind: input, shape index: {}]
  %s4 = inlined_call_operand.vmem [shape: f32[24,2], index: 4, kind: input, shape index: {}]
  %s5 = inlined_call_operand.vmem [shape: f32[24,2], index: 5, kind: input, shape index: {}]
  %s6 = inlined_call_operand.vmem [shape: f32[1,24], index: 6, kind: input, shape index: {}]
  %s7 = inlined_call_operand.vmem [shape: f32[16,24], index: 7, kind: input, shape index: {}]
  %s8 = inlined_call_operand.vmem [shape: f32[256,24], index: 8, kind: output, shape index: {}]
  %s9 = sld [smem:[#allocation0]]
  $region65: #{tpu_custom_call.1} parent=0
    _
  %s11 = ssub.s32 1, %s9
  %s12 = scalar_select 0, %s11, %s9
  loop: start=0, step=1, limit=4
  $region2: #{tpu_custom_call.1} parent=0 // loop_pre_header
    _
  $region3: #{tpu_custom_call.1} parent=0 // loop_header
    %s14 = sphi 0, %s18
    %p15 = scmp.ge.s32.totalorder %s14, 4
    %s24 = sphi 0, %s26
    %s27 = sphi 0, %s24
    %s28 = sphi 0, %s27
    %s44 = sphi 0, %s28
    %s48 = sphi 0, %s48
    %s50 = sphi 0, %s48
    %s51 = sphi 0, %s50
    %s65 = sphi 0, %s51
    %s71 = sphi 0, %s73
    %s74 = sphi 0, %s71
    %s75 = sphi 0, %s74
    %s91 = sphi 0, %s75
    %s95 = sphi 0, %s95
    %s97 = sphi 0, %s95
    %s98 = sphi 0, %s97
    %s112 = sphi 0, %s98
    %s116 = sphi 0, %s116
    %s118 = sphi 0, %s116
    %s119 = sphi 0, %s118
    %s133 = sphi 0, %s119
    %s137 = sphi 0, %s137
    %s139 = sphi 0, %s137
    %s140 = sphi 0, %s139
    %s154 = sphi 0, %s140
    %s158 = sphi 0, %s158
    %s160 = sphi 0, %s158
    %s161 = sphi 0, %s160
    %s175 = sphi 0, %s161
    %s179 = sphi 0, %s179
    %s181 = sphi 0, %s179
    %s182 = sphi 0, %s181
    %s196 = sphi 0, %s182
    %s202 = sphi 0, %s204
    %s205 = sphi 0, %s202
    %s206 = sphi 0, %s205
    %s222 = sphi 0, %s206
  $region4: #{tpu_custom_call.1} parent=0 // loop_header_branch
    %17 = sbr.rel (%p15) target = $region8
  $region5: #{tpu_custom_call.1} parent=0 // loop_body
    %s19 = ssub.s32 %s14, 1
    %s20 = ssub.s32 %s14, 2
    %s21 = sadd.s32 %s14, 1
    %s22 = ssub.s32 %s14, %s21
    %p23 = scmp.eq.s32.totalorder %s22, 0
    %s25 = sadd.s32 %s24, 1
    %s26 = scalar_select %p23, %s24, %s25
    %p29 = pneg %p23
    %p30 = scmp.eq.s32.totalorder %s14, 1
    %p31 = por %p29, %p30
    %p32 = scmp.ne.s32.totalorder %s24, %s27
    %p33 = scmp.eq.s32.totalorder %s14, 0
    %p34 = por %p32, %p33
    %p35 = scmp.ne.s32.totalorder %s24, %s27
    %p36 = scmp.eq.s32.totalorder %s19, 1
    %p37 = por %p35, %p36
    %p38 = scmp.ne.s32.totalorder %s27, %s28
    %p39 = scmp.eq.s32.totalorder %s19, 0
    %p40 = por %p38, %p39
    %p41 = scmp.ne.s32.totalorder %s27, %s28
    %p42 = scmp.eq.s32.totalorder %s20, 1
    %p43 = por %p41, %p42
    %p45 = scmp.ne.s32.totalorder %s28, %s44
    %p46 = scmp.eq.s32.totalorder %s20, 0
    %p47 = por %p45, %p46
    %s49 = sadd.s32 %s48, 1
    %p52 = scmp.eq.s32.totalorder %s14, 1
    %p53 = scmp.ne.s32.totalorder %s48, %s50
    %p54 = scmp.eq.s32.totalorder %s14, 0
    %p55 = por %p53, %p54
    %p56 = scmp.ne.s32.totalorder %s48, %s50
    %p57 = scmp.eq.s32.totalorder %s19, 1
    %p58 = por %p56, %p57
    %p59 = scmp.ne.s32.totalorder %s50, %s51
    %p60 = scmp.eq.s32.totalorder %s19, 0
    %p61 = por %p59, %p60
    %p62 = scmp.ne.s32.totalorder %s50, %s51
    %p63 = scmp.eq.s32.totalorder %s20, 1
    %p64 = por %p62, %p63
    %p66 = scmp.ne.s32.totalorder %s51, %s65
    %p67 = scmp.eq.s32.totalorder %s20, 0
    %p68 = por %p66, %p67
    %s69 = ssub.s32 %s14, %s21
    %p70 = scmp.eq.s32.totalorder %s69, 0
    %s72 = sadd.s32 %s71, 1
    %s73 = scalar_select %p70, %s71, %s72
    %p76 = pneg %p70
    %p77 = scmp.eq.s32.totalorder %s14, 1
    %p78 = por %p76, %p77
    %p79 = scmp.ne.s32.totalorder %s71, %s74
    %p80 = scmp.eq.s32.totalorder %s14, 0
    %p81 = por %p79, %p80
    %p82 = scmp.ne.s32.totalorder %s71, %s74
    %p83 = scmp.eq.s32.totalorder %s19, 1
    %p84 = por %p82, %p83
    %p85 = scmp.ne.s32.totalorder %s74, %s75
    %p86 = scmp.eq.s32.totalorder %s19, 0
    %p87 = por %p85, %p86
    %p88 = scmp.ne.s32.totalorder %s74, %s75
    %p89 = scmp.eq.s32.totalorder %s20, 1
    %p90 = por %p88, %p89
    %p92 = scmp.ne.s32.totalorder %s75, %s91
    %p93 = scmp.eq.s32.totalorder %s20, 0
    %p94 = por %p92, %p93
    %s96 = sadd.s32 %s95, 1
    %p99 = scmp.eq.s32.totalorder %s14, 1
    %p100 = scmp.ne.s32.totalorder %s95, %s97
    %p101 = scmp.eq.s32.totalorder %s14, 0
    %p102 = por %p100, %p101
    %p103 = scmp.ne.s32.totalorder %s95, %s97
    %p104 = scmp.eq.s32.totalorder %s19, 1
    %p105 = por %p103, %p104
    %p106 = scmp.ne.s32.totalorder %s97, %s98
    %p107 = scmp.eq.s32.totalorder %s19, 0
    %p108 = por %p106, %p107
    %p109 = scmp.ne.s32.totalorder %s97, %s98
    %p110 = scmp.eq.s32.totalorder %s20, 1
    %p111 = por %p109, %p110
    %p113 = scmp.ne.s32.totalorder %s98, %s112
    %p114 = scmp.eq.s32.totalorder %s20, 0
    %p115 = por %p113, %p114
    %s117 = sadd.s32 %s116, 1
    %p120 = scmp.eq.s32.totalorder %s14, 1
    %p121 = scmp.ne.s32.totalorder %s116, %s118
    %p122 = scmp.eq.s32.totalorder %s14, 0
    %p123 = por %p121, %p122
    %p124 = scmp.ne.s32.totalorder %s116, %s118
    %p125 = scmp.eq.s32.totalorder %s19, 1
    %p126 = por %p124, %p125
    %p127 = scmp.ne.s32.totalorder %s118, %s119
    %p128 = scmp.eq.s32.totalorder %s19, 0
    %p129 = por %p127, %p128
    %p130 = scmp.ne.s32.totalorder %s118, %s119
    %p131 = scmp.eq.s32.totalorder %s20, 1
    %p132 = por %p130, %p131
    %p134 = scmp.ne.s32.totalorder %s119, %s133
    %p135 = scmp.eq.s32.totalorder %s20, 0
    %p136 = por %p134, %p135
    %s138 = sadd.s32 %s137, 1
    %p141 = scmp.eq.s32.totalorder %s14, 1
    %p142 = scmp.ne.s32.totalorder %s137, %s139
    %p143 = scmp.eq.s32.totalorder %s14, 0
    %p144 = por %p142, %p143
    %p145 = scmp.ne.s32.totalorder %s137, %s139
    %p146 = scmp.eq.s32.totalorder %s19, 1
    %p147 = por %p145, %p146
    %p148 = scmp.ne.s32.totalorder %s139, %s140
    %p149 = scmp.eq.s32.totalorder %s19, 0
    %p150 = por %p148, %p149
    %p151 = scmp.ne.s32.totalorder %s139, %s140
    %p152 = scmp.eq.s32.totalorder %s20, 1
    %p153 = por %p151, %p152
    %p155 = scmp.ne.s32.totalorder %s140, %s154
    %p156 = scmp.eq.s32.totalorder %s20, 0
    %p157 = por %p155, %p156
    %s159 = sadd.s32 %s158, 1
    %p162 = scmp.eq.s32.totalorder %s14, 1
    %p163 = scmp.ne.s32.totalorder %s158, %s160
    %p164 = scmp.eq.s32.totalorder %s14, 0
    %p165 = por %p163, %p164
    %p166 = scmp.ne.s32.totalorder %s158, %s160
    %p167 = scmp.eq.s32.totalorder %s19, 1
    %p168 = por %p166, %p167
    %p169 = scmp.ne.s32.totalorder %s160, %s161
    %p170 = scmp.eq.s32.totalorder %s19, 0
    %p171 = por %p169, %p170
    %p172 = scmp.ne.s32.totalorder %s160, %s161
    %p173 = scmp.eq.s32.totalorder %s20, 1
    %p174 = por %p172, %p173
    %p176 = scmp.ne.s32.totalorder %s161, %s175
    %p177 = scmp.eq.s32.totalorder %s20, 0
    %p178 = por %p176, %p177
    %s180 = sadd.s32 %s179, 1
    %p183 = scmp.eq.s32.totalorder %s14, 1
    %p184 = scmp.ne.s32.totalorder %s179, %s181
    %p185 = scmp.eq.s32.totalorder %s14, 0
    %p186 = por %p184, %p185
    %p187 = scmp.ne.s32.totalorder %s179, %s181
    %p188 = scmp.eq.s32.totalorder %s19, 1
    %p189 = por %p187, %p188
    %p190 = scmp.ne.s32.totalorder %s181, %s182
    %p191 = scmp.eq.s32.totalorder %s19, 0
    %p192 = por %p190, %p191
    %p193 = scmp.ne.s32.totalorder %s181, %s182
    %p194 = scmp.eq.s32.totalorder %s20, 1
    %p195 = por %p193, %p194
    %p197 = scmp.ne.s32.totalorder %s182, %s196
    %p198 = scmp.eq.s32.totalorder %s20, 0
    %p199 = por %p197, %p198
    %s200 = ssub.s32 %s14, %s21
    %p201 = scmp.eq.s32.totalorder %s200, 0
    %s203 = sadd.s32 %s202, 1
    %s204 = scalar_select %p201, %s202, %s203
    %p207 = pneg %p201
    %p208 = scmp.eq.s32.totalorder %s14, 1
    %p209 = por %p207, %p208
    %p210 = scmp.ne.s32.totalorder %s202, %s205
    %p211 = scmp.eq.s32.totalorder %s14, 0
    %p212 = por %p210, %p211
    %p213 = scmp.ne.s32.totalorder %s202, %s205
    %p214 = scmp.eq.s32.totalorder %s19, 1
    %p215 = por %p213, %p214
    %p216 = scmp.ne.s32.totalorder %s205, %s206
    %p217 = scmp.eq.s32.totalorder %s19, 0
    %p218 = por %p216, %p217
    %p219 = scmp.ne.s32.totalorder %s205, %s206
    %p220 = scmp.eq.s32.totalorder %s20, 1
    %p221 = por %p219, %p220
    %p223 = scmp.ne.s32.totalorder %s206, %s222
    %p224 = scmp.eq.s32.totalorder %s20, 0
    %p225 = por %p223, %p224
    %p226 = scmp.le.s32.totalorder 1, %s14
    %p227 = scmp.lt.s32.totalorder %s14, 3
    %p228 = pnand %p226, %p227
    %p229 = pneg %p228
    // Predicated region
    $region9: #{tpu_custom_call.1} parent=5 // pred_check
      _
    $region10: #{tpu_custom_call.1} parent=5 // pred_check_branch
      %231 = sbr.rel (%p228) target = $region12
    $region11: #{tpu_custom_call.1} parent=5 // pred_region
      %s232 = ssub.s32 %s14, 1
      // Predicated region
      $region13: #{tpu_custom_call.1} parent=11 // pred_check
        %p233 = pneg %p61
      $region14: #{tpu_custom_call.1} parent=11 // pred_check_branch
        %235 = sbr.rel (%p233) target = $region16
      $region15: #{tpu_custom_call.1} parent=11 // pred_region
        _
      $region16: #{tpu_custom_call.1} parent=11 // pred_fallthru
        _
      // Predicated region
      $region17: #{tpu_custom_call.1} parent=11 // pred_check
        %p236 = pneg %p108
      $region18: #{tpu_custom_call.1} parent=11 // pred_check_branch
        %238 = sbr.rel (%p236) target = $region20
      $region19: #{tpu_custom_call.1} parent=11 // pred_region
        _
      $region20: #{tpu_custom_call.1} parent=11 // pred_fallthru
        _
      // Predicated region
      $region21: #{tpu_custom_call.1} parent=11 // pred_check
        %p239 = pneg %p129
      $region22: #{tpu_custom_call.1} parent=11 // pred_check_branch
        %241 = sbr.rel (%p239) target = $region24
      $region23: #{tpu_custom_call.1} parent=11 // pred_region
        _
      $region24: #{tpu_custom_call.1} parent=11 // pred_fallthru
        _
      // Predicated region
      $region25: #{tpu_custom_call.1} parent=11 // pred_check
        %p242 = pneg %p150
      $region26: #{tpu_custom_call.1} parent=11 // pred_check_branch
        %244 = sbr.rel (%p242) target = $region28
      $region27: #{tpu_custom_call.1} parent=11 // pred_region
        _
      $region28: #{tpu_custom_call.1} parent=11 // pred_fallthru
        _
      // Predicated region
      $region29: #{tpu_custom_call.1} parent=11 // pred_check
        %p245 = pneg %p171
      $region30: #{tpu_custom_call.1} parent=11 // pred_check_branch
        %247 = sbr.rel (%p245) target = $region32
      $region31: #{tpu_custom_call.1} parent=11 // pred_region
        _
      $region32: #{tpu_custom_call.1} parent=11 // pred_fallthru
        _
      // Predicated region
      $region33: #{tpu_custom_call.1} parent=11 // pred_check
        %p248 = pneg %p192
      $region34: #{tpu_custom_call.1} parent=11 // pred_check_branch
        %250 = sbr.rel (%p248) target = $region36
      $region35: #{tpu_custom_call.1} parent=11 // pred_region
        _
      $region36: #{tpu_custom_call.1} parent=11 // pred_fallthru
        _
    $region12: #{tpu_custom_call.1} parent=5 // pred_fallthru
      _
    %p251 = scmp.lt.s32.totalorder %s14, 2
    // Predicated region
    $region37: #{tpu_custom_call.1} parent=5 // pred_check
      %p252 = pneg %p251
    $region38: #{tpu_custom_call.1} parent=5 // pred_check_branch
      %254 = sbr.rel (%p252) target = $region40
    $region39: #{tpu_custom_call.1} parent=5 // pred_region
      // Predicated region
      $region41: #{tpu_custom_call.1} parent=39 // pred_check
        %p255 = pneg %p34
      $region42: #{tpu_custom_call.1} parent=39 // pred_check_branch
        %257 = sbr.rel (%p255) target = $region44
      $region43: #{tpu_custom_call.1} parent=39 // pred_region
        %s258 = smul.u32 4, %s14
        %p259 = scmp.lt.s32.totalorder %s258, 7
        %s260 = scalar_select %p259, %s258, 7
        %s261 = smul.addr %s260, 2
        %s262 = smul.addr %s261, 8
        %s263 = scalar_lea.vmem %s0, %s262
        %s264 = smul.u32 4, %s14
      $region44: #{tpu_custom_call.1} parent=39 // pred_fallthru
        _
      // Predicated region
      $region45: #{tpu_custom_call.1} parent=39 // pred_check
        %p265 = pneg %p81
      $region46: #{tpu_custom_call.1} parent=39 // pred_check_branch
        %267 = sbr.rel (%p265) target = $region48
      $region47: #{tpu_custom_call.1} parent=39 // pred_region
        %s268 = smul.u32 16, %s14
        %p269 = scmp.lt.s32.totalorder %s268, 31
        %s270 = scalar_select %p269, %s268, 31
        %s271 = smul.addr %s270, 8
        %s272 = scalar_lea.vmem %s2, %s271
        %s273 = smul.u32 16, %s14
      $region48: #{tpu_custom_call.1} parent=39 // pred_fallthru
        _
    $region40: #{tpu_custom_call.1} parent=5 // pred_fallthru
      _
    %p274 = scmp.le.s32.totalorder 1, %s14
    %p275 = scmp.lt.s32.totalorder %s14, 3
    %p276 = pnand %p274, %p275
    %p277 = pneg %p276
    // Predicated region
    $region49: #{tpu_custom_call.1} parent=5 // pred_check
      _
    $region50: #{tpu_custom_call.1} parent=5 // pred_check_branch
      %279 = sbr.rel (%p276) target = $region52
    $region51: #{tpu_custom_call.1} parent=5 // pred_region
      %s280 = ssub.s32 %s14, 1
      %s281 = smul.u32 4, %s19
      %p282 = scmp.lt.s32.totalorder %s281, 7
      %s283 = scalar_select %p282, %s281, 7
      %s284 = smul.addr %s283, 2
      %s285 = smul.addr %s284, 8
      %s286 = scalar_lea.vmem %s0, %s285
      %p287 = pneg %p40
      %p288 = pneg %p37
      %p289 = pneg %p61
      %p290 = pneg %p58
      %s291 = smul.u32 16, %s19
      %p292 = scmp.lt.s32.totalorder %s291, 31
      %s293 = scalar_select %p292, %s291, 31
      %s294 = smul.addr %s293, 8
      %s295 = scalar_lea.vmem %s2, %s294
      %p296 = pneg %p87
      %p297 = pneg %p84
      %p298 = pneg %p108
      %p299 = pneg %p105
      %p300 = pneg %p129
      %p301 = pneg %p126
      %p302 = pneg %p150
      %p303 = pneg %p147
      %p304 = pneg %p171
      %p305 = pneg %p168
      %p306 = pneg %p192
      %p307 = pneg %p189
      %p308 = pneg %p218
      %p309 = pneg %p215
      %s310 = smul.u32 16, %s19
      %p311 = scmp.lt.s32.totalorder %s310, 31
      %s312 = scalar_select %p311, %s310, 31
      %s313 = smul.addr %s312, 8
      %s314 = scalar_lea.vmem %s8, %s313
      %s315 = smul.u32 4, %s19
      %p316 = scmp.lt.s32.totalorder %s315, 7
      %s317 = scalar_select %p316, %s315, 7
      %s318 = smul.addr %s317, 2
      %s319 = smul.addr %s318, 8
      %s320 = scalar_lea.vmem %s0, %s319
      %s321 = smul.u32 4, %s19
      %s322 = smul.u32 16, %s19
      %p323 = scmp.lt.s32.totalorder %s322, 31
      %s324 = scalar_select %p323, %s322, 31
      %s325 = smul.addr %s324, 8
      %s326 = scalar_lea.vmem %s2, %s325
      %s327 = smul.u32 16, %s19
      %s328 = smul.u32 16, %s19
      %p329 = scmp.lt.s32.totalorder %s328, 31
      %s330 = scalar_select %p329, %s328, 31
      %s331 = smul.addr %s330, 8
      %s332 = scalar_lea.vmem %s8, %s331
      %s333 = smul.u32 16, %s19
      %v334 = vld [vmem:[%s7] sm:$0xff]
      %v335 = vld [vmem:[%s7 + $0x8] sm:$0xff]
      %v336 = vld [vmem:[%s320] sm:$0xff]
      %v337 = vld [vmem:[%s320 + $0x8] sm:$0xff]
      %v338 = vld [vmem:[%s320 + $0x10] sm:$0xff]
      %v339 = vld [vmem:[%s320 + $0x18] sm:$0xff]
      %v340 = vld [vmem:[%s320 + $0x20] sm:$0xff]
      %v341 = vld [vmem:[%s320 + $0x28] sm:$0xff]
      %v342 = vld [vmem:[%s320 + $0x30] sm:$0xff]
      %v343 = vld [vmem:[%s320 + $0x38] sm:$0xff]
      %v344 = vld [vmem:[%s1] sm:$0xff]
      %v345 = vld [vmem:[%s1 + $0x8] sm:$0xff]
      %v346 = vld [vmem:[%s1 + $0x10] sm:$0xff]
      %v347 = vld [vmem:[%s1 + $0x18] sm:$0xff]
      %v348 = vld [vmem:[%s1 + $0x20] sm:$0xff]
      %v349 = vld [vmem:[%s1 + $0x28] sm:$0xff]
      %v350 = vld [vmem:[%s1 + $0x30] sm:$0xff]
      %v351 = vld [vmem:[%s1 + $0x38] sm:$0xff]
      %v352 = vld [vmem:[%s1 + $0x40] sm:$0xff]
      %v353 = vld [vmem:[%s1 + $0x48] sm:$0xff]
      %v354 = vld [vmem:[%s1 + $0x50] sm:$0xff]
      %v355 = vld [vmem:[%s1 + $0x58] sm:$0xff]
      %v356 = vld [vmem:[%s1 + $0x60] sm:$0xff]
      %v357 = vld [vmem:[%s1 + $0x68] sm:$0xff]
      %v358 = vld [vmem:[%s1 + $0x70] sm:$0xff]
      %v359 = vld [vmem:[%s1 + $0x78] sm:$0xff]
      %v360 = vld [vmem:[%s1 + $0x80] sm:$0xff]
      %v361 = vld [vmem:[%s1 + $0x88] sm:$0xff]
      %v362 = vld [vmem:[%s1 + $0x90] sm:$0xff]
      %v363 = vld [vmem:[%s1 + $0x98] sm:$0xff]
      %v364 = vld [vmem:[%s1 + $0xa0] sm:$0xff]
      %v365 = vld [vmem:[%s1 + $0xa8] sm:$0xff]
      %v366 = vld [vmem:[%s1 + $0xb0] sm:$0xff]
      %v367 = vld [vmem:[%s1 + $0xb8] sm:$0xff]
      %v368 = vld [vmem:[%s1 + $0xc0] sm:$0xff]
      %v369 = vld [vmem:[%s1 + $0xc8] sm:$0xff]
      %v370 = vld [vmem:[%s1 + $0xd0] sm:$0xff]
      %v371 = vld [vmem:[%s1 + $0xd8] sm:$0xff]
      %v372 = vld [vmem:[%s1 + $0xe0] sm:$0xff]
      %v373 = vld [vmem:[%s1 + $0xe8] sm:$0xff]
      %v374 = vld [vmem:[%s1 + $0xf0] sm:$0xff]
      %v375 = vld [vmem:[%s1 + $0xf8] sm:$0xff]
      %v376 = vld [vmem:[%s326] sm:$0xff]
      %v377 = vld [vmem:[%s326 + $0x8] sm:$0xff]
      %v378 = vld [vmem:[%s326 + $0x10] sm:$0xff]
      %v379 = vld [vmem:[%s326 + $0x18] sm:$0xff]
      %v380 = vld [vmem:[%s326 + $0x20] sm:$0xff]
      %v381 = vld [vmem:[%s326 + $0x28] sm:$0xff]
      %v382 = vld [vmem:[%s326 + $0x30] sm:$0xff]
      %v383 = vld [vmem:[%s326 + $0x38] sm:$0xff]
      %v384 = vld [vmem:[%s326 + $0x40] sm:$0xff]
      %v385 = vld [vmem:[%s326 + $0x48] sm:$0xff]
      %v386 = vld [vmem:[%s326 + $0x50] sm:$0xff]
      %v387 = vld [vmem:[%s326 + $0x58] sm:$0xff]
      %v388 = vld [vmem:[%s326 + $0x60] sm:$0xff]
      %v389 = vld [vmem:[%s326 + $0x68] sm:$0xff]
      %v390 = vld [vmem:[%s326 + $0x70] sm:$0xff]
      %v391 = vld [vmem:[%s326 + $0x78] sm:$0xff]
      %v392 = vld [vmem:[%s3] sm:$0xff]
      %v393 = vld [vmem:[%s3 + $0x8] sm:$0xff]
      %v394 = vld [vmem:[%s4] sm:$0xff]
      %v395 = vld [vmem:[%s4 + $0x8] sm:$0xff]
      %v396 = vld [vmem:[%s4 + $0x10] sm:$0xff]
      %v397 = vld [vmem:[%s5] sm:$0xff]
      %v398 = vld [vmem:[%s5 + $0x8] sm:$0xff]
      %v399 = vld [vmem:[%s5 + $0x10] sm:$0xff]
      %v400 = vld [vmem:[%s6] sm:$0x1]
      %vm401 = vcmask 130048
      %v403 = vsel %vm401, %v344, 0
      %v406 = vsel %vm401, %v345, 0
      %v409 = vsel %vm401, %v346, 0
      %v412 = vsel %vm401, %v347, 0
      %v415 = vsel %vm401, %v348, 0
      %v418 = vsel %vm401, %v349, 0
      %v421 = vsel %vm401, %v350, 0
      %v424 = vsel %vm401, %v351, 0
      %v427 = vsel %vm401, %v352, 0
      %v430 = vsel %vm401, %v353, 0
      %v433 = vsel %vm401, %v354, 0
      %v436 = vsel %vm401, %v355, 0
      %v439 = vsel %vm401, %v356, 0
      %v442 = vsel %vm401, %v357, 0
      %v445 = vsel %vm401, %v358, 0
      %v448 = vsel %vm401, %v359, 0
      %v451 = vsel %vm401, %v360, 0
      %v454 = vsel %vm401, %v361, 0
      %v457 = vsel %vm401, %v362, 0
      %v460 = vsel %vm401, %v363, 0
      %v463 = vsel %vm401, %v364, 0
      %v466 = vsel %vm401, %v365, 0
      %v469 = vsel %vm401, %v366, 0
      %v472 = vsel %vm401, %v367, 0
      %v475 = vsel %vm401, %v368, 0
      %v478 = vsel %vm401, %v369, 0
      %v481 = vsel %vm401, %v370, 0
      %v484 = vsel %vm401, %v371, 0
      %v487 = vsel %vm401, %v372, 0
      %v490 = vsel %vm401, %v373, 0
      %v493 = vsel %vm401, %v374, 0
      %v496 = vsel %vm401, %v375, 0
      %498 = vmatpush.msra.mxu0 0.0
      %499 = vmatpush.msra.mxu0 0.0
      %500 = vmatpush.msra.mxu0 0.0
      %501 = vmatpush.msra.mxu0 0.0
      %502 = vmatpush.msra.mxu0 0.0
      %503 = vmatpush.msra.mxu0 0.0
      %504 = vmatpush.msra.mxu0 0.0
      %505 = vmatpush.msra.mxu0 0.0
      %506 = vmatpush.msra.mxu0 0.0
      %507 = vmatpush.msra.mxu0 0.0
      %508 = vmatpush.msra.mxu0 0.0
      %509 = vmatpush.msra.mxu0 0.0
      %510 = vmatpush.msra.mxu0 0.0
      %511 = vmatpush.msra.mxu0 0.0
      %512 = vmatpush.msra.mxu0 %v393
      %513 = vmatpush.msra.mxu0 %v392
      %514 = vmatmul.f32.gmra.mxu0 %v403
      %v515 = vpop.f32.mrf.mxu0
      %v516 = vadd.f32 0.0, %v515
      %517 = vmatmul.f32.gmra.mxu0 %v406
      %v518 = vpop.f32.mrf.mxu0
      %v519 = vadd.f32 0.0, %v518
      %520 = vmatmul.f32.gmra.mxu0 %v409
      %v521 = vpop.f32.mrf.mxu0
      %v522 = vadd.f32 0.0, %v521
      %523 = vmatmul.f32.gmra.mxu0 %v412
      %v524 = vpop.f32.mrf.mxu0
      %v525 = vadd.f32 0.0, %v524
      %526 = vmatmul.f32.gmra.mxu0 %v415
      %v527 = vpop.f32.mrf.mxu0
      %v528 = vadd.f32 0.0, %v527
      %529 = vmatmul.f32.gmra.mxu0 %v418
      %v530 = vpop.f32.mrf.mxu0
      %v531 = vadd.f32 0.0, %v530
      %532 = vmatmul.f32.gmra.mxu0 %v421
      %v533 = vpop.f32.mrf.mxu0
      %v534 = vadd.f32 0.0, %v533
      %535 = vmatmul.f32.gmra.mxu0 %v424
      %v536 = vpop.f32.mrf.mxu0
      %v537 = vadd.f32 0.0, %v536
      %538 = vmatmul.f32.gmra.mxu0 %v427
      %v539 = vpop.f32.mrf.mxu0
      %v540 = vadd.f32 0.0, %v539
      %541 = vmatmul.f32.gmra.mxu0 %v430
      %v542 = vpop.f32.mrf.mxu0
      %v543 = vadd.f32 0.0, %v542
      %544 = vmatmul.f32.gmra.mxu0 %v433
      %v545 = vpop.f32.mrf.mxu0
      %v546 = vadd.f32 0.0, %v545
      %547 = vmatmul.f32.gmra.mxu0 %v436
      %v548 = vpop.f32.mrf.mxu0
      %v549 = vadd.f32 0.0, %v548
      %550 = vmatmul.f32.gmra.mxu0 %v439
      %v551 = vpop.f32.mrf.mxu0
      %v552 = vadd.f32 0.0, %v551
      %553 = vmatmul.f32.gmra.mxu0 %v442
      %v554 = vpop.f32.mrf.mxu0
      %v555 = vadd.f32 0.0, %v554
      %556 = vmatmul.f32.gmra.mxu0 %v445
      %v557 = vpop.f32.mrf.mxu0
      %v558 = vadd.f32 0.0, %v557
      %559 = vmatmul.f32.gmra.mxu0 %v448
      %v560 = vpop.f32.mrf.mxu0
      %v561 = vadd.f32 0.0, %v560
      %562 = vmatmul.f32.gmra.mxu0 %v451
      %v563 = vpop.f32.mrf.mxu0
      %v564 = vadd.f32 0.0, %v563
      %565 = vmatmul.f32.gmra.mxu0 %v454
      %v566 = vpop.f32.mrf.mxu0
      %v567 = vadd.f32 0.0, %v566
      %568 = vmatmul.f32.gmra.mxu0 %v457
      %v569 = vpop.f32.mrf.mxu0
      %v570 = vadd.f32 0.0, %v569
      %571 = vmatmul.f32.gmra.mxu0 %v460
      %v572 = vpop.f32.mrf.mxu0
      %v573 = vadd.f32 0.0, %v572
      %574 = vmatmul.f32.gmra.mxu0 %v463
      %v575 = vpop.f32.mrf.mxu0
      %v576 = vadd.f32 0.0, %v575
      %577 = vmatmul.f32.gmra.mxu0 %v466
      %v578 = vpop.f32.mrf.mxu0
      %v579 = vadd.f32 0.0, %v578
      %580 = vmatmul.f32.gmra.mxu0 %v469
      %v581 = vpop.f32.mrf.mxu0
      %v582 = vadd.f32 0.0, %v581
      %583 = vmatmul.f32.gmra.mxu0 %v472
      %v584 = vpop.f32.mrf.mxu0
      %v585 = vadd.f32 0.0, %v584
      %586 = vmatmul.f32.gmra.mxu0 %v475
      %v587 = vpop.f32.mrf.mxu0
      %v588 = vadd.f32 0.0, %v587
      %589 = vmatmul.f32.gmra.mxu0 %v478
      %v590 = vpop.f32.mrf.mxu0
      %v591 = vadd.f32 0.0, %v590
      %592 = vmatmul.f32.gmra.mxu0 %v481
      %v593 = vpop.f32.mrf.mxu0
      %v594 = vadd.f32 0.0, %v593
      %595 = vmatmul.f32.gmra.mxu0 %v484
      %v596 = vpop.f32.mrf.mxu0
      %v597 = vadd.f32 0.0, %v596
      %598 = vmatmul.f32.gmra.mxu0 %v487
      %v599 = vpop.f32.mrf.mxu0
      %v600 = vadd.f32 0.0, %v599
      %601 = vmatmul.f32.gmra.mxu0 %v490
      %v602 = vpop.f32.mrf.mxu0
      %v603 = vadd.f32 0.0, %v602
      %604 = vmatmul.f32.gmra.mxu0 %v493
      %v605 = vpop.f32.mrf.mxu0
      %v606 = vadd.f32 0.0, %v605
      %607 = vmatmul.f32.gmra.mxu0 %v496
      %v608 = vpop.f32.mrf.mxu0
      %v609 = vadd.f32 0.0, %v608
      %610 = vdwg.mxu0
      %v612 = vsel %vm401, %v376, 0
      %v615 = vsel %vm401, %v377, 0
      %v618 = vsel %vm401, %v378, 0
      %v621 = vsel %vm401, %v379, 0
      %v624 = vsel %vm401, %v380, 0
      %v627 = vsel %vm401, %v381, 0
      %v630 = vsel %vm401, %v382, 0
      %v633 = vsel %vm401, %v383, 0
      %v636 = vsel %vm401, %v384, 0
      %v639 = vsel %vm401, %v385, 0
      %v642 = vsel %vm401, %v386, 0
      %v645 = vsel %vm401, %v387, 0
      %v648 = vsel %vm401, %v388, 0
      %v651 = vsel %vm401, %v389, 0
      %v654 = vsel %vm401, %v390, 0
      %v657 = vsel %vm401, %v391, 0
      %659 = vmatpush.msra.mxu0 0.0
      %660 = vmatpush.msra.mxu0 0.0
      %661 = vmatpush.msra.mxu0 0.0
      %662 = vmatpush.msra.mxu0 0.0
      %663 = vmatpush.msra.mxu0 0.0
      %664 = vmatpush.msra.mxu0 0.0
      %665 = vmatpush.msra.mxu0 0.0
      %666 = vmatpush.msra.mxu0 0.0
      %667 = vmatpush.msra.mxu0 0.0
      %668 = vmatpush.msra.mxu0 0.0
      %669 = vmatpush.msra.mxu0 0.0
      %670 = vmatpush.msra.mxu0 0.0
      %671 = vmatpush.msra.mxu0 0.0
      %672 = vmatpush.msra.mxu0 0.0
      %673 = vmatpush.msra.mxu0 %v393
      %674 = vmatpush.msra.mxu0 %v392
      %675 = vmatmul.f32.gmra.mxu0 %v612
      %v676 = vpop.f32.mrf.mxu0
      %v677 = vadd.f32 0.0, %v676
      %678 = vmatmul.f32.gmra.mxu0 %v615
      %v679 = vpop.f32.mrf.mxu0
      %v680 = vadd.f32 0.0, %v679
      %681 = vmatmul.f32.gmra.mxu0 %v618
      %v682 = vpop.f32.mrf.mxu0
      %v683 = vadd.f32 0.0, %v682
      %684 = vmatmul.f32.gmra.mxu0 %v621
      %v685 = vpop.f32.mrf.mxu0
      %v686 = vadd.f32 0.0, %v685
      %687 = vmatmul.f32.gmra.mxu0 %v624
      %v688 = vpop.f32.mrf.mxu0
      %v689 = vadd.f32 0.0, %v688
      %690 = vmatmul.f32.gmra.mxu0 %v627
      %v691 = vpop.f32.mrf.mxu0
      %v692 = vadd.f32 0.0, %v691
      %693 = vmatmul.f32.gmra.mxu0 %v630
      %v694 = vpop.f32.mrf.mxu0
      %v695 = vadd.f32 0.0, %v694
      %696 = vmatmul.f32.gmra.mxu0 %v633
      %v697 = vpop.f32.mrf.mxu0
      %v698 = vadd.f32 0.0, %v697
      %699 = vmatmul.f32.gmra.mxu0 %v636
      %v700 = vpop.f32.mrf.mxu0
      %v701 = vadd.f32 0.0, %v700
      %702 = vmatmul.f32.gmra.mxu0 %v639
      %v703 = vpop.f32.mrf.mxu0
      %v704 = vadd.f32 0.0, %v703
      %705 = vmatmul.f32.gmra.mxu0 %v642
      %v706 = vpop.f32.mrf.mxu0
      %v707 = vadd.f32 0.0, %v706
      %708 = vmatmul.f32.gmra.mxu0 %v645
      %v709 = vpop.f32.mrf.mxu0
      %v710 = vadd.f32 0.0, %v709
      %711 = vmatmul.f32.gmra.mxu0 %v648
      %v712 = vpop.f32.mrf.mxu0
      %v713 = vadd.f32 0.0, %v712
      %714 = vmatmul.f32.gmra.mxu0 %v651
      %v715 = vpop.f32.mrf.mxu0
      %v716 = vadd.f32 0.0, %v715
      %717 = vmatmul.f32.gmra.mxu0 %v654
      %v718 = vpop.f32.mrf.mxu0
      %v719 = vadd.f32 0.0, %v718
      %720 = vmatmul.f32.gmra.mxu0 %v657
      %v721 = vpop.f32.mrf.mxu0
      %v722 = vadd.f32 0.0, %v721
      %723 = vdwg.mxu0
      %vm724 = vcmask 195584
      %v726 = vsel %vm724, %v516, 0
      %v729 = vsel %vm724, %v519, 0
      %v732 = vsel %vm724, %v522, 0
      %v735 = vsel %vm724, %v525, 0
      %v738 = vsel %vm724, %v528, 0
      %v741 = vsel %vm724, %v531, 0
      %v744 = vsel %vm724, %v534, 0
      %v747 = vsel %vm724, %v537, 0
      %v750 = vsel %vm724, %v540, 0
      %v753 = vsel %vm724, %v543, 0
      %v756 = vsel %vm724, %v546, 0
      %v759 = vsel %vm724, %v549, 0
      %v762 = vsel %vm724, %v552, 0
      %v765 = vsel %vm724, %v555, 0
      %v768 = vsel %vm724, %v558, 0
      %v771 = vsel %vm724, %v561, 0
      %v774 = vsel %vm724, %v564, 0
      %v777 = vsel %vm724, %v567, 0
      %v780 = vsel %vm724, %v570, 0
      %v783 = vsel %vm724, %v573, 0
      %v786 = vsel %vm724, %v576, 0
      %v789 = vsel %vm724, %v579, 0
      %v792 = vsel %vm724, %v582, 0
      %v795 = vsel %vm724, %v585, 0
      %v798 = vsel %vm724, %v588, 0
      %v801 = vsel %vm724, %v591, 0
      %v804 = vsel %vm724, %v594, 0
      %v807 = vsel %vm724, %v597, 0
      %v810 = vsel %vm724, %v600, 0
      %v813 = vsel %vm724, %v603, 0
      %v816 = vsel %vm724, %v606, 0
      %v819 = vsel %vm724, %v609, 0
      %821 = vmatpush.msra.mxu0 0.0
      %822 = vmatpush.msra.mxu0 0.0
      %823 = vmatpush.msra.mxu0 0.0
      %824 = vmatpush.msra.mxu0 0.0
      %825 = vmatpush.msra.mxu0 0.0
      %826 = vmatpush.msra.mxu0 0.0
      %827 = vmatpush.msra.mxu0 0.0
      %828 = vmatpush.msra.mxu0 0.0
      %829 = vmatpush.msra.mxu0 0.0
      %830 = vmatpush.msra.mxu0 0.0
      %831 = vmatpush.msra.mxu0 0.0
      %832 = vmatpush.msra.mxu0 0.0
      %833 = vmatpush.msra.mxu0 0.0
      %834 = vmatpush.msra.mxu0 %v396
      %835 = vmatpush.msra.mxu0 %v395
      %836 = vmatpush.msra.mxu0 %v394
      %837 = vmatmul.f32.gmra.mxu0 %v726
      %v838 = vpop.f32.mrf.mxu0
      %v839 = vadd.f32 0.0, %v838
      %840 = vmatmul.f32.gmra.mxu0 %v729
      %v841 = vpop.f32.mrf.mxu0
      %v842 = vadd.f32 0.0, %v841
      %843 = vmatmul.f32.gmra.mxu0 %v732
      %v844 = vpop.f32.mrf.mxu0
      %v845 = vadd.f32 0.0, %v844
      %846 = vmatmul.f32.gmra.mxu0 %v735
      %v847 = vpop.f32.mrf.mxu0
      %v848 = vadd.f32 0.0, %v847
      %849 = vmatmul.f32.gmra.mxu0 %v738
      %v850 = vpop.f32.mrf.mxu0
      %v851 = vadd.f32 0.0, %v850
      %852 = vmatmul.f32.gmra.mxu0 %v741
      %v853 = vpop.f32.mrf.mxu0
      %v854 = vadd.f32 0.0, %v853
      %855 = vmatmul.f32.gmra.mxu0 %v744
      %v856 = vpop.f32.mrf.mxu0
      %v857 = vadd.f32 0.0, %v856
      %858 = vmatmul.f32.gmra.mxu0 %v747
      %v859 = vpop.f32.mrf.mxu0
      %v860 = vadd.f32 0.0, %v859
      %861 = vmatmul.f32.gmra.mxu0 %v750
      %v862 = vpop.f32.mrf.mxu0
      %v863 = vadd.f32 0.0, %v862
      %864 = vmatmul.f32.gmra.mxu0 %v753
      %v865 = vpop.f32.mrf.mxu0
      %v866 = vadd.f32 0.0, %v865
      %867 = vmatmul.f32.gmra.mxu0 %v756
      %v868 = vpop.f32.mrf.mxu0
      %v869 = vadd.f32 0.0, %v868
      %870 = vmatmul.f32.gmra.mxu0 %v759
      %v871 = vpop.f32.mrf.mxu0
      %v872 = vadd.f32 0.0, %v871
      %873 = vmatmul.f32.gmra.mxu0 %v762
      %v874 = vpop.f32.mrf.mxu0
      %v875 = vadd.f32 0.0, %v874
      %876 = vmatmul.f32.gmra.mxu0 %v765
      %v877 = vpop.f32.mrf.mxu0
      %v878 = vadd.f32 0.0, %v877
      %879 = vmatmul.f32.gmra.mxu0 %v768
      %v880 = vpop.f32.mrf.mxu0
      %v881 = vadd.f32 0.0, %v880
      %882 = vmatmul.f32.gmra.mxu0 %v771
      %v883 = vpop.f32.mrf.mxu0
      %v884 = vadd.f32 0.0, %v883
      %885 = vmatmul.f32.gmra.mxu0 %v774
      %v886 = vpop.f32.mrf.mxu0
      %v887 = vadd.f32 0.0, %v886
      %888 = vmatmul.f32.gmra.mxu0 %v777
      %v889 = vpop.f32.mrf.mxu0
      %v890 = vadd.f32 0.0, %v889
      %891 = vmatmul.f32.gmra.mxu0 %v780
      %v892 = vpop.f32.mrf.mxu0
      %v893 = vadd.f32 0.0, %v892
      %894 = vmatmul.f32.gmra.mxu0 %v783
      %v895 = vpop.f32.mrf.mxu0
      %v896 = vadd.f32 0.0, %v895
      %897 = vmatmul.f32.gmra.mxu0 %v786
      %v898 = vpop.f32.mrf.mxu0
      %v899 = vadd.f32 0.0, %v898
      %900 = vmatmul.f32.gmra.mxu0 %v789
      %v901 = vpop.f32.mrf.mxu0
      %v902 = vadd.f32 0.0, %v901
      %903 = vmatmul.f32.gmra.mxu0 %v792
      %v904 = vpop.f32.mrf.mxu0
      %v905 = vadd.f32 0.0, %v904
      %906 = vmatmul.f32.gmra.mxu0 %v795
      %v907 = vpop.f32.mrf.mxu0
      %v908 = vadd.f32 0.0, %v907
      %909 = vmatmul.f32.gmra.mxu0 %v798
      %v910 = vpop.f32.mrf.mxu0
      %v911 = vadd.f32 0.0, %v910
      %912 = vmatmul.f32.gmra.mxu0 %v801
      %v913 = vpop.f32.mrf.mxu0
      %v914 = vadd.f32 0.0, %v913
      %915 = vmatmul.f32.gmra.mxu0 %v804
      %v916 = vpop.f32.mrf.mxu0
      %v917 = vadd.f32 0.0, %v916
      %918 = vmatmul.f32.gmra.mxu0 %v807
      %v919 = vpop.f32.mrf.mxu0
      %v920 = vadd.f32 0.0, %v919
      %921 = vmatmul.f32.gmra.mxu0 %v810
      %v922 = vpop.f32.mrf.mxu0
      %v923 = vadd.f32 0.0, %v922
      %924 = vmatmul.f32.gmra.mxu0 %v813
      %v925 = vpop.f32.mrf.mxu0
      %v926 = vadd.f32 0.0, %v925
      %927 = vmatmul.f32.gmra.mxu0 %v816
      %v928 = vpop.f32.mrf.mxu0
      %v929 = vadd.f32 0.0, %v928
      %930 = vmatmul.f32.gmra.mxu0 %v819
      %v931 = vpop.f32.mrf.mxu0
      %v932 = vadd.f32 0.0, %v931
      %933 = vdwg.mxu0
      %934 = vxpose.xlu0.b32.start [1/16] %v839, 128
      %935 = vxpose.xlu0.b32.cont [2/16] %v842, 128
      %936 = vxpose.xlu0.b32.cont [3/16] %v845, 128
      %937 = vxpose.xlu0.b32.cont [4/16] %v848, 128
      %938 = vxpose.xlu0.b32.cont [5/16] %v851, 128
      %939 = vxpose.xlu0.b32.cont [6/16] %v854, 128
      %940 = vxpose.xlu0.b32.cont [7/16] %v857, 128
      %941 = vxpose.xlu0.b32.cont [8/16] %v860, 128
      %942 = vxpose.xlu0.b32.cont [9/16] %v863, 128
      %943 = vxpose.xlu0.b32.cont [10/16] %v866, 128
      %944 = vxpose.xlu0.b32.cont [11/16] %v869, 128
      %945 = vxpose.xlu0.b32.cont [12/16] %v872, 128
      %946 = vxpose.xlu0.b32.cont [13/16] %v875, 128
      %947 = vxpose.xlu0.b32.cont [14/16] %v878, 128
      %948 = vxpose.xlu0.b32.cont [15/16] %v881, 128
      %949 = vxpose.xlu0.b32.end [16/16] %v884, 128
      %v950 = vpop.trf.xlu0
      %v951 = vpop.trf.xlu0
      %v952 = vpop.trf.xlu0
      %v953 = vpop.trf.xlu0
      %v954 = vpop.trf.xlu0
      %v955 = vpop.trf.xlu0
      %v956 = vpop.trf.xlu0
      %v957 = vpop.trf.xlu0
      %v958 = vpop.trf.xlu0
      %v959 = vpop.trf.xlu0
      %v960 = vpop.trf.xlu0
      %v961 = vpop.trf.xlu0
      %v962 = vpop.trf.xlu0
      %v963 = vpop.trf.xlu0
      %v964 = vpop.trf.xlu0
      %v965 = vpop.trf.xlu0
      %966 = vxpose.xlu0.b32.start [1/16] %v887, 128
      %967 = vxpose.xlu0.b32.cont [2/16] %v890, 128
      %968 = vxpose.xlu0.b32.cont [3/16] %v893, 128
      %969 = vxpose.xlu0.b32.cont [4/16] %v896, 128
      %970 = vxpose.xlu0.b32.cont [5/16] %v899, 128
      %971 = vxpose.xlu0.b32.cont [6/16] %v902, 128
      %972 = vxpose.xlu0.b32.cont [7/16] %v905, 128
      %973 = vxpose.xlu0.b32.cont [8/16] %v908, 128
      %974 = vxpose.xlu0.b32.cont [9/16] %v911, 128
      %975 = vxpose.xlu0.b32.cont [10/16] %v914, 128
      %976 = vxpose.xlu0.b32.cont [11/16] %v917, 128
      %977 = vxpose.xlu0.b32.cont [12/16] %v920, 128
      %978 = vxpose.xlu0.b32.cont [13/16] %v923, 128
      %979 = vxpose.xlu0.b32.cont [14/16] %v926, 128
      %980 = vxpose.xlu0.b32.cont [15/16] %v929, 128
      %981 = vxpose.xlu0.b32.end [16/16] %v932, 128
      %v982 = vpop.trf.xlu0
      %v983 = vpop.trf.xlu0
      %v984 = vpop.trf.xlu0
      %v985 = vpop.trf.xlu0
      %v986 = vpop.trf.xlu0
      %v987 = vpop.trf.xlu0
      %v988 = vpop.trf.xlu0
      %v989 = vpop.trf.xlu0
      %v990 = vpop.trf.xlu0
      %v991 = vpop.trf.xlu0
      %v992 = vpop.trf.xlu0
      %v993 = vpop.trf.xlu0
      %v994 = vpop.trf.xlu0
      %v995 = vpop.trf.xlu0
      %v996 = vpop.trf.xlu0
      %v997 = vpop.trf.xlu0
      %v999 = vsel %vm724, %v677, 0
      %v1002 = vsel %vm724, %v680, 0
      %v1005 = vsel %vm724, %v683, 0
      %v1008 = vsel %vm724, %v686, 0
      %v1011 = vsel %vm724, %v689, 0
      %v1014 = vsel %vm724, %v692, 0
      %v1017 = vsel %vm724, %v695, 0
      %v1020 = vsel %vm724, %v698, 0
      %v1023 = vsel %vm724, %v701, 0
      %v1026 = vsel %vm724, %v704, 0
      %v1029 = vsel %vm724, %v707, 0
      %v1032 = vsel %vm724, %v710, 0
      %v1035 = vsel %vm724, %v713, 0
      %v1038 = vsel %vm724, %v716, 0
      %v1041 = vsel %vm724, %v719, 0
      %v1044 = vsel %vm724, %v722, 0
      %1046 = vmatpush.msra.mxu0 0.0
      %1047 = vmatpush.msra.mxu0 0.0
      %1048 = vmatpush.msra.mxu0 0.0
      %1049 = vmatpush.msra.mxu0 0.0
      %1050 = vmatpush.msra.mxu0 0.0
      %1051 = vmatpush.msra.mxu0 0.0
      %1052 = vmatpush.msra.mxu0 0.0
      %1053 = vmatpush.msra.mxu0 0.0
      %1054 = vmatpush.msra.mxu0 0.0
      %1055 = vmatpush.msra.mxu0 0.0
      %1056 = vmatpush.msra.mxu0 0.0
      %1057 = vmatpush.msra.mxu0 0.0
      %1058 = vmatpush.msra.mxu0 0.0
      %1059 = vmatpush.msra.mxu0 %v399
      %1060 = vmatpush.msra.mxu0 %v398
      %1061 = vmatpush.msra.mxu0 %v397
      %1062 = vmatmul.f32.gmra.mxu0 %v999
      %v1063 = vpop.f32.mrf.mxu0
      %v1064 = vadd.f32 0.0, %v1063
      %1065 = vmatmul.f32.gmra.mxu0 %v1002
      %v1066 = vpop.f32.mrf.mxu0
      %v1067 = vadd.f32 0.0, %v1066
      %1068 = vmatmul.f32.gmra.mxu0 %v1005
      %v1069 = vpop.f32.mrf.mxu0
      %v1070 = vadd.f32 0.0, %v1069
      %1071 = vmatmul.f32.gmra.mxu0 %v1008
      %v1072 = vpop.f32.mrf.mxu0
      %v1073 = vadd.f32 0.0, %v1072
      %1074 = vmatmul.f32.gmra.mxu0 %v1011
      %v1075 = vpop.f32.mrf.mxu0
      %v1076 = vadd.f32 0.0, %v1075
      %1077 = vmatmul.f32.gmra.mxu0 %v1014
      %v1078 = vpop.f32.mrf.mxu0
      %v1079 = vadd.f32 0.0, %v1078
      %1080 = vmatmul.f32.gmra.mxu0 %v1017
      %v1081 = vpop.f32.mrf.mxu0
      %v1082 = vadd.f32 0.0, %v1081
      %1083 = vmatmul.f32.gmra.mxu0 %v1020
      %v1084 = vpop.f32.mrf.mxu0
      %v1085 = vadd.f32 0.0, %v1084
      %1086 = vmatmul.f32.gmra.mxu0 %v1023
      %v1087 = vpop.f32.mrf.mxu0
      %v1088 = vadd.f32 0.0, %v1087
      %1089 = vmatmul.f32.gmra.mxu0 %v1026
      %v1090 = vpop.f32.mrf.mxu0
      %v1091 = vadd.f32 0.0, %v1090
      %1092 = vmatmul.f32.gmra.mxu0 %v1029
      %v1093 = vpop.f32.mrf.mxu0
      %v1094 = vadd.f32 0.0, %v1093
      %1095 = vmatmul.f32.gmra.mxu0 %v1032
      %v1096 = vpop.f32.mrf.mxu0
      %v1097 = vadd.f32 0.0, %v1096
      %1098 = vmatmul.f32.gmra.mxu0 %v1035
      %v1099 = vpop.f32.mrf.mxu0
      %v1100 = vadd.f32 0.0, %v1099
      %1101 = vmatmul.f32.gmra.mxu0 %v1038
      %v1102 = vpop.f32.mrf.mxu0
      %v1103 = vadd.f32 0.0, %v1102
      %1104 = vmatmul.f32.gmra.mxu0 %v1041
      %v1105 = vpop.f32.mrf.mxu0
      %v1106 = vadd.f32 0.0, %v1105
      %1107 = vmatmul.f32.gmra.mxu0 %v1044
      %v1108 = vpop.f32.mrf.mxu0
      %v1109 = vadd.f32 0.0, %v1108
      %1110 = vdwg.mxu0
      %v1111 = vunpack.c.0.s8 %v336
      %v1112 = vunpack.c.0.s8 %v337
      %v1113 = vunpack.c.1.s8 %v336
      %v1114 = vunpack.c.1.s8 %v337
      %v1115 = vunpack.c.2.s8 %v336
      %v1116 = vunpack.c.2.s8 %v337
      %v1117 = vunpack.c.3.s8 %v336
      %v1118 = vunpack.c.3.s8 %v337
      %v1119 = vunpack.c.0.s8 %v338
      %v1120 = vunpack.c.0.s8 %v339
      %v1121 = vunpack.c.1.s8 %v338
      %v1122 = vunpack.c.1.s8 %v339
      %v1123 = vunpack.c.2.s8 %v338
      %v1124 = vunpack.c.2.s8 %v339
      %v1125 = vunpack.c.3.s8 %v338
      %v1126 = vunpack.c.3.s8 %v339
      %v1127 = vunpack.c.0.s8 %v340
      %v1128 = vunpack.c.0.s8 %v341
      %v1129 = vunpack.c.1.s8 %v340
      %v1130 = vunpack.c.1.s8 %v341
      %v1131 = vunpack.c.2.s8 %v340
      %v1132 = vunpack.c.2.s8 %v341
      %v1133 = vunpack.c.3.s8 %v340
      %v1134 = vunpack.c.3.s8 %v341
      %v1135 = vunpack.c.0.s8 %v342
      %v1136 = vunpack.c.0.s8 %v343
      %v1137 = vunpack.c.1.s8 %v342
      %v1138 = vunpack.c.1.s8 %v343
      %v1139 = vunpack.c.2.s8 %v342
      %v1140 = vunpack.c.2.s8 %v343
      %v1141 = vunpack.c.3.s8 %v342
      %v1142 = vunpack.c.3.s8 %v343
      %v1143 = vcvt.s32.f32 %v1111
      %v1144 = vcvt.s32.f32 %v1112
      %v1145 = vcvt.s32.f32 %v1113
      %v1146 = vcvt.s32.f32 %v1114
      %v1147 = vcvt.s32.f32 %v1115
      %v1148 = vcvt.s32.f32 %v1116
      %v1149 = vcvt.s32.f32 %v1117
      %v1150 = vcvt.s32.f32 %v1118
      %v1151 = vcvt.s32.f32 %v1119
      %v1152 = vcvt.s32.f32 %v1120
      %v1153 = vcvt.s32.f32 %v1121
      %v1154 = vcvt.s32.f32 %v1122
      %v1155 = vcvt.s32.f32 %v1123
      %v1156 = vcvt.s32.f32 %v1124
      %v1157 = vcvt.s32.f32 %v1125
      %v1158 = vcvt.s32.f32 %v1126
      %v1159 = vcvt.s32.f32 %v1127
      %v1160 = vcvt.s32.f32 %v1128
      %v1161 = vcvt.s32.f32 %v1129
      %v1162 = vcvt.s32.f32 %v1130
      %v1163 = vcvt.s32.f32 %v1131
      %v1164 = vcvt.s32.f32 %v1132
      %v1165 = vcvt.s32.f32 %v1133
      %v1166 = vcvt.s32.f32 %v1134
      %v1167 = vcvt.s32.f32 %v1135
      %v1168 = vcvt.s32.f32 %v1136
      %v1169 = vcvt.s32.f32 %v1137
      %v1170 = vcvt.s32.f32 %v1138
      %v1171 = vcvt.s32.f32 %v1139
      %v1172 = vcvt.s32.f32 %v1140
      %v1173 = vcvt.s32.f32 %v1141
      %v1174 = vcvt.s32.f32 %v1142
      %vm1175 = vcmp.gt.f32.partialorder %v1143, 0.5
      %vm1176 = vcmp.gt.f32.partialorder %v1144, 0.5
      %vm1177 = vcmp.gt.f32.partialorder %v1145, 0.5
      %vm1178 = vcmp.gt.f32.partialorder %v1146, 0.5
      %vm1179 = vcmp.gt.f32.partialorder %v1147, 0.5
      %vm1180 = vcmp.gt.f32.partialorder %v1148, 0.5
      %vm1181 = vcmp.gt.f32.partialorder %v1149, 0.5
      %vm1182 = vcmp.gt.f32.partialorder %v1150, 0.5
      %vm1183 = vcmp.gt.f32.partialorder %v1151, 0.5
      %vm1184 = vcmp.gt.f32.partialorder %v1152, 0.5
      %vm1185 = vcmp.gt.f32.partialorder %v1153, 0.5
      %vm1186 = vcmp.gt.f32.partialorder %v1154, 0.5
      %vm1187 = vcmp.gt.f32.partialorder %v1155, 0.5
      %vm1188 = vcmp.gt.f32.partialorder %v1156, 0.5
      %vm1189 = vcmp.gt.f32.partialorder %v1157, 0.5
      %vm1190 = vcmp.gt.f32.partialorder %v1158, 0.5
      %vm1191 = vcmp.gt.f32.partialorder %v1159, 0.5
      %vm1192 = vcmp.gt.f32.partialorder %v1160, 0.5
      %vm1193 = vcmp.gt.f32.partialorder %v1161, 0.5
      %vm1194 = vcmp.gt.f32.partialorder %v1162, 0.5
      %vm1195 = vcmp.gt.f32.partialorder %v1163, 0.5
      %vm1196 = vcmp.gt.f32.partialorder %v1164, 0.5
      %vm1197 = vcmp.gt.f32.partialorder %v1165, 0.5
      %vm1198 = vcmp.gt.f32.partialorder %v1166, 0.5
      %vm1199 = vcmp.gt.f32.partialorder %v1167, 0.5
      %vm1200 = vcmp.gt.f32.partialorder %v1168, 0.5
      %vm1201 = vcmp.gt.f32.partialorder %v1169, 0.5
      %vm1202 = vcmp.gt.f32.partialorder %v1170, 0.5
      %vm1203 = vcmp.gt.f32.partialorder %v1171, 0.5
      %vm1204 = vcmp.gt.f32.partialorder %v1172, 0.5
      %vm1205 = vcmp.gt.f32.partialorder %v1173, 0.5
      %vm1206 = vcmp.gt.f32.partialorder %v1174, 0.5
      %v1207 = vsel %vm1175, 0.0, -1e+30
      %v1208 = vsel %vm1176, 0.0, -1e+30
      %v1209 = vsel %vm1177, 0.0, -1e+30
      %v1210 = vsel %vm1178, 0.0, -1e+30
      %v1211 = vsel %vm1179, 0.0, -1e+30
      %v1212 = vsel %vm1180, 0.0, -1e+30
      %v1213 = vsel %vm1181, 0.0, -1e+30
      %v1214 = vsel %vm1182, 0.0, -1e+30
      %v1215 = vsel %vm1183, 0.0, -1e+30
      %v1216 = vsel %vm1184, 0.0, -1e+30
      %v1217 = vsel %vm1185, 0.0, -1e+30
      %v1218 = vsel %vm1186, 0.0, -1e+30
      %v1219 = vsel %vm1187, 0.0, -1e+30
      %v1220 = vsel %vm1188, 0.0, -1e+30
      %v1221 = vsel %vm1189, 0.0, -1e+30
      %v1222 = vsel %vm1190, 0.0, -1e+30
      %v1223 = vsel %vm1191, 0.0, -1e+30
      %v1224 = vsel %vm1192, 0.0, -1e+30
      %v1225 = vsel %vm1193, 0.0, -1e+30
      %v1226 = vsel %vm1194, 0.0, -1e+30
      %v1227 = vsel %vm1195, 0.0, -1e+30
      %v1228 = vsel %vm1196, 0.0, -1e+30
      %v1229 = vsel %vm1197, 0.0, -1e+30
      %v1230 = vsel %vm1198, 0.0, -1e+30
      %v1231 = vsel %vm1199, 0.0, -1e+30
      %v1232 = vsel %vm1200, 0.0, -1e+30
      %v1233 = vsel %vm1201, 0.0, -1e+30
      %v1234 = vsel %vm1202, 0.0, -1e+30
      %v1235 = vsel %vm1203, 0.0, -1e+30
      %v1236 = vsel %vm1204, 0.0, -1e+30
      %v1237 = vsel %vm1205, 0.0, -1e+30
      %v1238 = vsel %vm1206, 0.0, -1e+30
      %1239 = vmatpush.msra.mxu0 0.0
      %1240 = vmatpush.msra.mxu0 0.0
      %1241 = vmatpush.msra.mxu0 0.0
      %1242 = vmatpush.msra.mxu0 0.0
      %1243 = vmatpush.msra.mxu0 0.0
      %1244 = vmatpush.msra.mxu0 0.0
      %1245 = vmatpush.msra.mxu0 0.0
      %1246 = vmatpush.msra.mxu0 0.0
      %1247 = vmatpush.msra.mxu0 0.0
      %1248 = vmatpush.msra.mxu0 0.0
      %1249 = vmatpush.msra.mxu0 0.0
      %1250 = vmatpush.msra.mxu0 0.0
      %1251 = vmatpush.msra.mxu0 0.0
      %1252 = vmatpush.msra.mxu0 0.0
      %1253 = vmatpush.msra.mxu0 %v335
      %1254 = vmatpush.msra.mxu0 %v334
      %1255 = vmatmul.f32.gmra.mxu0 %v612
      %v1256 = vpop.f32.mrf.mxu0
      %v1257 = vadd.f32 0.0, %v1256
      %1258 = vmatmul.f32.gmra.mxu0 %v615
      %v1259 = vpop.f32.mrf.mxu0
      %v1260 = vadd.f32 0.0, %v1259
      %1261 = vmatmul.f32.gmra.mxu0 %v618
      %v1262 = vpop.f32.mrf.mxu0
      %v1263 = vadd.f32 0.0, %v1262
      %1264 = vmatmul.f32.gmra.mxu0 %v621
      %v1265 = vpop.f32.mrf.mxu0
      %v1266 = vadd.f32 0.0, %v1265
      %1267 = vmatmul.f32.gmra.mxu0 %v624
      %v1268 = vpop.f32.mrf.mxu0
      %v1269 = vadd.f32 0.0, %v1268
      %1270 = vmatmul.f32.gmra.mxu0 %v627
      %v1271 = vpop.f32.mrf.mxu0
      %v1272 = vadd.f32 0.0, %v1271
      %1273 = vmatmul.f32.gmra.mxu0 %v630
      %v1274 = vpop.f32.mrf.mxu0
      %v1275 = vadd.f32 0.0, %v1274
      %1276 = vmatmul.f32.gmra.mxu0 %v633
      %v1277 = vpop.f32.mrf.mxu0
      %v1278 = vadd.f32 0.0, %v1277
      %1279 = vmatmul.f32.gmra.mxu0 %v636
      %v1280 = vpop.f32.mrf.mxu0
      %v1281 = vadd.f32 0.0, %v1280
      %1282 = vmatmul.f32.gmra.mxu0 %v639
      %v1283 = vpop.f32.mrf.mxu0
      %v1284 = vadd.f32 0.0, %v1283
      %1285 = vmatmul.f32.gmra.mxu0 %v642
      %v1286 = vpop.f32.mrf.mxu0
      %v1287 = vadd.f32 0.0, %v1286
      %1288 = vmatmul.f32.gmra.mxu0 %v645
      %v1289 = vpop.f32.mrf.mxu0
      %v1290 = vadd.f32 0.0, %v1289
      %1291 = vmatmul.f32.gmra.mxu0 %v648
      %v1292 = vpop.f32.mrf.mxu0
      %v1293 = vadd.f32 0.0, %v1292
      %1294 = vmatmul.f32.gmra.mxu0 %v651
      %v1295 = vpop.f32.mrf.mxu0
      %v1296 = vadd.f32 0.0, %v1295
      %1297 = vmatmul.f32.gmra.mxu0 %v654
      %v1298 = vpop.f32.mrf.mxu0
      %v1299 = vadd.f32 0.0, %v1298
      %1300 = vmatmul.f32.gmra.mxu0 %v657
      %v1301 = vpop.f32.mrf.mxu0
      %v1302 = vadd.f32 0.0, %v1301
      %1303 = vdwg.mxu0
      %1304 = vrot.lane.b32.xlu0 %v516, 1
      %v1305 = vpop.permute.xlu0 %1304
      %1306 = vrot.lane.b32.xlu0 %v519, 1
      %v1307 = vpop.permute.xlu0 %1306
      %1308 = vrot.lane.b32.xlu0 %v522, 1
      %v1309 = vpop.permute.xlu0 %1308
      %1310 = vrot.lane.b32.xlu0 %v525, 1
      %v1311 = vpop.permute.xlu0 %1310
      %1312 = vrot.lane.b32.xlu0 %v528, 1
      %v1313 = vpop.permute.xlu0 %1312
      %1314 = vrot.lane.b32.xlu0 %v531, 1
      %v1315 = vpop.permute.xlu0 %1314
      %1316 = vrot.lane.b32.xlu0 %v534, 1
      %v1317 = vpop.permute.xlu0 %1316
      %1318 = vrot.lane.b32.xlu0 %v537, 1
      %v1319 = vpop.permute.xlu0 %1318
      %1320 = vrot.lane.b32.xlu0 %v540, 1
      %v1321 = vpop.permute.xlu0 %1320
      %1322 = vrot.lane.b32.xlu0 %v543, 1
      %v1323 = vpop.permute.xlu0 %1322
      %1324 = vrot.lane.b32.xlu0 %v546, 1
      %v1325 = vpop.permute.xlu0 %1324
      %1326 = vrot.lane.b32.xlu0 %v549, 1
      %v1327 = vpop.permute.xlu0 %1326
      %1328 = vrot.lane.b32.xlu0 %v552, 1
      %v1329 = vpop.permute.xlu0 %1328
      %1330 = vrot.lane.b32.xlu0 %v555, 1
      %v1331 = vpop.permute.xlu0 %1330
      %1332 = vrot.lane.b32.xlu0 %v558, 1
      %v1333 = vpop.permute.xlu0 %1332
      %1334 = vrot.lane.b32.xlu0 %v561, 1
      %v1335 = vpop.permute.xlu0 %1334
      %1336 = vrot.lane.b32.xlu0 %v564, 1
      %v1337 = vpop.permute.xlu0 %1336
      %1338 = vrot.lane.b32.xlu0 %v567, 1
      %v1339 = vpop.permute.xlu0 %1338
      %1340 = vrot.lane.b32.xlu0 %v570, 1
      %v1341 = vpop.permute.xlu0 %1340
      %1342 = vrot.lane.b32.xlu0 %v573, 1
      %v1343 = vpop.permute.xlu0 %1342
      %1344 = vrot.lane.b32.xlu0 %v576, 1
      %v1345 = vpop.permute.xlu0 %1344
      %1346 = vrot.lane.b32.xlu0 %v579, 1
      %v1347 = vpop.permute.xlu0 %1346
      %1348 = vrot.lane.b32.xlu0 %v582, 1
      %v1349 = vpop.permute.xlu0 %1348
      %1350 = vrot.lane.b32.xlu0 %v585, 1
      %v1351 = vpop.permute.xlu0 %1350
      %1352 = vrot.lane.b32.xlu0 %v588, 1
      %v1353 = vpop.permute.xlu0 %1352
      %1354 = vrot.lane.b32.xlu0 %v591, 1
      %v1355 = vpop.permute.xlu0 %1354
      %1356 = vrot.lane.b32.xlu0 %v594, 1
      %v1357 = vpop.permute.xlu0 %1356
      %1358 = vrot.lane.b32.xlu0 %v597, 1
      %v1359 = vpop.permute.xlu0 %1358
      %1360 = vrot.lane.b32.xlu0 %v600, 1
      %v1361 = vpop.permute.xlu0 %1360
      %1362 = vrot.lane.b32.xlu0 %v603, 1
      %v1363 = vpop.permute.xlu0 %1362
      %1364 = vrot.lane.b32.xlu0 %v606, 1
      %v1365 = vpop.permute.xlu0 %1364
      %1366 = vrot.lane.b32.xlu0 %v609, 1
      %v1367 = vpop.permute.xlu0 %1366
      %vm1400 = vcmask 7168
      %v1401 = vsel %vm1400, 1.0, %v1305
      %v1402 = vsel %vm1400, 1.0, %v1307
      %v1403 = vsel %vm1400, 1.0, %v1309
      %v1404 = vsel %vm1400, 1.0, %v1311
      %v1405 = vsel %vm1400, 1.0, %v1313
      %v1406 = vsel %vm1400, 1.0, %v1315
      %v1407 = vsel %vm1400, 1.0, %v1317
      %v1408 = vsel %vm1400, 1.0, %v1319
      %v1409 = vsel %vm1400, 1.0, %v1321
      %v1410 = vsel %vm1400, 1.0, %v1323
      %v1411 = vsel %vm1400, 1.0, %v1325
      %v1412 = vsel %vm1400, 1.0, %v1327
      %v1413 = vsel %vm1400, 1.0, %v1329
      %v1414 = vsel %vm1400, 1.0, %v1331
      %v1415 = vsel %vm1400, 1.0, %v1333
      %v1416 = vsel %vm1400, 1.0, %v1335
      %v1417 = vsel %vm1400, 1.0, %v1337
      %v1418 = vsel %vm1400, 1.0, %v1339
      %v1419 = vsel %vm1400, 1.0, %v1341
      %v1420 = vsel %vm1400, 1.0, %v1343
      %v1421 = vsel %vm1400, 1.0, %v1345
      %v1422 = vsel %vm1400, 1.0, %v1347
      %v1423 = vsel %vm1400, 1.0, %v1349
      %v1424 = vsel %vm1400, 1.0, %v1351
      %v1425 = vsel %vm1400, 1.0, %v1353
      %v1426 = vsel %vm1400, 1.0, %v1355
      %v1427 = vsel %vm1400, 1.0, %v1357
      %v1428 = vsel %vm1400, 1.0, %v1359
      %v1429 = vsel %vm1400, 1.0, %v1361
      %v1430 = vsel %vm1400, 1.0, %v1363
      %v1431 = vsel %vm1400, 1.0, %v1365
      %v1432 = vsel %vm1400, 1.0, %v1367
      %1434 = vset.pattern.permute.xlu0 0
      %1435 = vperm.xlu0 %1434, %v1064
      %v1436 = vpop.permute.xlu0 %1435
      %1439 = vset.pattern.permute.xlu0 0
      %1440 = vperm.xlu0 %1439, %v1067
      %v1441 = vpop.permute.xlu0 %1440
      %1444 = vset.pattern.permute.xlu0 0
      %1445 = vperm.xlu0 %1444, %v1070
      %v1446 = vpop.permute.xlu0 %1445
      %1449 = vset.pattern.permute.xlu0 0
      %1450 = vperm.xlu0 %1449, %v1073
      %v1451 = vpop.permute.xlu0 %1450
      %1454 = vset.pattern.permute.xlu0 0
      %1455 = vperm.xlu0 %1454, %v1076
      %v1456 = vpop.permute.xlu0 %1455
      %1459 = vset.pattern.permute.xlu0 0
      %1460 = vperm.xlu0 %1459, %v1079
      %v1461 = vpop.permute.xlu0 %1460
      %1464 = vset.pattern.permute.xlu0 0
      %1465 = vperm.xlu0 %1464, %v1082
      %v1466 = vpop.permute.xlu0 %1465
      %1469 = vset.pattern.permute.xlu0 0
      %1470 = vperm.xlu0 %1469, %v1085
      %v1471 = vpop.permute.xlu0 %1470
      %1474 = vset.pattern.permute.xlu0 0
      %1475 = vperm.xlu0 %1474, %v1088
      %v1476 = vpop.permute.xlu0 %1475
      %1479 = vset.pattern.permute.xlu0 0
      %1480 = vperm.xlu0 %1479, %v1091
      %v1481 = vpop.permute.xlu0 %1480
      %1484 = vset.pattern.permute.xlu0 0
      %1485 = vperm.xlu0 %1484, %v1094
      %v1486 = vpop.permute.xlu0 %1485
      %1489 = vset.pattern.permute.xlu0 0
      %1490 = vperm.xlu0 %1489, %v1097
      %v1491 = vpop.permute.xlu0 %1490
      %1494 = vset.pattern.permute.xlu0 0
      %1495 = vperm.xlu0 %1494, %v1100
      %v1496 = vpop.permute.xlu0 %1495
      %1499 = vset.pattern.permute.xlu0 0
      %1500 = vperm.xlu0 %1499, %v1103
      %v1501 = vpop.permute.xlu0 %1500
      %1504 = vset.pattern.permute.xlu0 0
      %1505 = vperm.xlu0 %1504, %v1106
      %v1506 = vpop.permute.xlu0 %1505
      %1509 = vset.pattern.permute.xlu0 0
      %1510 = vperm.xlu0 %1509, %v1109
      %v1511 = vpop.permute.xlu0 %1510
      %v1513 = vperm.slane %v950, 0
      %v1514 = vperm.slane %v982, 0
      %v1515 = vadd.f32 %v1436, %v1513
      %v1516 = vadd.f32 %v1436, %v1514
      %v1517 = vadd.f32 %v1441, %v1513
      %v1518 = vadd.f32 %v1441, %v1514
      %v1519 = vadd.f32 %v1446, %v1513
      %v1520 = vadd.f32 %v1446, %v1514
      %v1521 = vadd.f32 %v1451, %v1513
      %v1522 = vadd.f32 %v1451, %v1514
      %v1523 = vadd.f32 %v1456, %v1513
      %v1524 = vadd.f32 %v1456, %v1514
      %v1525 = vadd.f32 %v1461, %v1513
      %v1526 = vadd.f32 %v1461, %v1514
      %v1527 = vadd.f32 %v1466, %v1513
      %v1528 = vadd.f32 %v1466, %v1514
      %v1529 = vadd.f32 %v1471, %v1513
      %v1530 = vadd.f32 %v1471, %v1514
      %v1531 = vadd.f32 %v1476, %v1513
      %v1532 = vadd.f32 %v1476, %v1514
      %v1533 = vadd.f32 %v1481, %v1513
      %v1534 = vadd.f32 %v1481, %v1514
      %v1535 = vadd.f32 %v1486, %v1513
      %v1536 = vadd.f32 %v1486, %v1514
      %v1537 = vadd.f32 %v1491, %v1513
      %v1538 = vadd.f32 %v1491, %v1514
      %v1539 = vadd.f32 %v1496, %v1513
      %v1540 = vadd.f32 %v1496, %v1514
      %v1541 = vadd.f32 %v1501, %v1513
      %v1542 = vadd.f32 %v1501, %v1514
      %v1543 = vadd.f32 %v1506, %v1513
      %v1544 = vadd.f32 %v1506, %v1514
      %v1545 = vadd.f32 %v1511, %v1513
      %v1546 = vadd.f32 %v1511, %v1514
      %v1547 = vmul.f32 %v1515, 0.2
      %v1548 = vmul.f32 %v1516, 0.2
      %v1549 = vmul.f32 %v1517, 0.2
      %v1550 = vmul.f32 %v1518, 0.2
      %v1551 = vmul.f32 %v1519, 0.2
      %v1552 = vmul.f32 %v1520, 0.2
      %v1553 = vmul.f32 %v1521, 0.2
      %v1554 = vmul.f32 %v1522, 0.2
      %v1555 = vmul.f32 %v1523, 0.2
      %v1556 = vmul.f32 %v1524, 0.2
      %v1557 = vmul.f32 %v1525, 0.2
      %v1558 = vmul.f32 %v1526, 0.2
      %v1559 = vmul.f32 %v1527, 0.2
      %v1560 = vmul.f32 %v1528, 0.2
      %v1561 = vmul.f32 %v1529, 0.2
      %v1562 = vmul.f32 %v1530, 0.2
      %v1563 = vmul.f32 %v1531, 0.2
      %v1564 = vmul.f32 %v1532, 0.2
      %v1565 = vmul.f32 %v1533, 0.2
      %v1566 = vmul.f32 %v1534, 0.2
      %v1567 = vmul.f32 %v1535, 0.2
      %v1568 = vmul.f32 %v1536, 0.2
      %v1569 = vmul.f32 %v1537, 0.2
      %v1570 = vmul.f32 %v1538, 0.2
      %v1571 = vmul.f32 %v1539, 0.2
      %v1572 = vmul.f32 %v1540, 0.2
      %v1573 = vmul.f32 %v1541, 0.2
      %v1574 = vmul.f32 %v1542, 0.2
      %v1575 = vmul.f32 %v1543, 0.2
      %v1576 = vmul.f32 %v1544, 0.2
      %v1577 = vmul.f32 %v1545, 0.2
      %v1578 = vmul.f32 %v1546, 0.2
      %v1579 = vmax.f32 %v1515, %v1547
      %v1580 = vmax.f32 %v1516, %v1548
      %v1581 = vmax.f32 %v1517, %v1549
      %v1582 = vmax.f32 %v1518, %v1550
      %v1583 = vmax.f32 %v1519, %v1551
      %v1584 = vmax.f32 %v1520, %v1552
      %v1585 = vmax.f32 %v1521, %v1553
      %v1586 = vmax.f32 %v1522, %v1554
      %v1587 = vmax.f32 %v1523, %v1555
      %v1588 = vmax.f32 %v1524, %v1556
      %v1589 = vmax.f32 %v1525, %v1557
      %v1590 = vmax.f32 %v1526, %v1558
      %v1591 = vmax.f32 %v1527, %v1559
      %v1592 = vmax.f32 %v1528, %v1560
      %v1593 = vmax.f32 %v1529, %v1561
      %v1594 = vmax.f32 %v1530, %v1562
      %v1595 = vmax.f32 %v1531, %v1563
      %v1596 = vmax.f32 %v1532, %v1564
      %v1597 = vmax.f32 %v1533, %v1565
      %v1598 = vmax.f32 %v1534, %v1566
      %v1599 = vmax.f32 %v1535, %v1567
      %v1600 = vmax.f32 %v1536, %v1568
      %v1601 = vmax.f32 %v1537, %v1569
      %v1602 = vmax.f32 %v1538, %v1570
      %v1603 = vmax.f32 %v1539, %v1571
      %v1604 = vmax.f32 %v1540, %v1572
      %v1605 = vmax.f32 %v1541, %v1573
      %v1606 = vmax.f32 %v1542, %v1574
      %v1607 = vmax.f32 %v1543, %v1575
      %v1608 = vmax.f32 %v1544, %v1576
      %v1609 = vmax.f32 %v1545, %v1577
      %v1610 = vmax.f32 %v1546, %v1578
      %v1611 = vadd.f32 %v1579, %v1207
      %v1612 = vadd.f32 %v1580, %v1208
      %v1613 = vadd.f32 %v1581, %v1209
      %v1614 = vadd.f32 %v1582, %v1210
      %v1615 = vadd.f32 %v1583, %v1211
      %v1616 = vadd.f32 %v1584, %v1212
      %v1617 = vadd.f32 %v1585, %v1213
      %v1618 = vadd.f32 %v1586, %v1214
      %v1619 = vadd.f32 %v1587, %v1215
      %v1620 = vadd.f32 %v1588, %v1216
      %v1621 = vadd.f32 %v1589, %v1217
      %v1622 = vadd.f32 %v1590, %v1218
      %v1623 = vadd.f32 %v1591, %v1219
      %v1624 = vadd.f32 %v1592, %v1220
      %v1625 = vadd.f32 %v1593, %v1221
      %v1626 = vadd.f32 %v1594, %v1222
      %v1627 = vadd.f32 %v1595, %v1223
      %v1628 = vadd.f32 %v1596, %v1224
      %v1629 = vadd.f32 %v1597, %v1225
      %v1630 = vadd.f32 %v1598, %v1226
      %v1631 = vadd.f32 %v1599, %v1227
      %v1632 = vadd.f32 %v1600, %v1228
      %v1633 = vadd.f32 %v1601, %v1229
      %v1634 = vadd.f32 %v1602, %v1230
      %v1635 = vadd.f32 %v1603, %v1231
      %v1636 = vadd.f32 %v1604, %v1232
      %v1637 = vadd.f32 %v1605, %v1233
      %v1638 = vadd.f32 %v1606, %v1234
      %v1639 = vadd.f32 %v1607, %v1235
      %v1640 = vadd.f32 %v1608, %v1236
      %v1641 = vadd.f32 %v1609, %v1237
      %v1642 = vadd.f32 %v1610, %v1238
      %v1643 = vmax.f32 %v1611, %v1612
      %1644 = vmax.xlane.f32.xlu0 %v1643
      %v1645 = vpop.xlane.xlu0 %1644
      %v1646 = vmax.f32 %v1613, %v1614
      %1647 = vmax.xlane.f32.xlu0 %v1646
      %v1648 = vpop.xlane.xlu0 %1647
      %v1649 = vmax.f32 %v1615, %v1616
      %1650 = vmax.xlane.f32.xlu0 %v1649
      %v1651 = vpop.xlane.xlu0 %1650
      %v1652 = vmax.f32 %v1617, %v1618
      %1653 = vmax.xlane.f32.xlu0 %v1652
      %v1654 = vpop.xlane.xlu0 %1653
      %v1655 = vmax.f32 %v1619, %v1620
      %1656 = vmax.xlane.f32.xlu0 %v1655
      %v1657 = vpop.xlane.xlu0 %1656
      %v1658 = vmax.f32 %v1621, %v1622
      %1659 = vmax.xlane.f32.xlu0 %v1658
      %v1660 = vpop.xlane.xlu0 %1659
      %v1661 = vmax.f32 %v1623, %v1624
      %1662 = vmax.xlane.f32.xlu0 %v1661
      %v1663 = vpop.xlane.xlu0 %1662
      %v1664 = vmax.f32 %v1625, %v1626
      %1665 = vmax.xlane.f32.xlu0 %v1664
      %v1666 = vpop.xlane.xlu0 %1665
      %v1667 = vmax.f32 %v1627, %v1628
      %1668 = vmax.xlane.f32.xlu0 %v1667
      %v1669 = vpop.xlane.xlu0 %1668
      %v1670 = vmax.f32 %v1629, %v1630
      %1671 = vmax.xlane.f32.xlu0 %v1670
      %v1672 = vpop.xlane.xlu0 %1671
      %v1673 = vmax.f32 %v1631, %v1632
      %1674 = vmax.xlane.f32.xlu0 %v1673
      %v1675 = vpop.xlane.xlu0 %1674
      %v1676 = vmax.f32 %v1633, %v1634
      %1677 = vmax.xlane.f32.xlu0 %v1676
      %v1678 = vpop.xlane.xlu0 %1677
      %v1679 = vmax.f32 %v1635, %v1636
      %1680 = vmax.xlane.f32.xlu0 %v1679
      %v1681 = vpop.xlane.xlu0 %1680
      %v1682 = vmax.f32 %v1637, %v1638
      %1683 = vmax.xlane.f32.xlu0 %v1682
      %v1684 = vpop.xlane.xlu0 %1683
      %v1685 = vmax.f32 %v1639, %v1640
      %1686 = vmax.xlane.f32.xlu0 %v1685
      %v1687 = vpop.xlane.xlu0 %1686
      %v1688 = vmax.f32 %v1641, %v1642
      %1689 = vmax.xlane.f32.xlu0 %v1688
      %v1690 = vpop.xlane.xlu0 %1689
      %v1691 = vsub.f32 %v1611, %v1645
      %v1692 = vsub.f32 %v1612, %v1645
      %v1693 = vsub.f32 %v1613, %v1648
      %v1694 = vsub.f32 %v1614, %v1648
      %v1695 = vsub.f32 %v1615, %v1651
      %v1696 = vsub.f32 %v1616, %v1651
      %v1697 = vsub.f32 %v1617, %v1654
      %v1698 = vsub.f32 %v1618, %v1654
      %v1699 = vsub.f32 %v1619, %v1657
      %v1700 = vsub.f32 %v1620, %v1657
      %v1701 = vsub.f32 %v1621, %v1660
      %v1702 = vsub.f32 %v1622, %v1660
      %v1703 = vsub.f32 %v1623, %v1663
      %v1704 = vsub.f32 %v1624, %v1663
      %v1705 = vsub.f32 %v1625, %v1666
      %v1706 = vsub.f32 %v1626, %v1666
      %v1707 = vsub.f32 %v1627, %v1669
      %v1708 = vsub.f32 %v1628, %v1669
      %v1709 = vsub.f32 %v1629, %v1672
      %v1710 = vsub.f32 %v1630, %v1672
      %v1711 = vsub.f32 %v1631, %v1675
      %v1712 = vsub.f32 %v1632, %v1675
      %v1713 = vsub.f32 %v1633, %v1678
      %v1714 = vsub.f32 %v1634, %v1678
      %v1715 = vsub.f32 %v1635, %v1681
      %v1716 = vsub.f32 %v1636, %v1681
      %v1717 = vsub.f32 %v1637, %v1684
      %v1718 = vsub.f32 %v1638, %v1684
      %v1719 = vsub.f32 %v1639, %v1687
      %v1720 = vsub.f32 %v1640, %v1687
      %v1721 = vsub.f32 %v1641, %v1690
      %v1722 = vsub.f32 %v1642, %v1690
      %v1723 = vmul.f32 %v1691, 1.442695
      %v1724 = vpow.pop %v1723
      %v1725 = vmul.f32 %v1692, 1.442695
      %v1726 = vpow.pop %v1725
      %v1727 = vmul.f32 %v1693, 1.442695
      %v1728 = vpow.pop %v1727
      %v1729 = vmul.f32 %v1694, 1.442695
      %v1730 = vpow.pop %v1729
      %v1731 = vmul.f32 %v1695, 1.442695
      %v1732 = vpow.pop %v1731
      %v1733 = vmul.f32 %v1696, 1.442695
      %v1734 = vpow.pop %v1733
      %v1735 = vmul.f32 %v1697, 1.442695
      %v1736 = vpow.pop %v1735
      %v1737 = vmul.f32 %v1698, 1.442695
      %v1738 = vpow.pop %v1737
      %v1739 = vmul.f32 %v1699, 1.442695
      %v1740 = vpow.pop %v1739
      %v1741 = vmul.f32 %v1700, 1.442695
      %v1742 = vpow.pop %v1741
      %v1743 = vmul.f32 %v1701, 1.442695
      %v1744 = vpow.pop %v1743
      %v1745 = vmul.f32 %v1702, 1.442695
      %v1746 = vpow.pop %v1745
      %v1747 = vmul.f32 %v1703, 1.442695
      %v1748 = vpow.pop %v1747
      %v1749 = vmul.f32 %v1704, 1.442695
      %v1750 = vpow.pop %v1749
      %v1751 = vmul.f32 %v1705, 1.442695
      %v1752 = vpow.pop %v1751
      %v1753 = vmul.f32 %v1706, 1.442695
      %v1754 = vpow.pop %v1753
      %v1755 = vmul.f32 %v1707, 1.442695
      %v1756 = vpow.pop %v1755
      %v1757 = vmul.f32 %v1708, 1.442695
      %v1758 = vpow.pop %v1757
      %v1759 = vmul.f32 %v1709, 1.442695
      %v1760 = vpow.pop %v1759
      %v1761 = vmul.f32 %v1710, 1.442695
      %v1762 = vpow.pop %v1761
      %v1763 = vmul.f32 %v1711, 1.442695
      %v1764 = vpow.pop %v1763
      %v1765 = vmul.f32 %v1712, 1.442695
      %v1766 = vpow.pop %v1765
      %v1767 = vmul.f32 %v1713, 1.442695
      %v1768 = vpow.pop %v1767
      %v1769 = vmul.f32 %v1714, 1.442695
      %v1770 = vpow.pop %v1769
      %v1771 = vmul.f32 %v1715, 1.442695
      %v1772 = vpow.pop %v1771
      %v1773 = vmul.f32 %v1716, 1.442695
      %v1774 = vpow.pop %v1773
      %v1775 = vmul.f32 %v1717, 1.442695
      %v1776 = vpow.pop %v1775
      %v1777 = vmul.f32 %v1718, 1.442695
      %v1778 = vpow.pop %v1777
      %v1779 = vmul.f32 %v1719, 1.442695
      %v1780 = vpow.pop %v1779
      %v1781 = vmul.f32 %v1720, 1.442695
      %v1782 = vpow.pop %v1781
      %v1783 = vmul.f32 %v1721, 1.442695
      %v1784 = vpow.pop %v1783
      %v1785 = vmul.f32 %v1722, 1.442695
      %v1786 = vpow.pop %v1785
      %1787 = vmatpush.msra.mxu0 %v1416
      %1788 = vmatpush.msra.mxu0 %v1415
      %1789 = vmatpush.msra.mxu0 %v1414
      %1790 = vmatpush.msra.mxu0 %v1413
      %1791 = vmatpush.msra.mxu0 %v1412
      %1792 = vmatpush.msra.mxu0 %v1411
      %1793 = vmatpush.msra.mxu0 %v1410
      %1794 = vmatpush.msra.mxu0 %v1409
      %1795 = vmatpush.msra.mxu0 %v1408
      %1796 = vmatpush.msra.mxu0 %v1407
      %1797 = vmatpush.msra.mxu0 %v1406
      %1798 = vmatpush.msra.mxu0 %v1405
      %1799 = vmatpush.msra.mxu0 %v1404
      %1800 = vmatpush.msra.mxu0 %v1403
      %1801 = vmatpush.msra.mxu0 %v1402
      %1802 = vmatpush.msra.mxu0 %v1401
      %1803 = vmatmul.f32.gmra.mxu0 %v1724
      %v1804 = vpop.f32.mrf.mxu0
      %v1805 = vadd.f32 0.0, %v1804
      %1806 = vmatmul.f32.gmra.mxu0 %v1728
      %v1807 = vpop.f32.mrf.mxu0
      %v1808 = vadd.f32 0.0, %v1807
      %1809 = vmatmul.f32.gmra.mxu0 %v1732
      %v1810 = vpop.f32.mrf.mxu0
      %v1811 = vadd.f32 0.0, %v1810
      %1812 = vmatmul.f32.gmra.mxu0 %v1736
      %v1813 = vpop.f32.mrf.mxu0
      %v1814 = vadd.f32 0.0, %v1813
      %1815 = vmatmul.f32.gmra.mxu0 %v1740
      %v1816 = vpop.f32.mrf.mxu0
      %v1817 = vadd.f32 0.0, %v1816
      %1818 = vmatmul.f32.gmra.mxu0 %v1744
      %v1819 = vpop.f32.mrf.mxu0
      %v1820 = vadd.f32 0.0, %v1819
      %1821 = vmatmul.f32.gmra.mxu0 %v1748
      %v1822 = vpop.f32.mrf.mxu0
      %v1823 = vadd.f32 0.0, %v1822
      %1824 = vmatmul.f32.gmra.mxu0 %v1752
      %v1825 = vpop.f32.mrf.mxu0
      %v1826 = vadd.f32 0.0, %v1825
      %1827 = vmatmul.f32.gmra.mxu0 %v1756
      %v1828 = vpop.f32.mrf.mxu0
      %v1829 = vadd.f32 0.0, %v1828
      %1830 = vmatmul.f32.gmra.mxu0 %v1760
      %v1831 = vpop.f32.mrf.mxu0
      %v1832 = vadd.f32 0.0, %v1831
      %1833 = vmatmul.f32.gmra.mxu0 %v1764
      %v1834 = vpop.f32.mrf.mxu0
      %v1835 = vadd.f32 0.0, %v1834
      %1836 = vmatmul.f32.gmra.mxu0 %v1768
      %v1837 = vpop.f32.mrf.mxu0
      %v1838 = vadd.f32 0.0, %v1837
      %1839 = vmatmul.f32.gmra.mxu0 %v1772
      %v1840 = vpop.f32.mrf.mxu0
      %v1841 = vadd.f32 0.0, %v1840
      %1842 = vmatmul.f32.gmra.mxu0 %v1776
      %v1843 = vpop.f32.mrf.mxu0
      %v1844 = vadd.f32 0.0, %v1843
      %1845 = vmatmul.f32.gmra.mxu0 %v1780
      %v1846 = vpop.f32.mrf.mxu0
      %v1847 = vadd.f32 0.0, %v1846
      %1848 = vmatmul.f32.gmra.mxu0 %v1784
      %v1849 = vpop.f32.mrf.mxu0
      %v1850 = vadd.f32 0.0, %v1849
      %1851 = vdwg.mxu0
      %1852 = vmatpush.msra.mxu0 %v1432
      %1853 = vmatpush.msra.mxu0 %v1431
      %1854 = vmatpush.msra.mxu0 %v1430
      %1855 = vmatpush.msra.mxu0 %v1429
      %1856 = vmatpush.msra.mxu0 %v1428
      %1857 = vmatpush.msra.mxu0 %v1427
      %1858 = vmatpush.msra.mxu0 %v1426
      %1859 = vmatpush.msra.mxu0 %v1425
      %1860 = vmatpush.msra.mxu0 %v1424
      %1861 = vmatpush.msra.mxu0 %v1423
      %1862 = vmatpush.msra.mxu0 %v1422
      %1863 = vmatpush.msra.mxu0 %v1421
      %1864 = vmatpush.msra.mxu0 %v1420
      %1865 = vmatpush.msra.mxu0 %v1419
      %1866 = vmatpush.msra.mxu0 %v1418
      %1867 = vmatpush.msra.mxu0 %v1417
      %1868 = vmatmul.f32.gmra.mxu0 %v1726
      %v1869 = vpop.f32.mrf.mxu0
      %v1870 = vadd.f32 %v1805, %v1869
      %1871 = vmatmul.f32.gmra.mxu0 %v1730
      %v1872 = vpop.f32.mrf.mxu0
      %v1873 = vadd.f32 %v1808, %v1872
      %1874 = vmatmul.f32.gmra.mxu0 %v1734
      %v1875 = vpop.f32.mrf.mxu0
      %v1876 = vadd.f32 %v1811, %v1875
      %1877 = vmatmul.f32.gmra.mxu0 %v1738
      %v1878 = vpop.f32.mrf.mxu0
      %v1879 = vadd.f32 %v1814, %v1878
      %1880 = vmatmul.f32.gmra.mxu0 %v1742
      %v1881 = vpop.f32.mrf.mxu0
      %v1882 = vadd.f32 %v1817, %v1881
      %1883 = vmatmul.f32.gmra.mxu0 %v1746
      %v1884 = vpop.f32.mrf.mxu0
      %v1885 = vadd.f32 %v1820, %v1884
      %1886 = vmatmul.f32.gmra.mxu0 %v1750
      %v1887 = vpop.f32.mrf.mxu0
      %v1888 = vadd.f32 %v1823, %v1887
      %1889 = vmatmul.f32.gmra.mxu0 %v1754
      %v1890 = vpop.f32.mrf.mxu0
      %v1891 = vadd.f32 %v1826, %v1890
      %1892 = vmatmul.f32.gmra.mxu0 %v1758
      %v1893 = vpop.f32.mrf.mxu0
      %v1894 = vadd.f32 %v1829, %v1893
      %1895 = vmatmul.f32.gmra.mxu0 %v1762
      %v1896 = vpop.f32.mrf.mxu0
      %v1897 = vadd.f32 %v1832, %v1896
      %1898 = vmatmul.f32.gmra.mxu0 %v1766
      %v1899 = vpop.f32.mrf.mxu0
      %v1900 = vadd.f32 %v1835, %v1899
      %1901 = vmatmul.f32.gmra.mxu0 %v1770
      %v1902 = vpop.f32.mrf.mxu0
      %v1903 = vadd.f32 %v1838, %v1902
      %1904 = vmatmul.f32.gmra.mxu0 %v1774
      %v1905 = vpop.f32.mrf.mxu0
      %v1906 = vadd.f32 %v1841, %v1905
      %1907 = vmatmul.f32.gmra.mxu0 %v1778
      %v1908 = vpop.f32.mrf.mxu0
      %v1909 = vadd.f32 %v1844, %v1908
      %1910 = vmatmul.f32.gmra.mxu0 %v1782
      %v1911 = vpop.f32.mrf.mxu0
      %v1912 = vadd.f32 %v1847, %v1911
      %1913 = vmatmul.f32.gmra.mxu0 %v1786
      %v1914 = vpop.f32.mrf.mxu0
      %v1915 = vadd.f32 %v1850, %v1914
      %1916 = vdwg.mxu0
      %v1917 = vrcp.pop %v1870
      %v1918 = vmul.f32 %v1870, %v1917
      %v1919 = vsub.f32 1.0, %v1918
      %v1920 = vmul.f32 %v1917, %v1919
      %v1921 = vadd.f32 %v1917, %v1920
      %vm1922 = vweird.f32 %v1870
      %vm1923 = vweird.f32 %v1917
      %vm1924 = vmor %vm1922, %vm1923
      %v1925 = vsel %vm1924, %v1917, %v1921
      %v1926 = vand.u32 2147483647, %v1870
      %vm1927 = vcmp.eq.f32.partialorder %v1926, 8.507059e+37
      %v1928 = vand.u32 %v1870, 2147483648
      %v1929 = vor.u32 1.1754944e-38, %v1928
      %v1930 = vsel %vm1927, %v1929, %v1925
      %v1931 = vmul.f32 1.0, %v1930
      %v1932 = vrcp.pop %v1873
      %v1933 = vmul.f32 %v1873, %v1932
      %v1934 = vsub.f32 1.0, %v1933
      %v1935 = vmul.f32 %v1932, %v1934
      %v1936 = vadd.f32 %v1932, %v1935
      %vm1937 = vweird.f32 %v1873
      %vm1938 = vweird.f32 %v1932
      %vm1939 = vmor %vm1937, %vm1938
      %v1940 = vsel %vm1939, %v1932, %v1936
      %v1941 = vand.u32 2147483647, %v1873
      %vm1942 = vcmp.eq.f32.partialorder %v1941, 8.507059e+37
      %v1943 = vand.u32 %v1873, 2147483648
      %v1944 = vor.u32 1.1754944e-38, %v1943
      %v1945 = vsel %vm1942, %v1944, %v1940
      %v1946 = vmul.f32 1.0, %v1945
      %v1947 = vrcp.pop %v1876
      %v1948 = vmul.f32 %v1876, %v1947
      %v1949 = vsub.f32 1.0, %v1948
      %v1950 = vmul.f32 %v1947, %v1949
      %v1951 = vadd.f32 %v1947, %v1950
      %vm1952 = vweird.f32 %v1876
      %vm1953 = vweird.f32 %v1947
      %vm1954 = vmor %vm1952, %vm1953
      %v1955 = vsel %vm1954, %v1947, %v1951
      %v1956 = vand.u32 2147483647, %v1876
      %vm1957 = vcmp.eq.f32.partialorder %v1956, 8.507059e+37
      %v1958 = vand.u32 %v1876, 2147483648
      %v1959 = vor.u32 1.1754944e-38, %v1958
      %v1960 = vsel %vm1957, %v1959, %v1955
      %v1961 = vmul.f32 1.0, %v1960
      %v1962 = vrcp.pop %v1879
      %v1963 = vmul.f32 %v1879, %v1962
      %v1964 = vsub.f32 1.0, %v1963
      %v1965 = vmul.f32 %v1962, %v1964
      %v1966 = vadd.f32 %v1962, %v1965
      %vm1967 = vweird.f32 %v1879
      %vm1968 = vweird.f32 %v1962
      %vm1969 = vmor %vm1967, %vm1968
      %v1970 = vsel %vm1969, %v1962, %v1966
      %v1971 = vand.u32 2147483647, %v1879
      %vm1972 = vcmp.eq.f32.partialorder %v1971, 8.507059e+37
      %v1973 = vand.u32 %v1879, 2147483648
      %v1974 = vor.u32 1.1754944e-38, %v1973
      %v1975 = vsel %vm1972, %v1974, %v1970
      %v1976 = vmul.f32 1.0, %v1975
      %v1977 = vrcp.pop %v1882
      %v1978 = vmul.f32 %v1882, %v1977
      %v1979 = vsub.f32 1.0, %v1978
      %v1980 = vmul.f32 %v1977, %v1979
      %v1981 = vadd.f32 %v1977, %v1980
      %vm1982 = vweird.f32 %v1882
      %vm1983 = vweird.f32 %v1977
      %vm1984 = vmor %vm1982, %vm1983
      %v1985 = vsel %vm1984, %v1977, %v1981
      %v1986 = vand.u32 2147483647, %v1882
      %vm1987 = vcmp.eq.f32.partialorder %v1986, 8.507059e+37
      %v1988 = vand.u32 %v1882, 2147483648
      %v1989 = vor.u32 1.1754944e-38, %v1988
      %v1990 = vsel %vm1987, %v1989, %v1985
      %v1991 = vmul.f32 1.0, %v1990
      %v1992 = vrcp.pop %v1885
      %v1993 = vmul.f32 %v1885, %v1992
      %v1994 = vsub.f32 1.0, %v1993
      %v1995 = vmul.f32 %v1992, %v1994
      %v1996 = vadd.f32 %v1992, %v1995
      %vm1997 = vweird.f32 %v1885
      %vm1998 = vweird.f32 %v1992
      %vm1999 = vmor %vm1997, %vm1998
      %v2000 = vsel %vm1999, %v1992, %v1996
      %v2001 = vand.u32 2147483647, %v1885
      %vm2002 = vcmp.eq.f32.partialorder %v2001, 8.507059e+37
      %v2003 = vand.u32 %v1885, 2147483648
      %v2004 = vor.u32 1.1754944e-38, %v2003
      %v2005 = vsel %vm2002, %v2004, %v2000
      %v2006 = vmul.f32 1.0, %v2005
      %v2007 = vrcp.pop %v1888
      %v2008 = vmul.f32 %v1888, %v2007
      %v2009 = vsub.f32 1.0, %v2008
      %v2010 = vmul.f32 %v2007, %v2009
      %v2011 = vadd.f32 %v2007, %v2010
      %vm2012 = vweird.f32 %v1888
      %vm2013 = vweird.f32 %v2007
      %vm2014 = vmor %vm2012, %vm2013
      %v2015 = vsel %vm2014, %v2007, %v2011
      %v2016 = vand.u32 2147483647, %v1888
      %vm2017 = vcmp.eq.f32.partialorder %v2016, 8.507059e+37
      %v2018 = vand.u32 %v1888, 2147483648
      %v2019 = vor.u32 1.1754944e-38, %v2018
      %v2020 = vsel %vm2017, %v2019, %v2015
      %v2021 = vmul.f32 1.0, %v2020
      %v2022 = vrcp.pop %v1891
      %v2023 = vmul.f32 %v1891, %v2022
      %v2024 = vsub.f32 1.0, %v2023
      %v2025 = vmul.f32 %v2022, %v2024
      %v2026 = vadd.f32 %v2022, %v2025
      %vm2027 = vweird.f32 %v1891
      %vm2028 = vweird.f32 %v2022
      %vm2029 = vmor %vm2027, %vm2028
      %v2030 = vsel %vm2029, %v2022, %v2026
      %v2031 = vand.u32 2147483647, %v1891
      %vm2032 = vcmp.eq.f32.partialorder %v2031, 8.507059e+37
      %v2033 = vand.u32 %v1891, 2147483648
      %v2034 = vor.u32 1.1754944e-38, %v2033
      %v2035 = vsel %vm2032, %v2034, %v2030
      %v2036 = vmul.f32 1.0, %v2035
      %v2037 = vrcp.pop %v1894
      %v2038 = vmul.f32 %v1894, %v2037
      %v2039 = vsub.f32 1.0, %v2038
      %v2040 = vmul.f32 %v2037, %v2039
      %v2041 = vadd.f32 %v2037, %v2040
      %vm2042 = vweird.f32 %v1894
      %vm2043 = vweird.f32 %v2037
      %vm2044 = vmor %vm2042, %vm2043
      %v2045 = vsel %vm2044, %v2037, %v2041
      %v2046 = vand.u32 2147483647, %v1894
      %vm2047 = vcmp.eq.f32.partialorder %v2046, 8.507059e+37
      %v2048 = vand.u32 %v1894, 2147483648
      %v2049 = vor.u32 1.1754944e-38, %v2048
      %v2050 = vsel %vm2047, %v2049, %v2045
      %v2051 = vmul.f32 1.0, %v2050
      %v2052 = vrcp.pop %v1897
      %v2053 = vmul.f32 %v1897, %v2052
      %v2054 = vsub.f32 1.0, %v2053
      %v2055 = vmul.f32 %v2052, %v2054
      %v2056 = vadd.f32 %v2052, %v2055
      %vm2057 = vweird.f32 %v1897
      %vm2058 = vweird.f32 %v2052
      %vm2059 = vmor %vm2057, %vm2058
      %v2060 = vsel %vm2059, %v2052, %v2056
      %v2061 = vand.u32 2147483647, %v1897
      %vm2062 = vcmp.eq.f32.partialorder %v2061, 8.507059e+37
      %v2063 = vand.u32 %v1897, 2147483648
      %v2064 = vor.u32 1.1754944e-38, %v2063
      %v2065 = vsel %vm2062, %v2064, %v2060
      %v2066 = vmul.f32 1.0, %v2065
      %v2067 = vrcp.pop %v1900
      %v2068 = vmul.f32 %v1900, %v2067
      %v2069 = vsub.f32 1.0, %v2068
      %v2070 = vmul.f32 %v2067, %v2069
      %v2071 = vadd.f32 %v2067, %v2070
      %vm2072 = vweird.f32 %v1900
      %vm2073 = vweird.f32 %v2067
      %vm2074 = vmor %vm2072, %vm2073
      %v2075 = vsel %vm2074, %v2067, %v2071
      %v2076 = vand.u32 2147483647, %v1900
      %vm2077 = vcmp.eq.f32.partialorder %v2076, 8.507059e+37
      %v2078 = vand.u32 %v1900, 2147483648
      %v2079 = vor.u32 1.1754944e-38, %v2078
      %v2080 = vsel %vm2077, %v2079, %v2075
      %v2081 = vmul.f32 1.0, %v2080
      %v2082 = vrcp.pop %v1903
      %v2083 = vmul.f32 %v1903, %v2082
      %v2084 = vsub.f32 1.0, %v2083
      %v2085 = vmul.f32 %v2082, %v2084
      %v2086 = vadd.f32 %v2082, %v2085
      %vm2087 = vweird.f32 %v1903
      %vm2088 = vweird.f32 %v2082
      %vm2089 = vmor %vm2087, %vm2088
      %v2090 = vsel %vm2089, %v2082, %v2086
      %v2091 = vand.u32 2147483647, %v1903
      %vm2092 = vcmp.eq.f32.partialorder %v2091, 8.507059e+37
      %v2093 = vand.u32 %v1903, 2147483648
      %v2094 = vor.u32 1.1754944e-38, %v2093
      %v2095 = vsel %vm2092, %v2094, %v2090
      %v2096 = vmul.f32 1.0, %v2095
      %v2097 = vrcp.pop %v1906
      %v2098 = vmul.f32 %v1906, %v2097
      %v2099 = vsub.f32 1.0, %v2098
      %v2100 = vmul.f32 %v2097, %v2099
      %v2101 = vadd.f32 %v2097, %v2100
      %vm2102 = vweird.f32 %v1906
      %vm2103 = vweird.f32 %v2097
      %vm2104 = vmor %vm2102, %vm2103
      %v2105 = vsel %vm2104, %v2097, %v2101
      %v2106 = vand.u32 2147483647, %v1906
      %vm2107 = vcmp.eq.f32.partialorder %v2106, 8.507059e+37
      %v2108 = vand.u32 %v1906, 2147483648
      %v2109 = vor.u32 1.1754944e-38, %v2108
      %v2110 = vsel %vm2107, %v2109, %v2105
      %v2111 = vmul.f32 1.0, %v2110
      %v2112 = vrcp.pop %v1909
      %v2113 = vmul.f32 %v1909, %v2112
      %v2114 = vsub.f32 1.0, %v2113
      %v2115 = vmul.f32 %v2112, %v2114
      %v2116 = vadd.f32 %v2112, %v2115
      %vm2117 = vweird.f32 %v1909
      %vm2118 = vweird.f32 %v2112
      %vm2119 = vmor %vm2117, %vm2118
      %v2120 = vsel %vm2119, %v2112, %v2116
      %v2121 = vand.u32 2147483647, %v1909
      %vm2122 = vcmp.eq.f32.partialorder %v2121, 8.507059e+37
      %v2123 = vand.u32 %v1909, 2147483648
      %v2124 = vor.u32 1.1754944e-38, %v2123
      %v2125 = vsel %vm2122, %v2124, %v2120
      %v2126 = vmul.f32 1.0, %v2125
      %v2127 = vrcp.pop %v1912
      %v2128 = vmul.f32 %v1912, %v2127
      %v2129 = vsub.f32 1.0, %v2128
      %v2130 = vmul.f32 %v2127, %v2129
      %v2131 = vadd.f32 %v2127, %v2130
      %vm2132 = vweird.f32 %v1912
      %vm2133 = vweird.f32 %v2127
      %vm2134 = vmor %vm2132, %vm2133
      %v2135 = vsel %vm2134, %v2127, %v2131
      %v2136 = vand.u32 2147483647, %v1912
      %vm2137 = vcmp.eq.f32.partialorder %v2136, 8.507059e+37
      %v2138 = vand.u32 %v1912, 2147483648
      %v2139 = vor.u32 1.1754944e-38, %v2138
      %v2140 = vsel %vm2137, %v2139, %v2135
      %v2141 = vmul.f32 1.0, %v2140
      %v2142 = vrcp.pop %v1915
      %v2143 = vmul.f32 %v1915, %v2142
      %v2144 = vsub.f32 1.0, %v2143
      %v2145 = vmul.f32 %v2142, %v2144
      %v2146 = vadd.f32 %v2142, %v2145
      %vm2147 = vweird.f32 %v1915
      %vm2148 = vweird.f32 %v2142
      %vm2149 = vmor %vm2147, %vm2148
      %v2150 = vsel %vm2149, %v2142, %v2146
      %v2151 = vand.u32 2147483647, %v1915
      %vm2152 = vcmp.eq.f32.partialorder %v2151, 8.507059e+37
      %v2153 = vand.u32 %v1915, 2147483648
      %v2154 = vor.u32 1.1754944e-38, %v2153
      %v2155 = vsel %vm2152, %v2154, %v2150
      %v2156 = vmul.f32 1.0, %v2155
      %2158 = vset.pattern.permute.xlu0 0
      %2159 = vperm.xlu0 %2158, %v1931
      %v2160 = vpop.permute.xlu0 %2159
      %2163 = vset.pattern.permute.xlu0 0
      %2164 = vperm.xlu0 %2163, %v1946
      %v2165 = vpop.permute.xlu0 %2164
      %2168 = vset.pattern.permute.xlu0 0
      %2169 = vperm.xlu0 %2168, %v1961
      %v2170 = vpop.permute.xlu0 %2169
      %2173 = vset.pattern.permute.xlu0 0
      %2174 = vperm.xlu0 %2173, %v1976
      %v2175 = vpop.permute.xlu0 %2174
      %2178 = vset.pattern.permute.xlu0 0
      %2179 = vperm.xlu0 %2178, %v1991
      %v2180 = vpop.permute.xlu0 %2179
      %2183 = vset.pattern.permute.xlu0 0
      %2184 = vperm.xlu0 %2183, %v2006
      %v2185 = vpop.permute.xlu0 %2184
      %2188 = vset.pattern.permute.xlu0 0
      %2189 = vperm.xlu0 %2188, %v2021
      %v2190 = vpop.permute.xlu0 %2189
      %2193 = vset.pattern.permute.xlu0 0
      %2194 = vperm.xlu0 %2193, %v2036
      %v2195 = vpop.permute.xlu0 %2194
      %2198 = vset.pattern.permute.xlu0 0
      %2199 = vperm.xlu0 %2198, %v2051
      %v2200 = vpop.permute.xlu0 %2199
      %2203 = vset.pattern.permute.xlu0 0
      %2204 = vperm.xlu0 %2203, %v2066
      %v2205 = vpop.permute.xlu0 %2204
      %2208 = vset.pattern.permute.xlu0 0
      %2209 = vperm.xlu0 %2208, %v2081
      %v2210 = vpop.permute.xlu0 %2209
      %2213 = vset.pattern.permute.xlu0 0
      %2214 = vperm.xlu0 %2213, %v2096
      %v2215 = vpop.permute.xlu0 %2214
      %2218 = vset.pattern.permute.xlu0 0
      %2219 = vperm.xlu0 %2218, %v2111
      %v2220 = vpop.permute.xlu0 %2219
      %2223 = vset.pattern.permute.xlu0 0
      %2224 = vperm.xlu0 %2223, %v2126
      %v2225 = vpop.permute.xlu0 %2224
      %2228 = vset.pattern.permute.xlu0 0
      %2229 = vperm.xlu0 %2228, %v2141
      %v2230 = vpop.permute.xlu0 %2229
      %2233 = vset.pattern.permute.xlu0 0
      %2234 = vperm.xlu0 %2233, %v2156
      %v2235 = vpop.permute.xlu0 %2234
      %v2237 = vmul.f32 %v1870, %v2160
      %v2238 = vmul.f32 %v1873, %v2165
      %v2239 = vmul.f32 %v1876, %v2170
      %v2240 = vmul.f32 %v1879, %v2175
      %v2241 = vmul.f32 %v1882, %v2180
      %v2242 = vmul.f32 %v1885, %v2185
      %v2243 = vmul.f32 %v1888, %v2190
      %v2244 = vmul.f32 %v1891, %v2195
      %v2245 = vmul.f32 %v1894, %v2200
      %v2246 = vmul.f32 %v1897, %v2205
      %v2247 = vmul.f32 %v1900, %v2210
      %v2248 = vmul.f32 %v1903, %v2215
      %v2249 = vmul.f32 %v1906, %v2220
      %v2250 = vmul.f32 %v1909, %v2225
      %v2251 = vmul.f32 %v1912, %v2230
      %v2252 = vmul.f32 %v1915, %v2235
      %2269 = vrot.lane.b32.xlu0 %v1257, 1
      %v2270 = vpop.permute.xlu0 %2269
      %2271 = vrot.lane.b32.xlu0 %v1260, 1
      %v2272 = vpop.permute.xlu0 %2271
      %2273 = vrot.lane.b32.xlu0 %v1263, 1
      %v2274 = vpop.permute.xlu0 %2273
      %2275 = vrot.lane.b32.xlu0 %v1266, 1
      %v2276 = vpop.permute.xlu0 %2275
      %2277 = vrot.lane.b32.xlu0 %v1269, 1
      %v2278 = vpop.permute.xlu0 %2277
      %2279 = vrot.lane.b32.xlu0 %v1272, 1
      %v2280 = vpop.permute.xlu0 %2279
      %2281 = vrot.lane.b32.xlu0 %v1275, 1
      %v2282 = vpop.permute.xlu0 %2281
      %2283 = vrot.lane.b32.xlu0 %v1278, 1
      %v2284 = vpop.permute.xlu0 %2283
      %2285 = vrot.lane.b32.xlu0 %v1281, 1
      %v2286 = vpop.permute.xlu0 %2285
      %2287 = vrot.lane.b32.xlu0 %v1284, 1
      %v2288 = vpop.permute.xlu0 %2287
      %2289 = vrot.lane.b32.xlu0 %v1287, 1
      %v2290 = vpop.permute.xlu0 %2289
      %2291 = vrot.lane.b32.xlu0 %v1290, 1
      %v2292 = vpop.permute.xlu0 %2291
      %2293 = vrot.lane.b32.xlu0 %v1293, 1
      %v2294 = vpop.permute.xlu0 %2293
      %2295 = vrot.lane.b32.xlu0 %v1296, 1
      %v2296 = vpop.permute.xlu0 %2295
      %2297 = vrot.lane.b32.xlu0 %v1299, 1
      %v2298 = vpop.permute.xlu0 %2297
      %2299 = vrot.lane.b32.xlu0 %v1302, 1
      %v2300 = vpop.permute.xlu0 %2299
      %v2317 = vadd.f32 %v2237, %v2270
      %v2318 = vadd.f32 %v2238, %v2272
      %v2319 = vadd.f32 %v2239, %v2274
      %v2320 = vadd.f32 %v2240, %v2276
      %v2321 = vadd.f32 %v2241, %v2278
      %v2322 = vadd.f32 %v2242, %v2280
      %v2323 = vadd.f32 %v2243, %v2282
      %v2324 = vadd.f32 %v2244, %v2284
      %v2325 = vadd.f32 %v2245, %v2286
      %v2326 = vadd.f32 %v2246, %v2288
      %v2327 = vadd.f32 %v2247, %v2290
      %v2328 = vadd.f32 %v2248, %v2292
      %v2329 = vadd.f32 %v2249, %v2294
      %v2330 = vadd.f32 %v2250, %v2296
      %v2331 = vadd.f32 %v2251, %v2298
      %v2332 = vadd.f32 %v2252, %v2300
      %v2334 = vperm.slane %v400, 0
      %2335 = vrot.lane.b32.xlu0 %v2334, 1
      %v2336 = vpop.permute.xlu0 %2335
      %v2338 = vadd.f32 %v2317, %v2336
      %v2339 = vadd.f32 %v2318, %v2336
      %v2340 = vadd.f32 %v2319, %v2336
      %v2341 = vadd.f32 %v2320, %v2336
      %v2342 = vadd.f32 %v2321, %v2336
      %v2343 = vadd.f32 %v2322, %v2336
      %v2344 = vadd.f32 %v2323, %v2336
      %v2345 = vadd.f32 %v2324, %v2336
      %v2346 = vadd.f32 %v2325, %v2336
      %v2347 = vadd.f32 %v2326, %v2336
      %v2348 = vadd.f32 %v2327, %v2336
      %v2349 = vadd.f32 %v2328, %v2336
      %v2350 = vadd.f32 %v2329, %v2336
      %v2351 = vadd.f32 %v2330, %v2336
      %v2352 = vadd.f32 %v2331, %v2336
      %v2353 = vadd.f32 %v2332, %v2336
      %vm2354 = vcmp.gt.f32.partialorder %v2338, 0.0
      %vm2355 = vcmp.gt.f32.partialorder %v2339, 0.0
      %vm2356 = vcmp.gt.f32.partialorder %v2340, 0.0
      %vm2357 = vcmp.gt.f32.partialorder %v2341, 0.0
      %vm2358 = vcmp.gt.f32.partialorder %v2342, 0.0
      %vm2359 = vcmp.gt.f32.partialorder %v2343, 0.0
      %vm2360 = vcmp.gt.f32.partialorder %v2344, 0.0
      %vm2361 = vcmp.gt.f32.partialorder %v2345, 0.0
      %vm2362 = vcmp.gt.f32.partialorder %v2346, 0.0
      %vm2363 = vcmp.gt.f32.partialorder %v2347, 0.0
      %vm2364 = vcmp.gt.f32.partialorder %v2348, 0.0
      %vm2365 = vcmp.gt.f32.partialorder %v2349, 0.0
      %vm2366 = vcmp.gt.f32.partialorder %v2350, 0.0
      %vm2367 = vcmp.gt.f32.partialorder %v2351, 0.0
      %vm2368 = vcmp.gt.f32.partialorder %v2352, 0.0
      %vm2369 = vcmp.gt.f32.partialorder %v2353, 0.0
      %v2370 = vmul.f32 %v2338, 1.442695
      %v2371 = vpow.pop %v2370
      %v2372 = vmul.f32 %v2339, 1.442695
      %v2373 = vpow.pop %v2372
      %v2374 = vmul.f32 %v2340, 1.442695
      %v2375 = vpow.pop %v2374
      %v2376 = vmul.f32 %v2341, 1.442695
      %v2377 = vpow.pop %v2376
      %v2378 = vmul.f32 %v2342, 1.442695
      %v2379 = vpow.pop %v2378
      %v2380 = vmul.f32 %v2343, 1.442695
      %v2381 = vpow.pop %v2380
      %v2382 = vmul.f32 %v2344, 1.442695
      %v2383 = vpow.pop %v2382
      %v2384 = vmul.f32 %v2345, 1.442695
      %v2385 = vpow.pop %v2384
      %v2386 = vmul.f32 %v2346, 1.442695
      %v2387 = vpow.pop %v2386
      %v2388 = vmul.f32 %v2347, 1.442695
      %v2389 = vpow.pop %v2388
      %v2390 = vmul.f32 %v2348, 1.442695
      %v2391 = vpow.pop %v2390
      %v2392 = vmul.f32 %v2349, 1.442695
      %v2393 = vpow.pop %v2392
      %v2394 = vmul.f32 %v2350, 1.442695
      %v2395 = vpow.pop %v2394
      %v2396 = vmul.f32 %v2351, 1.442695
      %v2397 = vpow.pop %v2396
      %v2398 = vmul.f32 %v2352, 1.442695
      %v2399 = vpow.pop %v2398
      %v2400 = vmul.f32 %v2353, 1.442695
      %v2401 = vpow.pop %v2400
      %v2402 = vsub.f32 %v2371, 1.0
      %v2403 = vsub.f32 %v2373, 1.0
      %v2404 = vsub.f32 %v2375, 1.0
      %v2405 = vsub.f32 %v2377, 1.0
      %v2406 = vsub.f32 %v2379, 1.0
      %v2407 = vsub.f32 %v2381, 1.0
      %v2408 = vsub.f32 %v2383, 1.0
      %v2409 = vsub.f32 %v2385, 1.0
      %v2410 = vsub.f32 %v2387, 1.0
      %v2411 = vsub.f32 %v2389, 1.0
      %v2412 = vsub.f32 %v2391, 1.0
      %v2413 = vsub.f32 %v2393, 1.0
      %v2414 = vsub.f32 %v2395, 1.0
      %v2415 = vsub.f32 %v2397, 1.0
      %v2416 = vsub.f32 %v2399, 1.0
      %v2417 = vsub.f32 %v2401, 1.0
      %v2418 = vsel %vm2354, %v2338, %v2402
      %v2419 = vsel %vm2355, %v2339, %v2403
      %v2420 = vsel %vm2356, %v2340, %v2404
      %v2421 = vsel %vm2357, %v2341, %v2405
      %v2422 = vsel %vm2358, %v2342, %v2406
      %v2423 = vsel %vm2359, %v2343, %v2407
      %v2424 = vsel %vm2360, %v2344, %v2408
      %v2425 = vsel %vm2361, %v2345, %v2409
      %v2426 = vsel %vm2362, %v2346, %v2410
      %v2427 = vsel %vm2363, %v2347, %v2411
      %v2428 = vsel %vm2364, %v2348, %v2412
      %v2429 = vsel %vm2365, %v2349, %v2413
      %v2430 = vsel %vm2366, %v2350, %v2414
      %v2431 = vsel %vm2367, %v2351, %v2415
      %v2432 = vsel %vm2368, %v2352, %v2416
      %v2433 = vsel %vm2369, %v2353, %v2417
      %2434 = vrot.lane.b32.xlu0 %v516, 117
      %v2435 = vpop.permute.xlu0 %2434
      %2436 = vrot.lane.b32.xlu0 %v519, 117
      %v2437 = vpop.permute.xlu0 %2436
      %2438 = vrot.lane.b32.xlu0 %v522, 117
      %v2439 = vpop.permute.xlu0 %2438
      %2440 = vrot.lane.b32.xlu0 %v525, 117
      %v2441 = vpop.permute.xlu0 %2440
      %2442 = vrot.lane.b32.xlu0 %v528, 117
      %v2443 = vpop.permute.xlu0 %2442
      %2444 = vrot.lane.b32.xlu0 %v531, 117
      %v2445 = vpop.permute.xlu0 %2444
      %2446 = vrot.lane.b32.xlu0 %v534, 117
      %v2447 = vpop.permute.xlu0 %2446
      %2448 = vrot.lane.b32.xlu0 %v537, 117
      %v2449 = vpop.permute.xlu0 %2448
      %2450 = vrot.lane.b32.xlu0 %v540, 117
      %v2451 = vpop.permute.xlu0 %2450
      %2452 = vrot.lane.b32.xlu0 %v543, 117
      %v2453 = vpop.permute.xlu0 %2452
      %2454 = vrot.lane.b32.xlu0 %v546, 117
      %v2455 = vpop.permute.xlu0 %2454
      %2456 = vrot.lane.b32.xlu0 %v549, 117
      %v2457 = vpop.permute.xlu0 %2456
      %2458 = vrot.lane.b32.xlu0 %v552, 117
      %v2459 = vpop.permute.xlu0 %2458
      %2460 = vrot.lane.b32.xlu0 %v555, 117
      %v2461 = vpop.permute.xlu0 %2460
      %2462 = vrot.lane.b32.xlu0 %v558, 117
      %v2463 = vpop.permute.xlu0 %2462
      %2464 = vrot.lane.b32.xlu0 %v561, 117
      %v2465 = vpop.permute.xlu0 %2464
      %2466 = vrot.lane.b32.xlu0 %v564, 117
      %v2467 = vpop.permute.xlu0 %2466
      %2468 = vrot.lane.b32.xlu0 %v567, 117
      %v2469 = vpop.permute.xlu0 %2468
      %2470 = vrot.lane.b32.xlu0 %v570, 117
      %v2471 = vpop.permute.xlu0 %2470
      %2472 = vrot.lane.b32.xlu0 %v573, 117
      %v2473 = vpop.permute.xlu0 %2472
      %2474 = vrot.lane.b32.xlu0 %v576, 117
      %v2475 = vpop.permute.xlu0 %2474
      %2476 = vrot.lane.b32.xlu0 %v579, 117
      %v2477 = vpop.permute.xlu0 %2476
      %2478 = vrot.lane.b32.xlu0 %v582, 117
      %v2479 = vpop.permute.xlu0 %2478
      %2480 = vrot.lane.b32.xlu0 %v585, 117
      %v2481 = vpop.permute.xlu0 %2480
      %2482 = vrot.lane.b32.xlu0 %v588, 117
      %v2483 = vpop.permute.xlu0 %2482
      %2484 = vrot.lane.b32.xlu0 %v591, 117
      %v2485 = vpop.permute.xlu0 %2484
      %2486 = vrot.lane.b32.xlu0 %v594, 117
      %v2487 = vpop.permute.xlu0 %2486
      %2488 = vrot.lane.b32.xlu0 %v597, 117
      %v2489 = vpop.permute.xlu0 %2488
      %2490 = vrot.lane.b32.xlu0 %v600, 117
      %v2491 = vpop.permute.xlu0 %2490
      %2492 = vrot.lane.b32.xlu0 %v603, 117
      %v2493 = vpop.permute.xlu0 %2492
      %2494 = vrot.lane.b32.xlu0 %v606, 117
      %v2495 = vpop.permute.xlu0 %2494
      %2496 = vrot.lane.b32.xlu0 %v609, 117
      %v2497 = vpop.permute.xlu0 %2496
      %v2530 = vsel %vm1400, 1.0, %v2435
      %v2531 = vsel %vm1400, 1.0, %v2437
      %v2532 = vsel %vm1400, 1.0, %v2439
      %v2533 = vsel %vm1400, 1.0, %v2441
      %v2534 = vsel %vm1400, 1.0, %v2443
      %v2535 = vsel %vm1400, 1.0, %v2445
      %v2536 = vsel %vm1400, 1.0, %v2447
      %v2537 = vsel %vm1400, 1.0, %v2449
      %v2538 = vsel %vm1400, 1.0, %v2451
      %v2539 = vsel %vm1400, 1.0, %v2453
      %v2540 = vsel %vm1400, 1.0, %v2455
      %v2541 = vsel %vm1400, 1.0, %v2457
      %v2542 = vsel %vm1400, 1.0, %v2459
      %v2543 = vsel %vm1400, 1.0, %v2461
      %v2544 = vsel %vm1400, 1.0, %v2463
      %v2545 = vsel %vm1400, 1.0, %v2465
      %v2546 = vsel %vm1400, 1.0, %v2467
      %v2547 = vsel %vm1400, 1.0, %v2469
      %v2548 = vsel %vm1400, 1.0, %v2471
      %v2549 = vsel %vm1400, 1.0, %v2473
      %v2550 = vsel %vm1400, 1.0, %v2475
      %v2551 = vsel %vm1400, 1.0, %v2477
      %v2552 = vsel %vm1400, 1.0, %v2479
      %v2553 = vsel %vm1400, 1.0, %v2481
      %v2554 = vsel %vm1400, 1.0, %v2483
      %v2555 = vsel %vm1400, 1.0, %v2485
      %v2556 = vsel %vm1400, 1.0, %v2487
      %v2557 = vsel %vm1400, 1.0, %v2489
      %v2558 = vsel %vm1400, 1.0, %v2491
      %v2559 = vsel %vm1400, 1.0, %v2493
      %v2560 = vsel %vm1400, 1.0, %v2495
      %v2561 = vsel %vm1400, 1.0, %v2497
      %2562 = vset.pattern.permute.xlu0 1
      %2563 = vperm.xlu0 %2562, %v1064
      %v2564 = vpop.permute.xlu0 %2563
      %2566 = vset.pattern.permute.xlu0 1
      %2567 = vperm.xlu0 %2566, %v1067
      %v2568 = vpop.permute.xlu0 %2567
      %2570 = vset.pattern.permute.xlu0 1
      %2571 = vperm.xlu0 %2570, %v1070
      %v2572 = vpop.permute.xlu0 %2571
      %2574 = vset.pattern.permute.xlu0 1
      %2575 = vperm.xlu0 %2574, %v1073
      %v2576 = vpop.permute.xlu0 %2575
      %2578 = vset.pattern.permute.xlu0 1
      %2579 = vperm.xlu0 %2578, %v1076
      %v2580 = vpop.permute.xlu0 %2579
      %2582 = vset.pattern.permute.xlu0 1
      %2583 = vperm.xlu0 %2582, %v1079
      %v2584 = vpop.permute.xlu0 %2583
      %2586 = vset.pattern.permute.xlu0 1
      %2587 = vperm.xlu0 %2586, %v1082
      %v2588 = vpop.permute.xlu0 %2587
      %2590 = vset.pattern.permute.xlu0 1
      %2591 = vperm.xlu0 %2590, %v1085
      %v2592 = vpop.permute.xlu0 %2591
      %2594 = vset.pattern.permute.xlu0 1
      %2595 = vperm.xlu0 %2594, %v1088
      %v2596 = vpop.permute.xlu0 %2595
      %2598 = vset.pattern.permute.xlu0 1
      %2599 = vperm.xlu0 %2598, %v1091
      %v2600 = vpop.permute.xlu0 %2599
      %2602 = vset.pattern.permute.xlu0 1
      %2603 = vperm.xlu0 %2602, %v1094
      %v2604 = vpop.permute.xlu0 %2603
      %2606 = vset.pattern.permute.xlu0 1
      %2607 = vperm.xlu0 %2606, %v1097
      %v2608 = vpop.permute.xlu0 %2607
      %2610 = vset.pattern.permute.xlu0 1
      %2611 = vperm.xlu0 %2610, %v1100
      %v2612 = vpop.permute.xlu0 %2611
      %2614 = vset.pattern.permute.xlu0 1
      %2615 = vperm.xlu0 %2614, %v1103
      %v2616 = vpop.permute.xlu0 %2615
      %2618 = vset.pattern.permute.xlu0 1
      %2619 = vperm.xlu0 %2618, %v1106
      %v2620 = vpop.permute.xlu0 %2619
      %2622 = vset.pattern.permute.xlu0 1
      %2623 = vperm.xlu0 %2622, %v1109
      %v2624 = vpop.permute.xlu0 %2623
      %v2626 = vperm.slane %v950, 1
      %v2627 = vperm.slane %v982, 1
      %v2628 = vadd.f32 %v2564, %v2626
      %v2629 = vadd.f32 %v2564, %v2627
      %v2630 = vadd.f32 %v2568, %v2626
      %v2631 = vadd.f32 %v2568, %v2627
      %v2632 = vadd.f32 %v2572, %v2626
      %v2633 = vadd.f32 %v2572, %v2627
      %v2634 = vadd.f32 %v2576, %v2626
      %v2635 = vadd.f32 %v2576, %v2627
      %v2636 = vadd.f32 %v2580, %v2626
      %v2637 = vadd.f32 %v2580, %v2627
      %v2638 = vadd.f32 %v2584, %v2626
      %v2639 = vadd.f32 %v2584, %v2627
      %v2640 = vadd.f32 %v2588, %v2626
      %v2641 = vadd.f32 %v2588, %v2627
      %v2642 = vadd.f32 %v2592, %v2626
      %v2643 = vadd.f32 %v2592, %v2627
      %v2644 = vadd.f32 %v2596, %v2626
      %v2645 = vadd.f32 %v2596, %v2627
      %v2646 = vadd.f32 %v2600, %v2626
      %v2647 = vadd.f32 %v2600, %v2627
      %v2648 = vadd.f32 %v2604, %v2626
      %v2649 = vadd.f32 %v2604, %v2627
      %v2650 = vadd.f32 %v2608, %v2626
      %v2651 = vadd.f32 %v2608, %v2627
      %v2652 = vadd.f32 %v2612, %v2626
      %v2653 = vadd.f32 %v2612, %v2627
      %v2654 = vadd.f32 %v2616, %v2626
      %v2655 = vadd.f32 %v2616, %v2627
      %v2656 = vadd.f32 %v2620, %v2626
      %v2657 = vadd.f32 %v2620, %v2627
      %v2658 = vadd.f32 %v2624, %v2626
      %v2659 = vadd.f32 %v2624, %v2627
      %v2660 = vmul.f32 %v2628, 0.2
      %v2661 = vmul.f32 %v2629, 0.2
      %v2662 = vmul.f32 %v2630, 0.2
      %v2663 = vmul.f32 %v2631, 0.2
      %v2664 = vmul.f32 %v2632, 0.2
      %v2665 = vmul.f32 %v2633, 0.2
      %v2666 = vmul.f32 %v2634, 0.2
      %v2667 = vmul.f32 %v2635, 0.2
      %v2668 = vmul.f32 %v2636, 0.2
      %v2669 = vmul.f32 %v2637, 0.2
      %v2670 = vmul.f32 %v2638, 0.2
      %v2671 = vmul.f32 %v2639, 0.2
      %v2672 = vmul.f32 %v2640, 0.2
      %v2673 = vmul.f32 %v2641, 0.2
      %v2674 = vmul.f32 %v2642, 0.2
      %v2675 = vmul.f32 %v2643, 0.2
      %v2676 = vmul.f32 %v2644, 0.2
      %v2677 = vmul.f32 %v2645, 0.2
      %v2678 = vmul.f32 %v2646, 0.2
      %v2679 = vmul.f32 %v2647, 0.2
      %v2680 = vmul.f32 %v2648, 0.2
      %v2681 = vmul.f32 %v2649, 0.2
      %v2682 = vmul.f32 %v2650, 0.2
      %v2683 = vmul.f32 %v2651, 0.2
      %v2684 = vmul.f32 %v2652, 0.2
      %v2685 = vmul.f32 %v2653, 0.2
      %v2686 = vmul.f32 %v2654, 0.2
      %v2687 = vmul.f32 %v2655, 0.2
      %v2688 = vmul.f32 %v2656, 0.2
      %v2689 = vmul.f32 %v2657, 0.2
      %v2690 = vmul.f32 %v2658, 0.2
      %v2691 = vmul.f32 %v2659, 0.2
      %v2692 = vmax.f32 %v2628, %v2660
      %v2693 = vmax.f32 %v2629, %v2661
      %v2694 = vmax.f32 %v2630, %v2662
      %v2695 = vmax.f32 %v2631, %v2663
      %v2696 = vmax.f32 %v2632, %v2664
      %v2697 = vmax.f32 %v2633, %v2665
      %v2698 = vmax.f32 %v2634, %v2666
      %v2699 = vmax.f32 %v2635, %v2667
      %v2700 = vmax.f32 %v2636, %v2668
      %v2701 = vmax.f32 %v2637, %v2669
      %v2702 = vmax.f32 %v2638, %v2670
      %v2703 = vmax.f32 %v2639, %v2671
      %v2704 = vmax.f32 %v2640, %v2672
      %v2705 = vmax.f32 %v2641, %v2673
      %v2706 = vmax.f32 %v2642, %v2674
      %v2707 = vmax.f32 %v2643, %v2675
      %v2708 = vmax.f32 %v2644, %v2676
      %v2709 = vmax.f32 %v2645, %v2677
      %v2710 = vmax.f32 %v2646, %v2678
      %v2711 = vmax.f32 %v2647, %v2679
      %v2712 = vmax.f32 %v2648, %v2680
      %v2713 = vmax.f32 %v2649, %v2681
      %v2714 = vmax.f32 %v2650, %v2682
      %v2715 = vmax.f32 %v2651, %v2683
      %v2716 = vmax.f32 %v2652, %v2684
      %v2717 = vmax.f32 %v2653, %v2685
      %v2718 = vmax.f32 %v2654, %v2686
      %v2719 = vmax.f32 %v2655, %v2687
      %v2720 = vmax.f32 %v2656, %v2688
      %v2721 = vmax.f32 %v2657, %v2689
      %v2722 = vmax.f32 %v2658, %v2690
      %v2723 = vmax.f32 %v2659, %v2691
      %v2724 = vadd.f32 %v2692, %v1207
      %v2725 = vadd.f32 %v2693, %v1208
      %v2726 = vadd.f32 %v2694, %v1209
      %v2727 = vadd.f32 %v2695, %v1210
      %v2728 = vadd.f32 %v2696, %v1211
      %v2729 = vadd.f32 %v2697, %v1212
      %v2730 = vadd.f32 %v2698, %v1213
      %v2731 = vadd.f32 %v2699, %v1214
      %v2732 = vadd.f32 %v2700, %v1215
      %v2733 = vadd.f32 %v2701, %v1216
      %v2734 = vadd.f32 %v2702, %v1217
      %v2735 = vadd.f32 %v2703, %v1218
      %v2736 = vadd.f32 %v2704, %v1219
      %v2737 = vadd.f32 %v2705, %v1220
      %v2738 = vadd.f32 %v2706, %v1221
      %v2739 = vadd.f32 %v2707, %v1222
      %v2740 = vadd.f32 %v2708, %v1223
      %v2741 = vadd.f32 %v2709, %v1224
      %v2742 = vadd.f32 %v2710, %v1225
      %v2743 = vadd.f32 %v2711, %v1226
      %v2744 = vadd.f32 %v2712, %v1227
      %v2745 = vadd.f32 %v2713, %v1228
      %v2746 = vadd.f32 %v2714, %v1229
      %v2747 = vadd.f32 %v2715, %v1230
      %v2748 = vadd.f32 %v2716, %v1231
      %v2749 = vadd.f32 %v2717, %v1232
      %v2750 = vadd.f32 %v2718, %v1233
      %v2751 = vadd.f32 %v2719, %v1234
      %v2752 = vadd.f32 %v2720, %v1235
      %v2753 = vadd.f32 %v2721, %v1236
      %v2754 = vadd.f32 %v2722, %v1237
      %v2755 = vadd.f32 %v2723, %v1238
      %v2756 = vmax.f32 %v2724, %v2725
      %2757 = vmax.xlane.f32.xlu0 %v2756
      %v2758 = vpop.xlane.xlu0 %2757
      %v2759 = vmax.f32 %v2726, %v2727
      %2760 = vmax.xlane.f32.xlu0 %v2759
      %v2761 = vpop.xlane.xlu0 %2760
      %v2762 = vmax.f32 %v2728, %v2729
      %2763 = vmax.xlane.f32.xlu0 %v2762
      %v2764 = vpop.xlane.xlu0 %2763
      %v2765 = vmax.f32 %v2730, %v2731
      %2766 = vmax.xlane.f32.xlu0 %v2765
      %v2767 = vpop.xlane.xlu0 %2766
      %v2768 = vmax.f32 %v2732, %v2733
      %2769 = vmax.xlane.f32.xlu0 %v2768
      %v2770 = vpop.xlane.xlu0 %2769
      %v2771 = vmax.f32 %v2734, %v2735
      %2772 = vmax.xlane.f32.xlu0 %v2771
      %v2773 = vpop.xlane.xlu0 %2772
      %v2774 = vmax.f32 %v2736, %v2737
      %2775 = vmax.xlane.f32.xlu0 %v2774
      %v2776 = vpop.xlane.xlu0 %2775
      %v2777 = vmax.f32 %v2738, %v2739
      %2778 = vmax.xlane.f32.xlu0 %v2777
      %v2779 = vpop.xlane.xlu0 %2778
      %v2780 = vmax.f32 %v2740, %v2741
      %2781 = vmax.xlane.f32.xlu0 %v2780
      %v2782 = vpop.xlane.xlu0 %2781
      %v2783 = vmax.f32 %v2742, %v2743
      %2784 = vmax.xlane.f32.xlu0 %v2783
      %v2785 = vpop.xlane.xlu0 %2784
      %v2786 = vmax.f32 %v2744, %v2745
      %2787 = vmax.xlane.f32.xlu0 %v2786
      %v2788 = vpop.xlane.xlu0 %2787
      %v2789 = vmax.f32 %v2746, %v2747
      %2790 = vmax.xlane.f32.xlu0 %v2789
      %v2791 = vpop.xlane.xlu0 %2790
      %v2792 = vmax.f32 %v2748, %v2749
      %2793 = vmax.xlane.f32.xlu0 %v2792
      %v2794 = vpop.xlane.xlu0 %2793
      %v2795 = vmax.f32 %v2750, %v2751
      %2796 = vmax.xlane.f32.xlu0 %v2795
      %v2797 = vpop.xlane.xlu0 %2796
      %v2798 = vmax.f32 %v2752, %v2753
      %2799 = vmax.xlane.f32.xlu0 %v2798
      %v2800 = vpop.xlane.xlu0 %2799
      %v2801 = vmax.f32 %v2754, %v2755
      %2802 = vmax.xlane.f32.xlu0 %v2801
      %v2803 = vpop.xlane.xlu0 %2802
      %v2804 = vsub.f32 %v2724, %v2758
      %v2805 = vsub.f32 %v2725, %v2758
      %v2806 = vsub.f32 %v2726, %v2761
      %v2807 = vsub.f32 %v2727, %v2761
      %v2808 = vsub.f32 %v2728, %v2764
      %v2809 = vsub.f32 %v2729, %v2764
      %v2810 = vsub.f32 %v2730, %v2767
      %v2811 = vsub.f32 %v2731, %v2767
      %v2812 = vsub.f32 %v2732, %v2770
      %v2813 = vsub.f32 %v2733, %v2770
      %v2814 = vsub.f32 %v2734, %v2773
      %v2815 = vsub.f32 %v2735, %v2773
      %v2816 = vsub.f32 %v2736, %v2776
      %v2817 = vsub.f32 %v2737, %v2776
      %v2818 = vsub.f32 %v2738, %v2779
      %v2819 = vsub.f32 %v2739, %v2779
      %v2820 = vsub.f32 %v2740, %v2782
      %v2821 = vsub.f32 %v2741, %v2782
      %v2822 = vsub.f32 %v2742, %v2785
      %v2823 = vsub.f32 %v2743, %v2785
      %v2824 = vsub.f32 %v2744, %v2788
      %v2825 = vsub.f32 %v2745, %v2788
      %v2826 = vsub.f32 %v2746, %v2791
      %v2827 = vsub.f32 %v2747, %v2791
      %v2828 = vsub.f32 %v2748, %v2794
      %v2829 = vsub.f32 %v2749, %v2794
      %v2830 = vsub.f32 %v2750, %v2797
      %v2831 = vsub.f32 %v2751, %v2797
      %v2832 = vsub.f32 %v2752, %v2800
      %v2833 = vsub.f32 %v2753, %v2800
      %v2834 = vsub.f32 %v2754, %v2803
      %v2835 = vsub.f32 %v2755, %v2803
      %v2836 = vmul.f32 %v2804, 1.442695
      %v2837 = vpow.pop %v2836
      %v2838 = vmul.f32 %v2805, 1.442695
      %v2839 = vpow.pop %v2838
      %v2840 = vmul.f32 %v2806, 1.442695
      %v2841 = vpow.pop %v2840
      %v2842 = vmul.f32 %v2807, 1.442695
      %v2843 = vpow.pop %v2842
      %v2844 = vmul.f32 %v2808, 1.442695
      %v2845 = vpow.pop %v2844
      %v2846 = vmul.f32 %v2809, 1.442695
      %v2847 = vpow.pop %v2846
      %v2848 = vmul.f32 %v2810, 1.442695
      %v2849 = vpow.pop %v2848
      %v2850 = vmul.f32 %v2811, 1.442695
      %v2851 = vpow.pop %v2850
      %v2852 = vmul.f32 %v2812, 1.442695
      %v2853 = vpow.pop %v2852
      %v2854 = vmul.f32 %v2813, 1.442695
      %v2855 = vpow.pop %v2854
      %v2856 = vmul.f32 %v2814, 1.442695
      %v2857 = vpow.pop %v2856
      %v2858 = vmul.f32 %v2815, 1.442695
      %v2859 = vpow.pop %v2858
      %v2860 = vmul.f32 %v2816, 1.442695
      %v2861 = vpow.pop %v2860
      %v2862 = vmul.f32 %v2817, 1.442695
      %v2863 = vpow.pop %v2862
      %v2864 = vmul.f32 %v2818, 1.442695
      %v2865 = vpow.pop %v2864
      %v2866 = vmul.f32 %v2819, 1.442695
      %v2867 = vpow.pop %v2866
      %v2868 = vmul.f32 %v2820, 1.442695
      %v2869 = vpow.pop %v2868
      %v2870 = vmul.f32 %v2821, 1.442695
      %v2871 = vpow.pop %v2870
      %v2872 = vmul.f32 %v2822, 1.442695
      %v2873 = vpow.pop %v2872
      %v2874 = vmul.f32 %v2823, 1.442695
      %v2875 = vpow.pop %v2874
      %v2876 = vmul.f32 %v2824, 1.442695
      %v2877 = vpow.pop %v2876
      %v2878 = vmul.f32 %v2825, 1.442695
      %v2879 = vpow.pop %v2878
      %v2880 = vmul.f32 %v2826, 1.442695
      %v2881 = vpow.pop %v2880
      %v2882 = vmul.f32 %v2827, 1.442695
      %v2883 = vpow.pop %v2882
      %v2884 = vmul.f32 %v2828, 1.442695
      %v2885 = vpow.pop %v2884
      %v2886 = vmul.f32 %v2829, 1.442695
      %v2887 = vpow.pop %v2886
      %v2888 = vmul.f32 %v2830, 1.442695
      %v2889 = vpow.pop %v2888
      %v2890 = vmul.f32 %v2831, 1.442695
      %v2891 = vpow.pop %v2890
      %v2892 = vmul.f32 %v2832, 1.442695
      %v2893 = vpow.pop %v2892
      %v2894 = vmul.f32 %v2833, 1.442695
      %v2895 = vpow.pop %v2894
      %v2896 = vmul.f32 %v2834, 1.442695
      %v2897 = vpow.pop %v2896
      %v2898 = vmul.f32 %v2835, 1.442695
      %v2899 = vpow.pop %v2898
      %2900 = vmatpush.msra.mxu0 %v2545
      %2901 = vmatpush.msra.mxu0 %v2544
      %2902 = vmatpush.msra.mxu0 %v2543
      %2903 = vmatpush.msra.mxu0 %v2542
      %2904 = vmatpush.msra.mxu0 %v2541
      %2905 = vmatpush.msra.mxu0 %v2540
      %2906 = vmatpush.msra.mxu0 %v2539
      %2907 = vmatpush.msra.mxu0 %v2538
      %2908 = vmatpush.msra.mxu0 %v2537
      %2909 = vmatpush.msra.mxu0 %v2536
      %2910 = vmatpush.msra.mxu0 %v2535
      %2911 = vmatpush.msra.mxu0 %v2534
      %2912 = vmatpush.msra.mxu0 %v2533
      %2913 = vmatpush.msra.mxu0 %v2532
      %2914 = vmatpush.msra.mxu0 %v2531
      %2915 = vmatpush.msra.mxu0 %v2530
      %2916 = vmatmul.f32.gmra.mxu0 %v2837
      %v2917 = vpop.f32.mrf.mxu0
      %v2918 = vadd.f32 0.0, %v2917
      %2919 = vmatmul.f32.gmra.mxu0 %v2841
      %v2920 = vpop.f32.mrf.mxu0
      %v2921 = vadd.f32 0.0, %v2920
      %2922 = vmatmul.f32.gmra.mxu0 %v2845
      %v2923 = vpop.f32.mrf.mxu0
      %v2924 = vadd.f32 0.0, %v2923
      %2925 = vmatmul.f32.gmra.mxu0 %v2849
      %v2926 = vpop.f32.mrf.mxu0
      %v2927 = vadd.f32 0.0, %v2926
      %2928 = vmatmul.f32.gmra.mxu0 %v2853
      %v2929 = vpop.f32.mrf.mxu0
      %v2930 = vadd.f32 0.0, %v2929
      %2931 = vmatmul.f32.gmra.mxu0 %v2857
      %v2932 = vpop.f32.mrf.mxu0
      %v2933 = vadd.f32 0.0, %v2932
      %2934 = vmatmul.f32.gmra.mxu0 %v2861
      %v2935 = vpop.f32.mrf.mxu0
      %v2936 = vadd.f32 0.0, %v2935
      %2937 = vmatmul.f32.gmra.mxu0 %v2865
      %v2938 = vpop.f32.mrf.mxu0
      %v2939 = vadd.f32 0.0, %v2938
      %2940 = vmatmul.f32.gmra.mxu0 %v2869
      %v2941 = vpop.f32.mrf.mxu0
      %v2942 = vadd.f32 0.0, %v2941
      %2943 = vmatmul.f32.gmra.mxu0 %v2873
      %v2944 = vpop.f32.mrf.mxu0
      %v2945 = vadd.f32 0.0, %v2944
      %2946 = vmatmul.f32.gmra.mxu0 %v2877
      %v2947 = vpop.f32.mrf.mxu0
      %v2948 = vadd.f32 0.0, %v2947
      %2949 = vmatmul.f32.gmra.mxu0 %v2881
      %v2950 = vpop.f32.mrf.mxu0
      %v2951 = vadd.f32 0.0, %v2950
      %2952 = vmatmul.f32.gmra.mxu0 %v2885
      %v2953 = vpop.f32.mrf.mxu0
      %v2954 = vadd.f32 0.0, %v2953
      %2955 = vmatmul.f32.gmra.mxu0 %v2889
      %v2956 = vpop.f32.mrf.mxu0
      %v2957 = vadd.f32 0.0, %v2956
      %2958 = vmatmul.f32.gmra.mxu0 %v2893
      %v2959 = vpop.f32.mrf.mxu0
      %v2960 = vadd.f32 0.0, %v2959
      %2961 = vmatmul.f32.gmra.mxu0 %v2897
      %v2962 = vpop.f32.mrf.mxu0
      %v2963 = vadd.f32 0.0, %v2962
      %2964 = vdwg.mxu0
      %2965 = vmatpush.msra.mxu0 %v2561
      %2966 = vmatpush.msra.mxu0 %v2560
      %2967 = vmatpush.msra.mxu0 %v2559
      %2968 = vmatpush.msra.mxu0 %v2558
      %2969 = vmatpush.msra.mxu0 %v2557
      %2970 = vmatpush.msra.mxu0 %v2556
      %2971 = vmatpush.msra.mxu0 %v2555
      %2972 = vmatpush.msra.mxu0 %v2554
      %2973 = vmatpush.msra.mxu0 %v2553
      %2974 = vmatpush.msra.mxu0 %v2552
      %2975 = vmatpush.msra.mxu0 %v2551
      %2976 = vmatpush.msra.mxu0 %v2550
      %2977 = vmatpush.msra.mxu0 %v2549
      %2978 = vmatpush.msra.mxu0 %v2548
      %2979 = vmatpush.msra.mxu0 %v2547
      %2980 = vmatpush.msra.mxu0 %v2546
      %2981 = vmatmul.f32.gmra.mxu0 %v2839
      %v2982 = vpop.f32.mrf.mxu0
      %v2983 = vadd.f32 %v2918, %v2982
      %2984 = vmatmul.f32.gmra.mxu0 %v2843
      %v2985 = vpop.f32.mrf.mxu0
      %v2986 = vadd.f32 %v2921, %v2985
      %2987 = vmatmul.f32.gmra.mxu0 %v2847
      %v2988 = vpop.f32.mrf.mxu0
      %v2989 = vadd.f32 %v2924, %v2988
      %2990 = vmatmul.f32.gmra.mxu0 %v2851
      %v2991 = vpop.f32.mrf.mxu0
      %v2992 = vadd.f32 %v2927, %v2991
      %2993 = vmatmul.f32.gmra.mxu0 %v2855
      %v2994 = vpop.f32.mrf.mxu0
      %v2995 = vadd.f32 %v2930, %v2994
      %2996 = vmatmul.f32.gmra.mxu0 %v2859
      %v2997 = vpop.f32.mrf.mxu0
      %v2998 = vadd.f32 %v2933, %v2997
      %2999 = vmatmul.f32.gmra.mxu0 %v2863
      %v3000 = vpop.f32.mrf.mxu0
      %v3001 = vadd.f32 %v2936, %v3000
      %3002 = vmatmul.f32.gmra.mxu0 %v2867
      %v3003 = vpop.f32.mrf.mxu0
      %v3004 = vadd.f32 %v2939, %v3003
      %3005 = vmatmul.f32.gmra.mxu0 %v2871
      %v3006 = vpop.f32.mrf.mxu0
      %v3007 = vadd.f32 %v2942, %v3006
      %3008 = vmatmul.f32.gmra.mxu0 %v2875
      %v3009 = vpop.f32.mrf.mxu0
      %v3010 = vadd.f32 %v2945, %v3009
      %3011 = vmatmul.f32.gmra.mxu0 %v2879
      %v3012 = vpop.f32.mrf.mxu0
      %v3013 = vadd.f32 %v2948, %v3012
      %3014 = vmatmul.f32.gmra.mxu0 %v2883
      %v3015 = vpop.f32.mrf.mxu0
      %v3016 = vadd.f32 %v2951, %v3015
      %3017 = vmatmul.f32.gmra.mxu0 %v2887
      %v3018 = vpop.f32.mrf.mxu0
      %v3019 = vadd.f32 %v2954, %v3018
      %3020 = vmatmul.f32.gmra.mxu0 %v2891
      %v3021 = vpop.f32.mrf.mxu0
      %v3022 = vadd.f32 %v2957, %v3021
      %3023 = vmatmul.f32.gmra.mxu0 %v2895
      %v3024 = vpop.f32.mrf.mxu0
      %v3025 = vadd.f32 %v2960, %v3024
      %3026 = vmatmul.f32.gmra.mxu0 %v2899
      %v3027 = vpop.f32.mrf.mxu0
      %v3028 = vadd.f32 %v2963, %v3027
      %3029 = vdwg.mxu0
      %v3030 = vrcp.pop %v2983
      %v3031 = vmul.f32 %v2983, %v3030
      %v3032 = vsub.f32 1.0, %v3031
      %v3033 = vmul.f32 %v3030, %v3032
      %v3034 = vadd.f32 %v3030, %v3033
      %vm3035 = vweird.f32 %v2983
      %vm3036 = vweird.f32 %v3030
      %vm3037 = vmor %vm3035, %vm3036
      %v3038 = vsel %vm3037, %v3030, %v3034
      %v3039 = vand.u32 2147483647, %v2983
      %vm3040 = vcmp.eq.f32.partialorder %v3039, 8.507059e+37
      %v3041 = vand.u32 %v2983, 2147483648
      %v3042 = vor.u32 1.1754944e-38, %v3041
      %v3043 = vsel %vm3040, %v3042, %v3038
      %v3044 = vmul.f32 1.0, %v3043
      %v3045 = vrcp.pop %v2986
      %v3046 = vmul.f32 %v2986, %v3045
      %v3047 = vsub.f32 1.0, %v3046
      %v3048 = vmul.f32 %v3045, %v3047
      %v3049 = vadd.f32 %v3045, %v3048
      %vm3050 = vweird.f32 %v2986
      %vm3051 = vweird.f32 %v3045
      %vm3052 = vmor %vm3050, %vm3051
      %v3053 = vsel %vm3052, %v3045, %v3049
      %v3054 = vand.u32 2147483647, %v2986
      %vm3055 = vcmp.eq.f32.partialorder %v3054, 8.507059e+37
      %v3056 = vand.u32 %v2986, 2147483648
      %v3057 = vor.u32 1.1754944e-38, %v3056
      %v3058 = vsel %vm3055, %v3057, %v3053
      %v3059 = vmul.f32 1.0, %v3058
      %v3060 = vrcp.pop %v2989
      %v3061 = vmul.f32 %v2989, %v3060
      %v3062 = vsub.f32 1.0, %v3061
      %v3063 = vmul.f32 %v3060, %v3062
      %v3064 = vadd.f32 %v3060, %v3063
      %vm3065 = vweird.f32 %v2989
      %vm3066 = vweird.f32 %v3060
      %vm3067 = vmor %vm3065, %vm3066
      %v3068 = vsel %vm3067, %v3060, %v3064
      %v3069 = vand.u32 2147483647, %v2989
      %vm3070 = vcmp.eq.f32.partialorder %v3069, 8.507059e+37
      %v3071 = vand.u32 %v2989, 2147483648
      %v3072 = vor.u32 1.1754944e-38, %v3071
      %v3073 = vsel %vm3070, %v3072, %v3068
      %v3074 = vmul.f32 1.0, %v3073
      %v3075 = vrcp.pop %v2992
      %v3076 = vmul.f32 %v2992, %v3075
      %v3077 = vsub.f32 1.0, %v3076
      %v3078 = vmul.f32 %v3075, %v3077
      %v3079 = vadd.f32 %v3075, %v3078
      %vm3080 = vweird.f32 %v2992
      %vm3081 = vweird.f32 %v3075
      %vm3082 = vmor %vm3080, %vm3081
      %v3083 = vsel %vm3082, %v3075, %v3079
      %v3084 = vand.u32 2147483647, %v2992
      %vm3085 = vcmp.eq.f32.partialorder %v3084, 8.507059e+37
      %v3086 = vand.u32 %v2992, 2147483648
      %v3087 = vor.u32 1.1754944e-38, %v3086
      %v3088 = vsel %vm3085, %v3087, %v3083
      %v3089 = vmul.f32 1.0, %v3088
      %v3090 = vrcp.pop %v2995
      %v3091 = vmul.f32 %v2995, %v3090
      %v3092 = vsub.f32 1.0, %v3091
      %v3093 = vmul.f32 %v3090, %v3092
      %v3094 = vadd.f32 %v3090, %v3093
      %vm3095 = vweird.f32 %v2995
      %vm3096 = vweird.f32 %v3090
      %vm3097 = vmor %vm3095, %vm3096
      %v3098 = vsel %vm3097, %v3090, %v3094
      %v3099 = vand.u32 2147483647, %v2995
      %vm3100 = vcmp.eq.f32.partialorder %v3099, 8.507059e+37
      %v3101 = vand.u32 %v2995, 2147483648
      %v3102 = vor.u32 1.1754944e-38, %v3101
      %v3103 = vsel %vm3100, %v3102, %v3098
      %v3104 = vmul.f32 1.0, %v3103
      %v3105 = vrcp.pop %v2998
      %v3106 = vmul.f32 %v2998, %v3105
      %v3107 = vsub.f32 1.0, %v3106
      %v3108 = vmul.f32 %v3105, %v3107
      %v3109 = vadd.f32 %v3105, %v3108
      %vm3110 = vweird.f32 %v2998
      %vm3111 = vweird.f32 %v3105
      %vm3112 = vmor %vm3110, %vm3111
      %v3113 = vsel %vm3112, %v3105, %v3109
      %v3114 = vand.u32 2147483647, %v2998
      %vm3115 = vcmp.eq.f32.partialorder %v3114, 8.507059e+37
      %v3116 = vand.u32 %v2998, 2147483648
      %v3117 = vor.u32 1.1754944e-38, %v3116
      %v3118 = vsel %vm3115, %v3117, %v3113
      %v3119 = vmul.f32 1.0, %v3118
      %v3120 = vrcp.pop %v3001
      %v3121 = vmul.f32 %v3001, %v3120
      %v3122 = vsub.f32 1.0, %v3121
      %v3123 = vmul.f32 %v3120, %v3122
      %v3124 = vadd.f32 %v3120, %v3123
      %vm3125 = vweird.f32 %v3001
      %vm3126 = vweird.f32 %v3120
      %vm3127 = vmor %vm3125, %vm3126
      %v3128 = vsel %vm3127, %v3120, %v3124
      %v3129 = vand.u32 2147483647, %v3001
      %vm3130 = vcmp.eq.f32.partialorder %v3129, 8.507059e+37
      %v3131 = vand.u32 %v3001, 2147483648
      %v3132 = vor.u32 1.1754944e-38, %v3131
      %v3133 = vsel %vm3130, %v3132, %v3128
      %v3134 = vmul.f32 1.0, %v3133
      %v3135 = vrcp.pop %v3004
      %v3136 = vmul.f32 %v3004, %v3135
      %v3137 = vsub.f32 1.0, %v3136
      %v3138 = vmul.f32 %v3135, %v3137
      %v3139 = vadd.f32 %v3135, %v3138
      %vm3140 = vweird.f32 %v3004
      %vm3141 = vweird.f32 %v3135
      %vm3142 = vmor %vm3140, %vm3141
      %v3143 = vsel %vm3142, %v3135, %v3139
      %v3144 = vand.u32 2147483647, %v3004
      %vm3145 = vcmp.eq.f32.partialorder %v3144, 8.507059e+37
      %v3146 = vand.u32 %v3004, 2147483648
      %v3147 = vor.u32 1.1754944e-38, %v3146
      %v3148 = vsel %vm3145, %v3147, %v3143
      %v3149 = vmul.f32 1.0, %v3148
      %v3150 = vrcp.pop %v3007
      %v3151 = vmul.f32 %v3007, %v3150
      %v3152 = vsub.f32 1.0, %v3151
      %v3153 = vmul.f32 %v3150, %v3152
      %v3154 = vadd.f32 %v3150, %v3153
      %vm3155 = vweird.f32 %v3007
      %vm3156 = vweird.f32 %v3150
      %vm3157 = vmor %vm3155, %vm3156
      %v3158 = vsel %vm3157, %v3150, %v3154
      %v3159 = vand.u32 2147483647, %v3007
      %vm3160 = vcmp.eq.f32.partialorder %v3159, 8.507059e+37
      %v3161 = vand.u32 %v3007, 2147483648
      %v3162 = vor.u32 1.1754944e-38, %v3161
      %v3163 = vsel %vm3160, %v3162, %v3158
      %v3164 = vmul.f32 1.0, %v3163
      %v3165 = vrcp.pop %v3010
      %v3166 = vmul.f32 %v3010, %v3165
      %v3167 = vsub.f32 1.0, %v3166
      %v3168 = vmul.f32 %v3165, %v3167
      %v3169 = vadd.f32 %v3165, %v3168
      %vm3170 = vweird.f32 %v3010
      %vm3171 = vweird.f32 %v3165
      %vm3172 = vmor %vm3170, %vm3171
      %v3173 = vsel %vm3172, %v3165, %v3169
      %v3174 = vand.u32 2147483647, %v3010
      %vm3175 = vcmp.eq.f32.partialorder %v3174, 8.507059e+37
      %v3176 = vand.u32 %v3010, 2147483648
      %v3177 = vor.u32 1.1754944e-38, %v3176
      %v3178 = vsel %vm3175, %v3177, %v3173
      %v3179 = vmul.f32 1.0, %v3178
      %v3180 = vrcp.pop %v3013
      %v3181 = vmul.f32 %v3013, %v3180
      %v3182 = vsub.f32 1.0, %v3181
      %v3183 = vmul.f32 %v3180, %v3182
      %v3184 = vadd.f32 %v3180, %v3183
      %vm3185 = vweird.f32 %v3013
      %vm3186 = vweird.f32 %v3180
      %vm3187 = vmor %vm3185, %vm3186
      %v3188 = vsel %vm3187, %v3180, %v3184
      %v3189 = vand.u32 2147483647, %v3013
      %vm3190 = vcmp.eq.f32.partialorder %v3189, 8.507059e+37
      %v3191 = vand.u32 %v3013, 2147483648
      %v3192 = vor.u32 1.1754944e-38, %v3191
      %v3193 = vsel %vm3190, %v3192, %v3188
      %v3194 = vmul.f32 1.0, %v3193
      %v3195 = vrcp.pop %v3016
      %v3196 = vmul.f32 %v3016, %v3195
      %v3197 = vsub.f32 1.0, %v3196
      %v3198 = vmul.f32 %v3195, %v3197
      %v3199 = vadd.f32 %v3195, %v3198
      %vm3200 = vweird.f32 %v3016
      %vm3201 = vweird.f32 %v3195
      %vm3202 = vmor %vm3200, %vm3201
      %v3203 = vsel %vm3202, %v3195, %v3199
      %v3204 = vand.u32 2147483647, %v3016
      %vm3205 = vcmp.eq.f32.partialorder %v3204, 8.507059e+37
      %v3206 = vand.u32 %v3016, 2147483648
      %v3207 = vor.u32 1.1754944e-38, %v3206
      %v3208 = vsel %vm3205, %v3207, %v3203
      %v3209 = vmul.f32 1.0, %v3208
      %v3210 = vrcp.pop %v3019
      %v3211 = vmul.f32 %v3019, %v3210
      %v3212 = vsub.f32 1.0, %v3211
      %v3213 = vmul.f32 %v3210, %v3212
      %v3214 = vadd.f32 %v3210, %v3213
      %vm3215 = vweird.f32 %v3019
      %vm3216 = vweird.f32 %v3210
      %vm3217 = vmor %vm3215, %vm3216
      %v3218 = vsel %vm3217, %v3210, %v3214
      %v3219 = vand.u32 2147483647, %v3019
      %vm3220 = vcmp.eq.f32.partialorder %v3219, 8.507059e+37
      %v3221 = vand.u32 %v3019, 2147483648
      %v3222 = vor.u32 1.1754944e-38, %v3221
      %v3223 = vsel %vm3220, %v3222, %v3218
      %v3224 = vmul.f32 1.0, %v3223
      %v3225 = vrcp.pop %v3022
      %v3226 = vmul.f32 %v3022, %v3225
      %v3227 = vsub.f32 1.0, %v3226
      %v3228 = vmul.f32 %v3225, %v3227
      %v3229 = vadd.f32 %v3225, %v3228
      %vm3230 = vweird.f32 %v3022
      %vm3231 = vweird.f32 %v3225
      %vm3232 = vmor %vm3230, %vm3231
      %v3233 = vsel %vm3232, %v3225, %v3229
      %v3234 = vand.u32 2147483647, %v3022
      %vm3235 = vcmp.eq.f32.partialorder %v3234, 8.507059e+37
      %v3236 = vand.u32 %v3022, 2147483648
      %v3237 = vor.u32 1.1754944e-38, %v3236
      %v3238 = vsel %vm3235, %v3237, %v3233
      %v3239 = vmul.f32 1.0, %v3238
      %v3240 = vrcp.pop %v3025
      %v3241 = vmul.f32 %v3025, %v3240
      %v3242 = vsub.f32 1.0, %v3241
      %v3243 = vmul.f32 %v3240, %v3242
      %v3244 = vadd.f32 %v3240, %v3243
      %vm3245 = vweird.f32 %v3025
      %vm3246 = vweird.f32 %v3240
      %vm3247 = vmor %vm3245, %vm3246
      %v3248 = vsel %vm3247, %v3240, %v3244
      %v3249 = vand.u32 2147483647, %v3025
      %vm3250 = vcmp.eq.f32.partialorder %v3249, 8.507059e+37
      %v3251 = vand.u32 %v3025, 2147483648
      %v3252 = vor.u32 1.1754944e-38, %v3251
      %v3253 = vsel %vm3250, %v3252, %v3248
      %v3254 = vmul.f32 1.0, %v3253
      %v3255 = vrcp.pop %v3028
      %v3256 = vmul.f32 %v3028, %v3255
      %v3257 = vsub.f32 1.0, %v3256
      %v3258 = vmul.f32 %v3255, %v3257
      %v3259 = vadd.f32 %v3255, %v3258
      %vm3260 = vweird.f32 %v3028
      %vm3261 = vweird.f32 %v3255
      %vm3262 = vmor %vm3260, %vm3261
      %v3263 = vsel %vm3262, %v3255, %v3259
      %v3264 = vand.u32 2147483647, %v3028
      %vm3265 = vcmp.eq.f32.partialorder %v3264, 8.507059e+37
      %v3266 = vand.u32 %v3028, 2147483648
      %v3267 = vor.u32 1.1754944e-38, %v3266
      %v3268 = vsel %vm3265, %v3267, %v3263
      %v3269 = vmul.f32 1.0, %v3268
      %3271 = vset.pattern.permute.xlu0 0
      %3272 = vperm.xlu0 %3271, %v3044
      %v3273 = vpop.permute.xlu0 %3272
      %3276 = vset.pattern.permute.xlu0 0
      %3277 = vperm.xlu0 %3276, %v3059
      %v3278 = vpop.permute.xlu0 %3277
      %3281 = vset.pattern.permute.xlu0 0
      %3282 = vperm.xlu0 %3281, %v3074
      %v3283 = vpop.permute.xlu0 %3282
      %3286 = vset.pattern.permute.xlu0 0
      %3287 = vperm.xlu0 %3286, %v3089
      %v3288 = vpop.permute.xlu0 %3287
      %3291 = vset.pattern.permute.xlu0 0
      %3292 = vperm.xlu0 %3291, %v3104
      %v3293 = vpop.permute.xlu0 %3292
      %3296 = vset.pattern.permute.xlu0 0
      %3297 = vperm.xlu0 %3296, %v3119
      %v3298 = vpop.permute.xlu0 %3297
      %3301 = vset.pattern.permute.xlu0 0
      %3302 = vperm.xlu0 %3301, %v3134
      %v3303 = vpop.permute.xlu0 %3302
      %3306 = vset.pattern.permute.xlu0 0
      %3307 = vperm.xlu0 %3306, %v3149
      %v3308 = vpop.permute.xlu0 %3307
      %3311 = vset.pattern.permute.xlu0 0
      %3312 = vperm.xlu0 %3311, %v3164
      %v3313 = vpop.permute.xlu0 %3312
      %3316 = vset.pattern.permute.xlu0 0
      %3317 = vperm.xlu0 %3316, %v3179
      %v3318 = vpop.permute.xlu0 %3317
      %3321 = vset.pattern.permute.xlu0 0
      %3322 = vperm.xlu0 %3321, %v3194
      %v3323 = vpop.permute.xlu0 %3322
      %3326 = vset.pattern.permute.xlu0 0
      %3327 = vperm.xlu0 %3326, %v3209
      %v3328 = vpop.permute.xlu0 %3327
      %3331 = vset.pattern.permute.xlu0 0
      %3332 = vperm.xlu0 %3331, %v3224
      %v3333 = vpop.permute.xlu0 %3332
      %3336 = vset.pattern.permute.xlu0 0
      %3337 = vperm.xlu0 %3336, %v3239
      %v3338 = vpop.permute.xlu0 %3337
      %3341 = vset.pattern.permute.xlu0 0
      %3342 = vperm.xlu0 %3341, %v3254
      %v3343 = vpop.permute.xlu0 %3342
      %3346 = vset.pattern.permute.xlu0 0
      %3347 = vperm.xlu0 %3346, %v3269
      %v3348 = vpop.permute.xlu0 %3347
      %v3350 = vmul.f32 %v2983, %v3273
      %v3351 = vmul.f32 %v2986, %v3278
      %v3352 = vmul.f32 %v2989, %v3283
      %v3353 = vmul.f32 %v2992, %v3288
      %v3354 = vmul.f32 %v2995, %v3293
      %v3355 = vmul.f32 %v2998, %v3298
      %v3356 = vmul.f32 %v3001, %v3303
      %v3357 = vmul.f32 %v3004, %v3308
      %v3358 = vmul.f32 %v3007, %v3313
      %v3359 = vmul.f32 %v3010, %v3318
      %v3360 = vmul.f32 %v3013, %v3323
      %v3361 = vmul.f32 %v3016, %v3328
      %v3362 = vmul.f32 %v3019, %v3333
      %v3363 = vmul.f32 %v3022, %v3338
      %v3364 = vmul.f32 %v3025, %v3343
      %v3365 = vmul.f32 %v3028, %v3348
      %3366 = vrot.lane.b32.xlu0 %v1257, 117
      %v3367 = vpop.permute.xlu0 %3366
      %3368 = vrot.lane.b32.xlu0 %v1260, 117
      %v3369 = vpop.permute.xlu0 %3368
      %3370 = vrot.lane.b32.xlu0 %v1263, 117
      %v3371 = vpop.permute.xlu0 %3370
      %3372 = vrot.lane.b32.xlu0 %v1266, 117
      %v3373 = vpop.permute.xlu0 %3372
      %3374 = vrot.lane.b32.xlu0 %v1269, 117
      %v3375 = vpop.permute.xlu0 %3374
      %3376 = vrot.lane.b32.xlu0 %v1272, 117
      %v3377 = vpop.permute.xlu0 %3376
      %3378 = vrot.lane.b32.xlu0 %v1275, 117
      %v3379 = vpop.permute.xlu0 %3378
      %3380 = vrot.lane.b32.xlu0 %v1278, 117
      %v3381 = vpop.permute.xlu0 %3380
      %3382 = vrot.lane.b32.xlu0 %v1281, 117
      %v3383 = vpop.permute.xlu0 %3382
      %3384 = vrot.lane.b32.xlu0 %v1284, 117
      %v3385 = vpop.permute.xlu0 %3384
      %3386 = vrot.lane.b32.xlu0 %v1287, 117
      %v3387 = vpop.permute.xlu0 %3386
      %3388 = vrot.lane.b32.xlu0 %v1290, 117
      %v3389 = vpop.permute.xlu0 %3388
      %3390 = vrot.lane.b32.xlu0 %v1293, 117
      %v3391 = vpop.permute.xlu0 %3390
      %3392 = vrot.lane.b32.xlu0 %v1296, 117
      %v3393 = vpop.permute.xlu0 %3392
      %3394 = vrot.lane.b32.xlu0 %v1299, 117
      %v3395 = vpop.permute.xlu0 %3394
      %3396 = vrot.lane.b32.xlu0 %v1302, 117
      %v3397 = vpop.permute.xlu0 %3396
      %v3414 = vadd.f32 %v3350, %v3367
      %v3415 = vadd.f32 %v3351, %v3369
      %v3416 = vadd.f32 %v3352, %v3371
      %v3417 = vadd.f32 %v3353, %v3373
      %v3418 = vadd.f32 %v3354, %v3375
      %v3419 = vadd.f32 %v3355, %v3377
      %v3420 = vadd.f32 %v3356, %v3379
      %v3421 = vadd.f32 %v3357, %v3381
      %v3422 = vadd.f32 %v3358, %v3383
      %v3423 = vadd.f32 %v3359, %v3385
      %v3424 = vadd.f32 %v3360, %v3387
      %v3425 = vadd.f32 %v3361, %v3389
      %v3426 = vadd.f32 %v3362, %v3391
      %v3427 = vadd.f32 %v3363, %v3393
      %v3428 = vadd.f32 %v3364, %v3395
      %v3429 = vadd.f32 %v3365, %v3397
      %3430 = vrot.lane.b32.xlu0 %v2334, 117
      %v3431 = vpop.permute.xlu0 %3430
      %v3433 = vadd.f32 %v3414, %v3431
      %v3434 = vadd.f32 %v3415, %v3431
      %v3435 = vadd.f32 %v3416, %v3431
      %v3436 = vadd.f32 %v3417, %v3431
      %v3437 = vadd.f32 %v3418, %v3431
      %v3438 = vadd.f32 %v3419, %v3431
      %v3439 = vadd.f32 %v3420, %v3431
      %v3440 = vadd.f32 %v3421, %v3431
      %v3441 = vadd.f32 %v3422, %v3431
      %v3442 = vadd.f32 %v3423, %v3431
      %v3443 = vadd.f32 %v3424, %v3431
      %v3444 = vadd.f32 %v3425, %v3431
      %v3445 = vadd.f32 %v3426, %v3431
      %v3446 = vadd.f32 %v3427, %v3431
      %v3447 = vadd.f32 %v3428, %v3431
      %v3448 = vadd.f32 %v3429, %v3431
      %vm3449 = vcmp.gt.f32.partialorder %v3433, 0.0
      %vm3450 = vcmp.gt.f32.partialorder %v3434, 0.0
      %vm3451 = vcmp.gt.f32.partialorder %v3435, 0.0
      %vm3452 = vcmp.gt.f32.partialorder %v3436, 0.0
      %vm3453 = vcmp.gt.f32.partialorder %v3437, 0.0
      %vm3454 = vcmp.gt.f32.partialorder %v3438, 0.0
      %vm3455 = vcmp.gt.f32.partialorder %v3439, 0.0
      %vm3456 = vcmp.gt.f32.partialorder %v3440, 0.0
      %vm3457 = vcmp.gt.f32.partialorder %v3441, 0.0
      %vm3458 = vcmp.gt.f32.partialorder %v3442, 0.0
      %vm3459 = vcmp.gt.f32.partialorder %v3443, 0.0
      %vm3460 = vcmp.gt.f32.partialorder %v3444, 0.0
      %vm3461 = vcmp.gt.f32.partialorder %v3445, 0.0
      %vm3462 = vcmp.gt.f32.partialorder %v3446, 0.0
      %vm3463 = vcmp.gt.f32.partialorder %v3447, 0.0
      %vm3464 = vcmp.gt.f32.partialorder %v3448, 0.0
      %v3465 = vmul.f32 %v3433, 1.442695
      %v3466 = vpow.pop %v3465
      %v3467 = vmul.f32 %v3434, 1.442695
      %v3468 = vpow.pop %v3467
      %v3469 = vmul.f32 %v3435, 1.442695
      %v3470 = vpow.pop %v3469
      %v3471 = vmul.f32 %v3436, 1.442695
      %v3472 = vpow.pop %v3471
      %v3473 = vmul.f32 %v3437, 1.442695
      %v3474 = vpow.pop %v3473
      %v3475 = vmul.f32 %v3438, 1.442695
      %v3476 = vpow.pop %v3475
      %v3477 = vmul.f32 %v3439, 1.442695
      %v3478 = vpow.pop %v3477
      %v3479 = vmul.f32 %v3440, 1.442695
      %v3480 = vpow.pop %v3479
      %v3481 = vmul.f32 %v3441, 1.442695
      %v3482 = vpow.pop %v3481
      %v3483 = vmul.f32 %v3442, 1.442695
      %v3484 = vpow.pop %v3483
      %v3485 = vmul.f32 %v3443, 1.442695
      %v3486 = vpow.pop %v3485
      %v3487 = vmul.f32 %v3444, 1.442695
      %v3488 = vpow.pop %v3487
      %v3489 = vmul.f32 %v3445, 1.442695
      %v3490 = vpow.pop %v3489
      %v3491 = vmul.f32 %v3446, 1.442695
      %v3492 = vpow.pop %v3491
      %v3493 = vmul.f32 %v3447, 1.442695
      %v3494 = vpow.pop %v3493
      %v3495 = vmul.f32 %v3448, 1.442695
      %v3496 = vpow.pop %v3495
      %v3497 = vsub.f32 %v3466, 1.0
      %v3498 = vsub.f32 %v3468, 1.0
      %v3499 = vsub.f32 %v3470, 1.0
      %v3500 = vsub.f32 %v3472, 1.0
      %v3501 = vsub.f32 %v3474, 1.0
      %v3502 = vsub.f32 %v3476, 1.0
      %v3503 = vsub.f32 %v3478, 1.0
      %v3504 = vsub.f32 %v3480, 1.0
      %v3505 = vsub.f32 %v3482, 1.0
      %v3506 = vsub.f32 %v3484, 1.0
      %v3507 = vsub.f32 %v3486, 1.0
      %v3508 = vsub.f32 %v3488, 1.0
      %v3509 = vsub.f32 %v3490, 1.0
      %v3510 = vsub.f32 %v3492, 1.0
      %v3511 = vsub.f32 %v3494, 1.0
      %v3512 = vsub.f32 %v3496, 1.0
      %v3513 = vsel %vm3449, %v3433, %v3497
      %v3514 = vsel %vm3450, %v3434, %v3498
      %v3515 = vsel %vm3451, %v3435, %v3499
      %v3516 = vsel %vm3452, %v3436, %v3500
      %v3517 = vsel %vm3453, %v3437, %v3501
      %v3518 = vsel %vm3454, %v3438, %v3502
      %v3519 = vsel %vm3455, %v3439, %v3503
      %v3520 = vsel %vm3456, %v3440, %v3504
      %v3521 = vsel %vm3457, %v3441, %v3505
      %v3522 = vsel %vm3458, %v3442, %v3506
      %v3523 = vsel %vm3459, %v3443, %v3507
      %v3524 = vsel %vm3460, %v3444, %v3508
      %v3525 = vsel %vm3461, %v3445, %v3509
      %v3526 = vsel %vm3462, %v3446, %v3510
      %v3527 = vsel %vm3463, %v3447, %v3511
      %v3528 = vsel %vm3464, %v3448, %v3512
      %3545 = vrot.lane.b32.xlu0 %v2418, 127
      %v3546 = vpop.permute.xlu0 %3545
      %3547 = vrot.lane.b32.xlu0 %v2419, 127
      %v3548 = vpop.permute.xlu0 %3547
      %3549 = vrot.lane.b32.xlu0 %v2420, 127
      %v3550 = vpop.permute.xlu0 %3549
      %3551 = vrot.lane.b32.xlu0 %v2421, 127
      %v3552 = vpop.permute.xlu0 %3551
      %3553 = vrot.lane.b32.xlu0 %v2422, 127
      %v3554 = vpop.permute.xlu0 %3553
      %3555 = vrot.lane.b32.xlu0 %v2423, 127
      %v3556 = vpop.permute.xlu0 %3555
      %3557 = vrot.lane.b32.xlu0 %v2424, 127
      %v3558 = vpop.permute.xlu0 %3557
      %3559 = vrot.lane.b32.xlu0 %v2425, 127
      %v3560 = vpop.permute.xlu0 %3559
      %3561 = vrot.lane.b32.xlu0 %v2426, 127
      %v3562 = vpop.permute.xlu0 %3561
      %3563 = vrot.lane.b32.xlu0 %v2427, 127
      %v3564 = vpop.permute.xlu0 %3563
      %3565 = vrot.lane.b32.xlu0 %v2428, 127
      %v3566 = vpop.permute.xlu0 %3565
      %3567 = vrot.lane.b32.xlu0 %v2429, 127
      %v3568 = vpop.permute.xlu0 %3567
      %3569 = vrot.lane.b32.xlu0 %v2430, 127
      %v3570 = vpop.permute.xlu0 %3569
      %3571 = vrot.lane.b32.xlu0 %v2431, 127
      %v3572 = vpop.permute.xlu0 %3571
      %3573 = vrot.lane.b32.xlu0 %v2432, 127
      %v3574 = vpop.permute.xlu0 %3573
      %3575 = vrot.lane.b32.xlu0 %v2433, 127
      %v3576 = vpop.permute.xlu0 %3575
      %3609 = vrot.lane.b32.xlu0 %v3513, 11
      %v3610 = vpop.permute.xlu0 %3609
      %3611 = vrot.lane.b32.xlu0 %v3514, 11
      %v3612 = vpop.permute.xlu0 %3611
      %3613 = vrot.lane.b32.xlu0 %v3515, 11
      %v3614 = vpop.permute.xlu0 %3613
      %3615 = vrot.lane.b32.xlu0 %v3516, 11
      %v3616 = vpop.permute.xlu0 %3615
      %3617 = vrot.lane.b32.xlu0 %v3517, 11
      %v3618 = vpop.permute.xlu0 %3617
      %3619 = vrot.lane.b32.xlu0 %v3518, 11
      %v3620 = vpop.permute.xlu0 %3619
      %3621 = vrot.lane.b32.xlu0 %v3519, 11
      %v3622 = vpop.permute.xlu0 %3621
      %3623 = vrot.lane.b32.xlu0 %v3520, 11
      %v3624 = vpop.permute.xlu0 %3623
      %3625 = vrot.lane.b32.xlu0 %v3521, 11
      %v3626 = vpop.permute.xlu0 %3625
      %3627 = vrot.lane.b32.xlu0 %v3522, 11
      %v3628 = vpop.permute.xlu0 %3627
      %3629 = vrot.lane.b32.xlu0 %v3523, 11
      %v3630 = vpop.permute.xlu0 %3629
      %3631 = vrot.lane.b32.xlu0 %v3524, 11
      %v3632 = vpop.permute.xlu0 %3631
      %3633 = vrot.lane.b32.xlu0 %v3525, 11
      %v3634 = vpop.permute.xlu0 %3633
      %3635 = vrot.lane.b32.xlu0 %v3526, 11
      %v3636 = vpop.permute.xlu0 %3635
      %3637 = vrot.lane.b32.xlu0 %v3527, 11
      %v3638 = vpop.permute.xlu0 %3637
      %3639 = vrot.lane.b32.xlu0 %v3528, 11
      %v3640 = vpop.permute.xlu0 %3639
      %vm3657 = vcmask 97280
      %v3658 = vsel %vm3657, %v3546, %v3610
      %v3659 = vsel %vm3657, %v3548, %v3612
      %v3660 = vsel %vm3657, %v3550, %v3614
      %v3661 = vsel %vm3657, %v3552, %v3616
      %v3662 = vsel %vm3657, %v3554, %v3618
      %v3663 = vsel %vm3657, %v3556, %v3620
      %v3664 = vsel %vm3657, %v3558, %v3622
      %v3665 = vsel %vm3657, %v3560, %v3624
      %v3666 = vsel %vm3657, %v3562, %v3626
      %v3667 = vsel %vm3657, %v3564, %v3628
      %v3668 = vsel %vm3657, %v3566, %v3630
      %v3669 = vsel %vm3657, %v3568, %v3632
      %v3670 = vsel %vm3657, %v3570, %v3634
      %v3671 = vsel %vm3657, %v3572, %v3636
      %v3672 = vsel %vm3657, %v3574, %v3638
      %v3673 = vsel %vm3657, %v3576, %v3640
      %3674 = vst.msk [vmem:[%s332] sm:$0xff] %vm724, %v3658
      %3675 = vst.msk [vmem:[%s332 + $0x8] sm:$0xff] %vm724, %v3659
      %3676 = vst.msk [vmem:[%s332 + $0x10] sm:$0xff] %vm724, %v3660
      %3677 = vst.msk [vmem:[%s332 + $0x18] sm:$0xff] %vm724, %v3661
      %3678 = vst.msk [vmem:[%s332 + $0x20] sm:$0xff] %vm724, %v3662
      %3679 = vst.msk [vmem:[%s332 + $0x28] sm:$0xff] %vm724, %v3663
      %3680 = vst.msk [vmem:[%s332 + $0x30] sm:$0xff] %vm724, %v3664
      %3681 = vst.msk [vmem:[%s332 + $0x38] sm:$0xff] %vm724, %v3665
      %3682 = vst.msk [vmem:[%s332 + $0x40] sm:$0xff] %vm724, %v3666
      %3683 = vst.msk [vmem:[%s332 + $0x48] sm:$0xff] %vm724, %v3667
      %3684 = vst.msk [vmem:[%s332 + $0x50] sm:$0xff] %vm724, %v3668
      %3685 = vst.msk [vmem:[%s332 + $0x58] sm:$0xff] %vm724, %v3669
      %3686 = vst.msk [vmem:[%s332 + $0x60] sm:$0xff] %vm724, %v3670
      %3687 = vst.msk [vmem:[%s332 + $0x68] sm:$0xff] %vm724, %v3671
      %3688 = vst.msk [vmem:[%s332 + $0x70] sm:$0xff] %vm724, %v3672
      %3689 = vst.msk [vmem:[%s332 + $0x78] sm:$0xff] %vm724, %v3673
      %s3690 = smul.u32 16, %s19
      %p3691 = scmp.lt.s32.totalorder %s3690, 31
      %s3692 = scalar_select %p3691, %s3690, 31
      %s3693 = smul.addr %s3692, 8
      %s3694 = scalar_lea.vmem %s8, %s3693
      // Predicated region
      $region53: #{tpu_custom_call.1} parent=51 // pred_check
        %p3695 = pneg %p215
      $region54: #{tpu_custom_call.1} parent=51 // pred_check_branch
        %3697 = sbr.rel (%p3695) target = $region56
      $region55: #{tpu_custom_call.1} parent=51 // pred_region
        %s3698 = smul.u32 16, %s19
      $region56: #{tpu_custom_call.1} parent=51 // pred_fallthru
        _
    $region52: #{tpu_custom_call.1} parent=5 // pred_fallthru
      _
    %p3699 = scmp.le.s32.totalorder 2, %s14
    // Predicated region
    $region57: #{tpu_custom_call.1} parent=5 // pred_check
      %p3700 = pneg %p3699
    $region58: #{tpu_custom_call.1} parent=5 // pred_check_branch
      %3702 = sbr.rel (%p3700) target = $region60
    $region59: #{tpu_custom_call.1} parent=5 // pred_region
      %s3703 = ssub.s32 %s14, 2
      // Predicated region
      $region61: #{tpu_custom_call.1} parent=59 // pred_check
        %p3704 = pneg %p221
      $region62: #{tpu_custom_call.1} parent=59 // pred_check_branch
        %3706 = sbr.rel (%p3704) target = $region64
      $region63: #{tpu_custom_call.1} parent=59 // pred_region
        %s3707 = smul.u32 16, %s20
        %p3708 = scmp.lt.s32.totalorder %s3707, 31
        %s3709 = scalar_select %p3708, %s3707, 31
        %s3710 = smul.addr %s3709, 8
        %s3711 = scalar_lea.vmem %s8, %s3710
      $region64: #{tpu_custom_call.1} parent=59 // pred_fallthru
        _
    $region60: #{tpu_custom_call.1} parent=5 // pred_fallthru
      _
  $region6: #{tpu_custom_call.1} parent=0 // loop_footer
    %s18 = sadd.s32 1, %s14
  $region7: #{tpu_custom_call.1} parent=0 // loop_footer_branch
    %13 = sbr.rel target = $region3
  $region8: #{tpu_custom_call.1} parent=0 // loop_exit
    _

</llo_original>
